<compile_context>
chip_gen: v7x
topology: tpu7x:2x2x1
jax: 0.10.0
libtpu: 0.0.40
codegen_flags: <defaults>
</compile_context>

<pallas_src>
import functools

import jax
import jax.numpy as jnp
from jax.experimental import pallas as pl
from jax.experimental.pallas import tpu as pltpu


# ----------------------------------------------------------------------------- helpers

_TILE_M = 512  # row tile for the generic matmul path (multiple of 8)


def _m_tiling(M, tile_m=_TILE_M):
    """Return (padded_M, block_m, grid_m). Small M -> single full block."""
    if M <= tile_m:
        return M, M, 1
    Mp = ((M + tile_m - 1) // tile_m) * tile_m
    return Mp, tile_m, Mp // tile_m


def _ln_rows(x, g, b, eps):
    """LayerNorm over last axis; g, b broadcast as (1, D)."""
    mu = jnp.mean(x, axis=-1, keepdims=True)
    var = jnp.mean(jnp.square(x - mu), axis=-1, keepdims=True)
    return (x - mu) * jax.lax.rsqrt(var + eps) * g + b


# ----------------------------------------------------------------------------- kernels

def _linear_kernel(x_ref, w_ref, b_ref, o_ref, *, activation):
    y = jnp.dot(x_ref[...], w_ref[...], preferred_element_type=jnp.float32)
    y = y + b_ref[...]
    if activation == "gelu":
        y = jax.nn.gelu(y, approximate=True)
    o_ref[...] = y


def pallas_linear(x, w, b=None, activation=None):
    """x: (M, K) f32; w: (K, N); bias + activation fused. M-tiled, parallel grid."""
    M, K = x.shape
    N = w.shape[1]
    if b is None:
        b = jnp.zeros((N,), jnp.float32)
    Mp, bm, gm = _m_tiling(M)
    xp = x if Mp == M else jnp.pad(x, ((0, Mp - M), (0, 0)))
    out = pl.pallas_call(
        functools.partial(_linear_kernel, activation=activation),
        out_shape=jax.ShapeDtypeStruct((Mp, N), jnp.float32),
        grid=(gm,),
        in_specs=[
            pl.BlockSpec((bm, K), lambda i: (i, 0)),
            pl.BlockSpec((K, N), lambda i: (0, 0)),
            pl.BlockSpec((1, N), lambda i: (0, 0)),
        ],
        out_specs=pl.BlockSpec((bm, N), lambda i: (i, 0)),
        compiler_params=pltpu.CompilerParams(dimension_semantics=("parallel",)),
    )(xp, w, b.reshape(1, N))
    return out if Mp == M else out[:M]


def _groupnorm_gelu_kernel(x_ref, g_ref, b_ref, o_ref, *, eps):
    # x_ref: (T, C); GroupNorm(C, C) == per-channel normalization over time.
    x = x_ref[...]
    mu = jnp.mean(x, axis=0, keepdims=True)                      # (1, C)
    var = jnp.mean(jnp.square(x - mu), axis=0, keepdims=True)
    y = (x - mu) * jax.lax.rsqrt(var + eps) * g_ref[...] + b_ref[...]
    o_ref[...] = jax.nn.gelu(y, approximate=True)


def pallas_groupnorm_gelu(x, gamma, beta, eps=1e-5):
    """x: (B, T, C) channels-last; per-channel stats over time + affine + GELU, fused."""
    B, T, C = x.shape
    return pl.pallas_call(
        functools.partial(_groupnorm_gelu_kernel, eps=eps),
        out_shape=jax.ShapeDtypeStruct((B, T, C), jnp.float32),
        grid=(B,),
        in_specs=[
            pl.BlockSpec((None, T, C), lambda b: (b, 0, 0)),
            pl.BlockSpec((1, C), lambda b: (0, 0)),
            pl.BlockSpec((1, C), lambda b: (0, 0)),
        ],
        out_specs=pl.BlockSpec((None, T, C), lambda b: (b, 0, 0)),
        compiler_params=pltpu.CompilerParams(dimension_semantics=("parallel",)),
    )(x, gamma.reshape(1, C), beta.reshape(1, C))


def _ln_linear_kernel(x_ref, g_ref, b_ref, w_ref, bias_ref, o_ref, *, eps):
    xn = _ln_rows(x_ref[...], g_ref[...], b_ref[...], eps)
    o_ref[...] = jnp.dot(xn, w_ref[...], preferred_element_type=jnp.float32) + bias_ref[...]


def pallas_ln_linear(x, g, b, w, bias, eps=1e-5):
    """Fused LayerNorm(last dim) + linear projection. x: (M, K) -> (M, N)."""
    M, K = x.shape
    N = w.shape[1]
    Mp, bm, gm = _m_tiling(M)
    xp = x if Mp == M else jnp.pad(x, ((0, Mp - M), (0, 0)))
    out = pl.pallas_call(
        functools.partial(_ln_linear_kernel, eps=eps),
        out_shape=jax.ShapeDtypeStruct((Mp, N), jnp.float32),
        grid=(gm,),
        in_specs=[
            pl.BlockSpec((bm, K), lambda i: (i, 0)),
            pl.BlockSpec((1, K), lambda i: (0, 0)),
            pl.BlockSpec((1, K), lambda i: (0, 0)),
            pl.BlockSpec((K, N), lambda i: (0, 0)),
            pl.BlockSpec((1, N), lambda i: (0, 0)),
        ],
        out_specs=pl.BlockSpec((bm, N), lambda i: (i, 0)),
        compiler_params=pltpu.CompilerParams(dimension_semantics=("parallel",)),
    )(xp, g.reshape(1, K), b.reshape(1, K), w, bias.reshape(1, N))
    return out if Mp == M else out[:M]


def _add_ln_kernel(x_ref, y_ref, g_ref, b_ref, o_ref, *, eps):
    o_ref[...] = _ln_rows(x_ref[...] + y_ref[...], g_ref[...], b_ref[...], eps)


def pallas_add_ln(x, y, g, b, eps=1e-5):
    """Fused residual add + LayerNorm over last dim. x, y: (M, D)."""
    M, D = x.shape
    Mp, bm, gm = _m_tiling(M)
    pad = (lambda a: a) if Mp == M else (lambda a: jnp.pad(a, ((0, Mp - M), (0, 0))))
    out = pl.pallas_call(
        functools.partial(_add_ln_kernel, eps=eps),
        out_shape=jax.ShapeDtypeStruct((Mp, D), jnp.float32),
        grid=(gm,),
        in_specs=[
            pl.BlockSpec((bm, D), lambda i: (i, 0)),
            pl.BlockSpec((bm, D), lambda i: (i, 0)),
            pl.BlockSpec((1, D), lambda i: (0, 0)),
            pl.BlockSpec((1, D), lambda i: (0, 0)),
        ],
        out_specs=pl.BlockSpec((bm, D), lambda i: (i, 0)),
        compiler_params=pltpu.CompilerParams(dimension_semantics=("parallel",)),
    )(pad(x), pad(y), g.reshape(1, D), b.reshape(1, D))
    return out if Mp == M else out[:M]


def _encoder_layer_kernel(x_ref, m_ref, wqkv_ref, bqkv_ref, wo_ref, bo_ref,
                          ln1g_ref, ln1b_ref, w1_ref, b1_ref, w2_ref, b2_ref,
                          ln2g_ref, ln2b_ref, o_ref, *, heads, head_dim, scale, eps):
    """One full post-LN transformer layer for a single batch element (all in VMEM)."""
    x = x_ref[...]            # (T, D)
    m = m_ref[...]            # (1, T) additive key-pad mask
    D = heads * head_dim

    # Merged QKV projection: (T, D) @ (D, 3D)
    qkv = jnp.dot(x, wqkv_ref[...], preferred_element_type=jnp.float32) + bqkv_ref[...]
    wo = wo_ref[...]          # (D, D)

    # Per-head attention; output projection folded in as accumulation over head slices
    # of wo (avoids lane-concatenate and keeps everything MXU work).
    acc = None
    for h in range(heads):
        lo = h * head_dim
        qh = qkv[:, lo:lo + head_dim] * scale              # (T, dh)
        kh = qkv[:, D + lo:D + lo + head_dim]              # (T, dh)
        vh = qkv[:, 2 * D + lo:2 * D + lo + head_dim]      # (T, dh)
        s = jax.lax.dot_general(qh, kh, (((1,), (1,)), ((), ())),
                                preferred_element_type=jnp.float32)        # (T, T)
        p = jax.nn.softmax(s + m, axis=-1)
        oh = jnp.dot(p, vh, preferred_element_type=jnp.float32)            # (T, dh)
        ph = jnp.dot(oh, wo[lo:lo + head_dim, :],
                     preferred_element_type=jnp.float32)                   # (T, D)
        acc = ph if acc is None else acc + ph

    x = x + acc + bo_ref[...]
    x = _ln_rows(x, ln1g_ref[...], ln1b_ref[...], eps)      # post-attention LN

    h1 = jnp.dot(x, w1_ref[...], preferred_element_type=jnp.float32) + b1_ref[...]
    h1 = jax.nn.gelu(h1, approximate=True)
    h2 = jnp.dot(h1, w2_ref[...], preferred_element_type=jnp.float32) + b2_ref[...]
    x = _ln_rows(x + h2, ln2g_ref[...], ln2b_ref[...], eps)  # final LN
    o_ref[...] = x


def pallas_encoder_layer(x, add_mask, lp, *, heads, head_dim, eps=1e-5):
    """x: (B, T, D); add_mask: (B, 1, T) additive (-1e30 on padded keys)."""
    B, T, D = x.shape
    F = lp["w1"].shape[1]
    scale = float(head_dim) ** -0.5
    row = lambda a: a.reshape(1, -1)
    kern = functools.partial(_encoder_layer_kernel, heads=heads, head_dim=head_dim,
                             scale=scale, eps=eps)
    return pl.pallas_call(
        kern,
        out_shape=jax.ShapeDtypeStruct((B, T, D), jnp.float32),
        grid=(B,),
        in_specs=[
            pl.BlockSpec((None, T, D), lambda b: (b, 0, 0)),   # x
            pl.BlockSpec((None, 1, T), lambda b: (b, 0, 0)),   # additive key mask
            pl.BlockSpec((D, 3 * D), lambda b: (0, 0)),        # wqkv
            pl.BlockSpec((1, 3 * D), lambda b: (0, 0)),        # bqkv
            pl.BlockSpec((D, D), lambda b: (0, 0)),            # wo
            pl.BlockSpec((1, D), lambda b: (0, 0)),            # bo
            pl.BlockSpec((1, D), lambda b: (0, 0)),            # attn_ln g
            pl.BlockSpec((1, D), lambda b: (0, 0)),            # attn_ln b
            pl.BlockSpec((D, F), lambda b: (0, 0)),            # w1
            pl.BlockSpec((1, F), lambda b: (0, 0)),            # b1
            pl.BlockSpec((F, D), lambda b: (0, 0)),            # w2
            pl.BlockSpec((1, D), lambda b: (0, 0)),            # b2
            pl.BlockSpec((1, D), lambda b: (0, 0)),            # fin_ln g
            pl.BlockSpec((1, D), lambda b: (0, 0)),            # fin_ln b
        ],
        out_specs=pl.BlockSpec((None, T, D), lambda b: (b, 0, 0)),
        compiler_params=pltpu.CompilerParams(dimension_semantics=("parallel",)),
    )(x, add_mask, lp["wqkv"], row(lp["bqkv"]), lp["wo"], row(lp["bo"]),
      row(lp["attn_ln_g"]), row(lp["attn_ln_b"]),
      lp["w1"], row(lp["b1"]), lp["w2"], row(lp["b2"]),
      row(lp["fin_ln_g"]), row(lp["fin_ln_b"]))


# ----------------------------------------------------------------------------- glue ops

def _im2col(x, k, stride):
    """k shifted strided slices concatenated on channels (no XLA gather).

    x: (B, T, C) -> (B, T_out, k*C) with tap-major channel ordering.
    """
    B, T, C = x.shape
    T_out = (T - k) // stride + 1
    cols = [
        jax.lax.slice(x, (0, t, 0), (B, t + stride * (T_out - 1) + 1, C), (1, stride, 1))
        for t in range(k)
    ]
    return jnp.concatenate(cols, axis=-1), T_out


def conv1d(x, w_flat, k, stride, bias=None, pad=0, activation=None):
    """x: (B, T, Cin) channels-last; w_flat: (k*Cin, Cout) (tap-major patch order)."""
    B, T, C = x.shape
    if pad > 0:
        x = jnp.pad(x, ((0, 0), (pad, pad), (0, 0)))
    patches, T_out = _im2col(x, k, stride)
    y = pallas_linear(patches.reshape(B * T_out, k * C), w_flat, bias, activation=activation)
    return y.reshape(B, T_out, -1)


# ----------------------------------------------------------------------------- model

CFG = dict(
    fe=[(1, 32, 10, 5), (32, 32, 3, 2)],   # (Cin, Cout, kernel, stride)
    embed_dim=64, heads=4, head_dim=16, ffn_dim=128, layers=2,
    pos_k=5, pos_pad=2,
)


def init_params(key):
    scale = 0.02
    p = {}
    ks = iter(jax.random.split(key, 64))

    def nrm(shape):
        return scale * jax.random.normal(next(ks), shape, dtype=jnp.float32)

    cin0, cout0, k0, _ = CFG["fe"][0]
    cin1, cout1, k1, _ = CFG["fe"][1]
    p["fe0_w"] = nrm((k0 * cin0, cout0))
    p["fe0_gn_g"] = jnp.ones((cout0,), jnp.float32)
    p["fe0_gn_b"] = jnp.zeros((cout0,), jnp.float32)
    p["fe1_w"] = nrm((k1 * cin1, cout1))
    p["fe_ln_g"] = jnp.ones((cout1,), jnp.float32)
    p["fe_ln_b"] = jnp.zeros((cout1,), jnp.float32)

    D, F = CFG["embed_dim"], CFG["ffn_dim"]
    p["proj_w"] = nrm((cout1, D))
    p["proj_b"] = jnp.zeros((D,), jnp.float32)

    p["pos_w"] = nrm((CFG["pos_k"] * D, D))
    p["pos_b"] = jnp.zeros((D,), jnp.float32)
    p["enc_ln_g"] = jnp.ones((D,), jnp.float32)
    p["enc_ln_b"] = jnp.zeros((D,), jnp.float32)

    p["layers"] = []
    for _ in range(CFG["layers"]):
        lp = dict(
            wqkv=nrm((D, 3 * D)), bqkv=jnp.zeros((3 * D,), jnp.float32),   # merged Q/K/V
            wo=nrm((D, D)), bo=jnp.zeros((D,), jnp.float32),
            attn_ln_g=jnp.ones((D,), jnp.float32), attn_ln_b=jnp.zeros((D,), jnp.float32),
            w1=nrm((D, F)), b1=jnp.zeros((F,), jnp.float32),
            w2=nrm((F, D)), b2=jnp.zeros((D,), jnp.float32),
            fin_ln_g=jnp.ones((D,), jnp.float32), fin_ln_b=jnp.zeros((D,), jnp.float32),
        )
        p["layers"].append(lp)
    return p


def wavlm_encoder_forward(params, xs_pad, ilens):
    """WavlmEncoder.forward (eval / frozen path).

    Args:
      xs_pad: (B, T_samples) float32 raw padded waveform.
      ilens:  (B,) int32 valid lengths.
    Returns: (features (B, T_frames, D), olens (B,), None)
    """
    B, T_in = xs_pad.shape
    D, H, dh = CFG["embed_dim"], CFG["heads"], CFG["head_dim"]

    # make_pad_mask: True at padded sample positions
    pad_mask = jnp.arange(T_in)[None, :] >= ilens[:, None]

    # ---- feature extractor -------------------------------------------------
    x = xs_pad.astype(jnp.float32)[:, :, None]                       # (B, T, 1)
    _, _, k0, s0 = CFG["fe"][0]
    x = conv1d(x, params["fe0_w"], k=k0, stride=s0)                  # (B, T0, 32)
    x = pallas_groupnorm_gelu(x, params["fe0_gn_g"], params["fe0_gn_b"])
    _, _, k1, s1 = CFG["fe"][1]
    x = conv1d(x, params["fe1_w"], k=k1, stride=s1, activation="gelu")  # (B, T_frames, 32)

    _, T_frames, C = x.shape

    # WavLM.forward_padding_mask: downsample pad mask to frame rate
    extra = T_in % T_frames
    pm = pad_mask[:, :T_in - extra] if extra > 0 else pad_mask
    pm = pm.reshape(B, T_frames, -1).all(-1)                         # (B, T_frames) True=pad

    # feature LayerNorm + post_extract_proj (fused)
    x = pallas_ln_linear(x.reshape(B * T_frames, C),
                         params["fe_ln_g"], params["fe_ln_b"],
                         params["proj_w"], params["proj_b"]).reshape(B, T_frames, D)

    # ---- transformer encoder ------------------------------------------------
    x = jnp.where(pm[:, :, None], 0.0, x)                            # zero padded frames
    pos = conv1d(x, params["pos_w"], k=CFG["pos_k"], stride=1,
                 bias=params["pos_b"], pad=CFG["pos_pad"], activation="gelu")
    # residual add of positional conv + encoder LayerNorm (fused, post-LN WavLM style)
    x = pallas_add_ln(x.reshape(B * T_frames, D), pos.reshape(B * T_frames, D),
                      params["enc_ln_g"], params["enc_ln_b"]).reshape(B, T_frames, D)

    add_mask = jnp.where(pm, -1e30, 0.0).astype(jnp.float32)[:, None, :]   # (B,1,T)

    for lp in params["layers"]:
        x = pallas_encoder_layer(x, add_mask, lp, heads=H, head_dim=dh)

    # olens = (~masks).sum(dim=1); subsample disabled (wavlm_subsample=False)
    olens = jnp.logical_not(pm).sum(axis=1).astype(jnp.int32)
    return x, olens, None


# ----------------------------------------------------------------------------- main

if __name__ == "__main__":
    key = jax.random.PRNGKey(0)
    kp, kx = jax.random.split(key)
    params = init_params(kp)

    B, T_samples = 2, 400
    xs_pad = jax.random.normal(kx, (B, T_samples), dtype=jnp.float32)
    ilens = jnp.array([400, 320], dtype=jnp.int32)

    fwd = jax.jit(functools.partial(wavlm_encoder_forward, params))
    feats, olens, _ = fwd(xs_pad, ilens)
    jax.block_until_ready(feats)
    jax.block_until_ready(olens)

    assert feats.shape == (B, 39, CFG["embed_dim"]), feats.shape
    assert olens.shape == (B,), olens.shape
    assert bool(jnp.all(jnp.isfinite(feats)))
    print("KERNEL_OK")
</pallas_src>

<mosaic_0001>
module attributes {stable_mosaic.version = 11 : i64} {
  func.func @_linear_kernel(%arg0: i32, %arg1: memref<158x10xf32, #tpu.memory_space<vmem>>, %arg2: memref<10x32xf32, #tpu.memory_space<vmem>>, %arg3: memref<1x32xf32, #tpu.memory_space<vmem>>, %arg4: memref<158x32xf32, #tpu.memory_space<vmem>>) attributes {dimension_semantics = [#tpu.dimension_semantics<parallel>], iteration_bounds = array<i64: 1>, scalar_prefetch = 0 : i64, scratch_operands = 0 : i64, tpu.core_type = #tpu.core_type<tc>, window_params = [{transform_indices = @transform_0, window_bounds = array<i64: 158, 10>}, {pipeline_mode = #tpu.pipeline_mode<synchronous>, transform_indices = @transform_1, window_bounds = array<i64: 10, 32>}, {pipeline_mode = #tpu.pipeline_mode<synchronous>, transform_indices = @transform_2, window_bounds = array<i64: 1, 32>}, {transform_indices = @transform_3, window_bounds = array<i64: 158, 32>}]} {
    %c0 = arith.constant 0 : index
    %c0_0 = arith.constant 0 : index
    %0 = vector.load %arg1[%c0, %c0_0] : memref<158x10xf32, #tpu.memory_space<vmem>>, vector<158x10xf32>
    %c0_1 = arith.constant 0 : index
    %c0_2 = arith.constant 0 : index
    %1 = vector.load %arg2[%c0_1, %c0_2] : memref<10x32xf32, #tpu.memory_space<vmem>>, vector<10x32xf32>
    %cst = arith.constant dense<0.000000e+00> : vector<158x32xf32>
    %2 = tpu.matmul %0, %1, %cst {dimension_numbers = #tpu.dot_dimension_numbers<[1], [0], [0], [1], [0, 0, 1, 1], [], []>} : vector<158x10xf32>, vector<10x32xf32>, vector<158x32xf32> -> vector<158x32xf32>
    %c0_3 = arith.constant 0 : index
    %c0_4 = arith.constant 0 : index
    %3 = vector.load %arg3[%c0_3, %c0_4] : memref<1x32xf32, #tpu.memory_space<vmem>>, vector<1x32xf32>
    %4 = vector.broadcast %3 : vector<1x32xf32> to vector<158x32xf32>
    %5 = arith.addf %2, %4 : vector<158x32xf32>
    %c0_5 = arith.constant 0 : index
    %c0_6 = arith.constant 0 : index
    %6 = vector.load %arg4[%c0_5, %c0_6] : memref<158x32xf32, #tpu.memory_space<vmem>>, vector<158x32xf32>
    tpu.vector_store %arg4[%c0_5, %c0_6], %5 {strides = array<i32>} : memref<158x32xf32, #tpu.memory_space<vmem>>, vector<158x32xf32>,
    return
  }
  func.func @transform_0(%arg0: i32) -> (i32, i32) {
    %c0_i32 = arith.constant 0 : i32
    %c0_i32_0 = arith.constant 0 : i32
    return %arg0, %c0_i32 : i32, i32
  }
  func.func @transform_1(%arg0: i32) -> (i32, i32) {
    %c0_i32 = arith.constant 0 : i32
    %c0_i32_0 = arith.constant 0 : i32
    %c0_i32_1 = arith.constant 0 : i32
    return %c0_i32, %c0_i32_0 : i32, i32
  }
  func.func @transform_2(%arg0: i32) -> (i32, i32) {
    %c0_i32 = arith.constant 0 : i32
    %c0_i32_0 = arith.constant 0 : i32
    %c0_i32_1 = arith.constant 0 : i32
    return %c0_i32, %c0_i32_0 : i32, i32
  }
  func.func @transform_3(%arg0: i32) -> (i32, i32) {
    %c0_i32 = arith.constant 0 : i32
    %c0_i32_0 = arith.constant 0 : i32
    return %arg0, %c0_i32 : i32, i32
  }
}

module attributes {stable_mosaic.version = 11 : i64} {
  func.func @_groupnorm_gelu_kernel(%arg0: i32, %arg1: memref<1x79x32xf32, #tpu.memory_space<vmem>>, %arg2: memref<1x32xf32, #tpu.memory_space<vmem>>, %arg3: memref<1x32xf32, #tpu.memory_space<vmem>>, %arg4: memref<1x79x32xf32, #tpu.memory_space<vmem>>) attributes {dimension_semantics = [#tpu.dimension_semantics<parallel>], iteration_bounds = array<i64: 2>, scalar_prefetch = 0 : i64, scratch_operands = 0 : i64, tpu.core_type = #tpu.core_type<tc>, window_params = [{transform_indices = @transform_0, window_bounds = array<i64: 1, 79, 32>}, {pipeline_mode = #tpu.pipeline_mode<synchronous>, transform_indices = @transform_1, window_bounds = array<i64: 1, 32>}, {pipeline_mode = #tpu.pipeline_mode<synchronous>, transform_indices = @transform_2, window_bounds = array<i64: 1, 32>}, {transform_indices = @transform_3, window_bounds = array<i64: 1, 79, 32>}]} {
    %c0 = arith.constant 0 : index
    %c0_0 = arith.constant 0 : index
    %c0_1 = arith.constant 0 : index
    %0 = vector.load %arg1[%c0, %c0_0, %c0_1] : memref<1x79x32xf32, #tpu.memory_space<vmem>>, vector<1x79x32xf32>
    %1 = vector.shape_cast %0 : vector<1x79x32xf32> to vector<79x32xf32>
    %cst = arith.constant dense<0.000000e+00> : vector<32xf32>
    %2 = vector.multi_reduction <add>, %1, %cst [0] : vector<79x32xf32> to vector<32xf32>
    %3 = vector.shape_cast %2 : vector<32xf32> to vector<1x32xf32>
    %cst_2 = arith.constant 7.900000e+01 : f32
    %4 = vector.broadcast %cst_2 : f32 to vector<1x32xf32>
    %5 = arith.divf %3, %4 : vector<1x32xf32>
    %6 = vector.broadcast %5 : vector<1x32xf32> to vector<79x32xf32>
    %7 = arith.subf %1, %6 : vector<79x32xf32>
    %8 = arith.mulf %7, %7 : vector<79x32xf32>
    %cst_3 = arith.constant dense<0.000000e+00> : vector<32xf32>
    %9 = vector.multi_reduction <add>, %8, %cst_3 [0] : vector<79x32xf32> to vector<32xf32>
    %10 = vector.shape_cast %9 : vector<32xf32> to vector<1x32xf32>
    %cst_4 = arith.constant 7.900000e+01 : f32
    %11 = vector.broadcast %cst_4 : f32 to vector<1x32xf32>
    %12 = arith.divf %10, %11 : vector<1x32xf32>
    %13 = vector.broadcast %5 : vector<1x32xf32> to vector<79x32xf32>
    %14 = arith.subf %1, %13 : vector<79x32xf32>
    %cst_5 = arith.constant 9.99999974E-6 : f32
    %15 = vector.broadcast %cst_5 : f32 to vector<1x32xf32>
    %16 = arith.addf %12, %15 : vector<1x32xf32>
    %17 = math.rsqrt %16 : vector<1x32xf32>
    %18 = vector.broadcast %17 : vector<1x32xf32> to vector<79x32xf32>
    %19 = arith.mulf %14, %18 : vector<79x32xf32>
    %c0_6 = arith.constant 0 : index
    %c0_7 = arith.constant 0 : index
    %20 = vector.load %arg2[%c0_6, %c0_7] : memref<1x32xf32, #tpu.memory_space<vmem>>, vector<1x32xf32>
    %21 = vector.broadcast %20 : vector<1x32xf32> to vector<79x32xf32>
    %22 = arith.mulf %19, %21 : vector<79x32xf32>
    %c0_8 = arith.constant 0 : index
    %c0_9 = arith.constant 0 : index
    %23 = vector.load %arg3[%c0_8, %c0_9] : memref<1x32xf32, #tpu.memory_space<vmem>>, vector<1x32xf32>
    %24 = vector.broadcast %23 : vector<1x32xf32> to vector<79x32xf32>
    %25 = arith.addf %22, %24 : vector<79x32xf32>
    %26 = arith.mulf %25, %25 : vector<79x32xf32>
    %27 = arith.mulf %25, %26 : vector<79x32xf32>
    %cst_10 = arith.constant 4.471500e-02 : f32
    %28 = vector.broadcast %cst_10 : f32 to vector<79x32xf32>
    %29 = arith.mulf %28, %27 : vector<79x32xf32>
    %30 = arith.addf %25, %29 : vector<79x32xf32>
    %cst_11 = arith.constant 0.797884583 : f32
    %31 = vector.broadcast %cst_11 : f32 to vector<79x32xf32>
    %32 = arith.mulf %31, %30 : vector<79x32xf32>
    %33 = math.tanh %32 : vector<79x32xf32>
    %cst_12 = arith.constant 1.000000e+00 : f32
    %34 = vector.broadcast %cst_12 : f32 to vector<79x32xf32>
    %35 = arith.addf %34, %33 : vector<79x32xf32>
    %cst_13 = arith.constant 5.000000e-01 : f32
    %36 = vector.broadcast %cst_13 : f32 to vector<79x32xf32>
    %37 = arith.mulf %36, %35 : vector<79x32xf32>
    %38 = arith.mulf %25, %37 : vector<79x32xf32>
    %c0_14 = arith.constant 0 : index
    %c0_15 = arith.constant 0 : index
    %c0_16 = arith.constant 0 : index
    %39 = vector.load %arg4[%c0_14, %c0_15, %c0_16] : memref<1x79x32xf32, #tpu.memory_space<vmem>>, vector<1x79x32xf32>
    %40 = vector.shape_cast %39 : vector<1x79x32xf32> to vector<79x32xf32>
    %41 = vector.shape_cast %38 : vector<79x32xf32> to vector<1x79x32xf32>
    tpu.vector_store %arg4[%c0_14, %c0_15, %c0_16], %41 {strides = array<i32>} : memref<1x79x32xf32, #tpu.memory_space<vmem>>, vector<1x79x32xf32>,
    return
  }
  func.func @transform_0(%arg0: i32) -> (i32, i32, i32) {
    %c0_i32 = arith.constant 0 : i32
    %c0_i32_0 = arith.constant 0 : i32
    %c0_i32_1 = arith.constant 0 : i32
    return %arg0, %c0_i32, %c0_i32_0 : i32, i32, i32
  }
  func.func @transform_1(%arg0: i32) -> (i32, i32) {
    %c0_i32 = arith.constant 0 : i32
    %c0_i32_0 = arith.constant 0 : i32
    %c0_i32_1 = arith.constant 0 : i32
    return %c0_i32, %c0_i32_0 : i32, i32
  }
  func.func @transform_2(%arg0: i32) -> (i32, i32) {
    %c0_i32 = arith.constant 0 : i32
    %c0_i32_0 = arith.constant 0 : i32
    %c0_i32_1 = arith.constant 0 : i32
    return %c0_i32, %c0_i32_0 : i32, i32
  }
  func.func @transform_3(%arg0: i32) -> (i32, i32, i32) {
    %c0_i32 = arith.constant 0 : i32
    %c0_i32_0 = arith.constant 0 : i32
    %c0_i32_1 = arith.constant 0 : i32
    return %arg0, %c0_i32, %c0_i32_0 : i32, i32, i32
  }
}

module attributes {stable_mosaic.version = 11 : i64} {
  func.func @_linear_kernel(%arg0: i32, %arg1: memref<78x96xf32, #tpu.memory_space<vmem>>, %arg2: memref<96x32xf32, #tpu.memory_space<vmem>>, %arg3: memref<1x32xf32, #tpu.memory_space<vmem>>, %arg4: memref<78x32xf32, #tpu.memory_space<vmem>>) attributes {dimension_semantics = [#tpu.dimension_semantics<parallel>], iteration_bounds = array<i64: 1>, scalar_prefetch = 0 : i64, scratch_operands = 0 : i64, tpu.core_type = #tpu.core_type<tc>, window_params = [{transform_indices = @transform_0, window_bounds = array<i64: 78, 96>}, {pipeline_mode = #tpu.pipeline_mode<synchronous>, transform_indices = @transform_1, window_bounds = array<i64: 96, 32>}, {pipeline_mode = #tpu.pipeline_mode<synchronous>, transform_indices = @transform_2, window_bounds = array<i64: 1, 32>}, {transform_indices = @transform_3, window_bounds = array<i64: 78, 32>}]} {
    %c0 = arith.constant 0 : index
    %c0_0 = arith.constant 0 : index
    %0 = vector.load %arg1[%c0, %c0_0] : memref<78x96xf32, #tpu.memory_space<vmem>>, vector<78x96xf32>
    %c0_1 = arith.constant 0 : index
    %c0_2 = arith.constant 0 : index
    %1 = vector.load %arg2[%c0_1, %c0_2] : memref<96x32xf32, #tpu.memory_space<vmem>>, vector<96x32xf32>
    %cst = arith.constant dense<0.000000e+00> : vector<78x32xf32>
    %2 = tpu.matmul %0, %1, %cst {dimension_numbers = #tpu.dot_dimension_numbers<[1], [0], [0], [1], [0, 0, 1, 1], [], []>} : vector<78x96xf32>, vector<96x32xf32>, vector<78x32xf32> -> vector<78x32xf32>
    %c0_3 = arith.constant 0 : index
    %c0_4 = arith.constant 0 : index
    %3 = vector.load %arg3[%c0_3, %c0_4] : memref<1x32xf32, #tpu.memory_space<vmem>>, vector<1x32xf32>
    %4 = vector.broadcast %3 : vector<1x32xf32> to vector<78x32xf32>
    %5 = arith.addf %2, %4 : vector<78x32xf32>
    %6 = arith.mulf %5, %5 : vector<78x32xf32>
    %7 = arith.mulf %5, %6 : vector<78x32xf32>
    %cst_5 = arith.constant 4.471500e-02 : f32
    %8 = vector.broadcast %cst_5 : f32 to vector<78x32xf32>
    %9 = arith.mulf %8, %7 : vector<78x32xf32>
    %10 = arith.addf %5, %9 : vector<78x32xf32>
    %cst_6 = arith.constant 0.797884583 : f32
    %11 = vector.broadcast %cst_6 : f32 to vector<78x32xf32>
    %12 = arith.mulf %11, %10 : vector<78x32xf32>
    %13 = math.tanh %12 : vector<78x32xf32>
    %cst_7 = arith.constant 1.000000e+00 : f32
    %14 = vector.broadcast %cst_7 : f32 to vector<78x32xf32>
    %15 = arith.addf %14, %13 : vector<78x32xf32>
    %cst_8 = arith.constant 5.000000e-01 : f32
    %16 = vector.broadcast %cst_8 : f32 to vector<78x32xf32>
    %17 = arith.mulf %16, %15 : vector<78x32xf32>
    %18 = arith.mulf %5, %17 : vector<78x32xf32>
    %c0_9 = arith.constant 0 : index
    %c0_10 = arith.constant 0 : index
    %19 = vector.load %arg4[%c0_9, %c0_10] : memref<78x32xf32, #tpu.memory_space<vmem>>, vector<78x32xf32>
    tpu.vector_store %arg4[%c0_9, %c0_10], %18 {strides = array<i32>} : memref<78x32xf32, #tpu.memory_space<vmem>>, vector<78x32xf32>,
    return
  }
  func.func @transform_0(%arg0: i32) -> (i32, i32) {
    %c0_i32 = arith.constant 0 : i32
    %c0_i32_0 = arith.constant 0 : i32
    return %arg0, %c0_i32 : i32, i32
  }
  func.func @transform_1(%arg0: i32) -> (i32, i32) {
    %c0_i32 = arith.constant 0 : i32
    %c0_i32_0 = arith.constant 0 : i32
    %c0_i32_1 = arith.constant 0 : i32
    return %c0_i32, %c0_i32_0 : i32, i32
  }
  func.func @transform_2(%arg0: i32) -> (i32, i32) {
    %c0_i32 = arith.constant 0 : i32
    %c0_i32_0 = arith.constant 0 : i32
    %c0_i32_1 = arith.constant 0 : i32
    return %c0_i32, %c0_i32_0 : i32, i32
  }
  func.func @transform_3(%arg0: i32) -> (i32, i32) {
    %c0_i32 = arith.constant 0 : i32
    %c0_i32_0 = arith.constant 0 : i32
    return %arg0, %c0_i32 : i32, i32
  }
}

module attributes {stable_mosaic.version = 11 : i64} {
  func.func @_ln_linear_kernel(%arg0: i32, %arg1: memref<78x32xf32, #tpu.memory_space<vmem>>, %arg2: memref<1x32xf32, #tpu.memory_space<vmem>>, %arg3: memref<1x32xf32, #tpu.memory_space<vmem>>, %arg4: memref<32x64xf32, #tpu.memory_space<vmem>>, %arg5: memref<1x64xf32, #tpu.memory_space<vmem>>, %arg6: memref<78x64xf32, #tpu.memory_space<vmem>>) attributes {dimension_semantics = [#tpu.dimension_semantics<parallel>], iteration_bounds = array<i64: 1>, scalar_prefetch = 0 : i64, scratch_operands = 0 : i64, tpu.core_type = #tpu.core_type<tc>, window_params = [{transform_indices = @transform_0, window_bounds = array<i64: 78, 32>}, {pipeline_mode = #tpu.pipeline_mode<synchronous>, transform_indices = @transform_1, window_bounds = array<i64: 1, 32>}, {pipeline_mode = #tpu.pipeline_mode<synchronous>, transform_indices = @transform_2, window_bounds = array<i64: 1, 32>}, {pipeline_mode = #tpu.pipeline_mode<synchronous>, transform_indices = @transform_3, window_bounds = array<i64: 32, 64>}, {pipeline_mode = #tpu.pipeline_mode<synchronous>, transform_indices = @transform_4, window_bounds = array<i64: 1, 64>}, {transform_indices = @transform_5, window_bounds = array<i64: 78, 64>}]} {
    %c0 = arith.constant 0 : index
    %c0_0 = arith.constant 0 : index
    %0 = vector.load %arg1[%c0, %c0_0] : memref<78x32xf32, #tpu.memory_space<vmem>>, vector<78x32xf32>
    %c0_1 = arith.constant 0 : index
    %c0_2 = arith.constant 0 : index
    %1 = vector.load %arg2[%c0_1, %c0_2] : memref<1x32xf32, #tpu.memory_space<vmem>>, vector<1x32xf32>
    %c0_3 = arith.constant 0 : index
    %c0_4 = arith.constant 0 : index
    %2 = vector.load %arg3[%c0_3, %c0_4] : memref<1x32xf32, #tpu.memory_space<vmem>>, vector<1x32xf32>
    %cst = arith.constant dense<0.000000e+00> : vector<78xf32>
    %3 = vector.multi_reduction <add>, %0, %cst [1] : vector<78x32xf32> to vector<78xf32>
    %4 = vector.shape_cast %3 : vector<78xf32> to vector<78x1xf32>
    %cst_5 = arith.constant 3.200000e+01 : f32
    %5 = vector.broadcast %cst_5 : f32 to vector<78x1xf32>
    %6 = arith.divf %4, %5 : vector<78x1xf32>
    %7 = vector.broadcast %6 : vector<78x1xf32> to vector<78x32xf32>
    %8 = arith.subf %0, %7 : vector<78x32xf32>
    %9 = arith.mulf %8, %8 : vector<78x32xf32>
    %cst_6 = arith.constant dense<0.000000e+00> : vector<78xf32>
    %10 = vector.multi_reduction <add>, %9, %cst_6 [1] : vector<78x32xf32> to vector<78xf32>
    %11 = vector.shape_cast %10 : vector<78xf32> to vector<78x1xf32>
    %cst_7 = arith.constant 3.200000e+01 : f32
    %12 = vector.broadcast %cst_7 : f32 to vector<78x1xf32>
    %13 = arith.divf %11, %12 : vector<78x1xf32>
    %14 = vector.broadcast %6 : vector<78x1xf32> to vector<78x32xf32>
    %15 = arith.subf %0, %14 : vector<78x32xf32>
    %cst_8 = arith.constant 9.99999974E-6 : f32
    %16 = vector.broadcast %cst_8 : f32 to vector<78x1xf32>
    %17 = arith.addf %13, %16 : vector<78x1xf32>
    %18 = math.rsqrt %17 : vector<78x1xf32>
    %19 = vector.broadcast %18 : vector<78x1xf32> to vector<78x32xf32>
    %20 = arith.mulf %15, %19 : vector<78x32xf32>
    %21 = vector.broadcast %1 : vector<1x32xf32> to vector<78x32xf32>
    %22 = arith.mulf %20, %21 : vector<78x32xf32>
    %23 = vector.broadcast %2 : vector<1x32xf32> to vector<78x32xf32>
    %24 = arith.addf %22, %23 : vector<78x32xf32>
    %c0_9 = arith.constant 0 : index
    %c0_10 = arith.constant 0 : index
    %25 = vector.load %arg4[%c0_9, %c0_10] : memref<32x64xf32, #tpu.memory_space<vmem>>, vector<32x64xf32>
    %cst_11 = arith.constant dense<0.000000e+00> : vector<78x64xf32>
    %26 = tpu.matmul %24, %25, %cst_11 {dimension_numbers = #tpu.dot_dimension_numbers<[1], [0], [0], [1], [0, 0, 1, 1], [], []>} : vector<78x32xf32>, vector<32x64xf32>, vector<78x64xf32> -> vector<78x64xf32>
    %c0_12 = arith.constant 0 : index
    %c0_13 = arith.constant 0 : index
    %27 = vector.load %arg5[%c0_12, %c0_13] : memref<1x64xf32, #tpu.memory_space<vmem>>, vector<1x64xf32>
    %28 = vector.broadcast %27 : vector<1x64xf32> to vector<78x64xf32>
    %29 = arith.addf %26, %28 : vector<78x64xf32>
    %c0_14 = arith.constant 0 : index
    %c0_15 = arith.constant 0 : index
    %30 = vector.load %arg6[%c0_14, %c0_15] : memref<78x64xf32, #tpu.memory_space<vmem>>, vector<78x64xf32>
    tpu.vector_store %arg6[%c0_14, %c0_15], %29 {strides = array<i32>} : memref<78x64xf32, #tpu.memory_space<vmem>>, vector<78x64xf32>,
    return
  }
  func.func @transform_0(%arg0: i32) -> (i32, i32) {
    %c0_i32 = arith.constant 0 : i32
    %c0_i32_0 = arith.constant 0 : i32
    return %arg0, %c0_i32 : i32, i32
  }
  func.func @transform_1(%arg0: i32) -> (i32, i32) {
    %c0_i32 = arith.constant 0 : i32
    %c0_i32_0 = arith.constant 0 : i32
    %c0_i32_1 = arith.constant 0 : i32
    return %c0_i32, %c0_i32_0 : i32, i32
  }
  func.func @transform_2(%arg0: i32) -> (i32, i32) {
    %c0_i32 = arith.constant 0 : i32
    %c0_i32_0 = arith.constant 0 : i32
    %c0_i32_1 = arith.constant 0 : i32
    return %c0_i32, %c0_i32_0 : i32, i32
  }
  func.func @transform_3(%arg0: i32) -> (i32, i32) {
    %c0_i32 = arith.constant 0 : i32
    %c0_i32_0 = arith.constant 0 : i32
    %c0_i32_1 = arith.constant 0 : i32
    return %c0_i32, %c0_i32_0 : i32, i32
  }
  func.func @transform_4(%arg0: i32) -> (i32, i32) {
    %c0_i32 = arith.constant 0 : i32
    %c0_i32_0 = arith.constant 0 : i32
    %c0_i32_1 = arith.constant 0 : i32
    return %c0_i32, %c0_i32_0 : i32, i32
  }
  func.func @transform_5(%arg0: i32) -> (i32, i32) {
    %c0_i32 = arith.constant 0 : i32
    %c0_i32_0 = arith.constant 0 : i32
    return %arg0, %c0_i32 : i32, i32
  }
}

module attributes {stable_mosaic.version = 11 : i64} {
  func.func @_linear_kernel(%arg0: i32, %arg1: memref<78x320xf32, #tpu.memory_space<vmem>>, %arg2: memref<320x64xf32, #tpu.memory_space<vmem>>, %arg3: memref<1x64xf32, #tpu.memory_space<vmem>>, %arg4: memref<78x64xf32, #tpu.memory_space<vmem>>) attributes {dimension_semantics = [#tpu.dimension_semantics<parallel>], iteration_bounds = array<i64: 1>, scalar_prefetch = 0 : i64, scratch_operands = 0 : i64, tpu.core_type = #tpu.core_type<tc>, window_params = [{transform_indices = @transform_0, window_bounds = array<i64: 78, 320>}, {pipeline_mode = #tpu.pipeline_mode<synchronous>, transform_indices = @transform_1, window_bounds = array<i64: 320, 64>}, {pipeline_mode = #tpu.pipeline_mode<synchronous>, transform_indices = @transform_2, window_bounds = array<i64: 1, 64>}, {transform_indices = @transform_3, window_bounds = array<i64: 78, 64>}]} {
    %c0 = arith.constant 0 : index
    %c0_0 = arith.constant 0 : index
    %0 = vector.load %arg1[%c0, %c0_0] : memref<78x320xf32, #tpu.memory_space<vmem>>, vector<78x320xf32>
    %c0_1 = arith.constant 0 : index
    %c0_2 = arith.constant 0 : index
    %1 = vector.load %arg2[%c0_1, %c0_2] : memref<320x64xf32, #tpu.memory_space<vmem>>, vector<320x64xf32>
    %cst = arith.constant dense<0.000000e+00> : vector<78x64xf32>
    %2 = tpu.matmul %0, %1, %cst {dimension_numbers = #tpu.dot_dimension_numbers<[1], [0], [0], [1], [0, 0, 1, 1], [], []>} : vector<78x320xf32>, vector<320x64xf32>, vector<78x64xf32> -> vector<78x64xf32>
    %c0_3 = arith.constant 0 : index
    %c0_4 = arith.constant 0 : index
    %3 = vector.load %arg3[%c0_3, %c0_4] : memref<1x64xf32, #tpu.memory_space<vmem>>, vector<1x64xf32>
    %4 = vector.broadcast %3 : vector<1x64xf32> to vector<78x64xf32>
    %5 = arith.addf %2, %4 : vector<78x64xf32>
    %6 = arith.mulf %5, %5 : vector<78x64xf32>
    %7 = arith.mulf %5, %6 : vector<78x64xf32>
    %cst_5 = arith.constant 4.471500e-02 : f32
    %8 = vector.broadcast %cst_5 : f32 to vector<78x64xf32>
    %9 = arith.mulf %8, %7 : vector<78x64xf32>
    %10 = arith.addf %5, %9 : vector<78x64xf32>
    %cst_6 = arith.constant 0.797884583 : f32
    %11 = vector.broadcast %cst_6 : f32 to vector<78x64xf32>
    %12 = arith.mulf %11, %10 : vector<78x64xf32>
    %13 = math.tanh %12 : vector<78x64xf32>
    %cst_7 = arith.constant 1.000000e+00 : f32
    %14 = vector.broadcast %cst_7 : f32 to vector<78x64xf32>
    %15 = arith.addf %14, %13 : vector<78x64xf32>
    %cst_8 = arith.constant 5.000000e-01 : f32
    %16 = vector.broadcast %cst_8 : f32 to vector<78x64xf32>
    %17 = arith.mulf %16, %15 : vector<78x64xf32>
    %18 = arith.mulf %5, %17 : vector<78x64xf32>
    %c0_9 = arith.constant 0 : index
    %c0_10 = arith.constant 0 : index
    %19 = vector.load %arg4[%c0_9, %c0_10] : memref<78x64xf32, #tpu.memory_space<vmem>>, vector<78x64xf32>
    tpu.vector_store %arg4[%c0_9, %c0_10], %18 {strides = array<i32>} : memref<78x64xf32, #tpu.memory_space<vmem>>, vector<78x64xf32>,
    return
  }
  func.func @transform_0(%arg0: i32) -> (i32, i32) {
    %c0_i32 = arith.constant 0 : i32
    %c0_i32_0 = arith.constant 0 : i32
    return %arg0, %c0_i32 : i32, i32
  }
  func.func @transform_1(%arg0: i32) -> (i32, i32) {
    %c0_i32 = arith.constant 0 : i32
    %c0_i32_0 = arith.constant 0 : i32
    %c0_i32_1 = arith.constant 0 : i32
    return %c0_i32, %c0_i32_0 : i32, i32
  }
  func.func @transform_2(%arg0: i32) -> (i32, i32) {
    %c0_i32 = arith.constant 0 : i32
    %c0_i32_0 = arith.constant 0 : i32
    %c0_i32_1 = arith.constant 0 : i32
    return %c0_i32, %c0_i32_0 : i32, i32
  }
  func.func @transform_3(%arg0: i32) -> (i32, i32) {
    %c0_i32 = arith.constant 0 : i32
    %c0_i32_0 = arith.constant 0 : i32
    return %arg0, %c0_i32 : i32, i32
  }
}

module attributes {stable_mosaic.version = 11 : i64} {
  func.func @_add_ln_kernel(%arg0: i32, %arg1: memref<78x64xf32, #tpu.memory_space<vmem>>, %arg2: memref<78x64xf32, #tpu.memory_space<vmem>>, %arg3: memref<1x64xf32, #tpu.memory_space<vmem>>, %arg4: memref<1x64xf32, #tpu.memory_space<vmem>>, %arg5: memref<78x64xf32, #tpu.memory_space<vmem>>) attributes {dimension_semantics = [#tpu.dimension_semantics<parallel>], iteration_bounds = array<i64: 1>, scalar_prefetch = 0 : i64, scratch_operands = 0 : i64, tpu.core_type = #tpu.core_type<tc>, window_params = [{transform_indices = @transform_0, window_bounds = array<i64: 78, 64>}, {transform_indices = @transform_1, window_bounds = array<i64: 78, 64>}, {pipeline_mode = #tpu.pipeline_mode<synchronous>, transform_indices = @transform_2, window_bounds = array<i64: 1, 64>}, {pipeline_mode = #tpu.pipeline_mode<synchronous>, transform_indices = @transform_3, window_bounds = array<i64: 1, 64>}, {transform_indices = @transform_4, window_bounds = array<i64: 78, 64>}]} {
    %c0 = arith.constant 0 : index
    %c0_0 = arith.constant 0 : index
    %0 = vector.load %arg1[%c0, %c0_0] : memref<78x64xf32, #tpu.memory_space<vmem>>, vector<78x64xf32>
    %c0_1 = arith.constant 0 : index
    %c0_2 = arith.constant 0 : index
    %1 = vector.load %arg2[%c0_1, %c0_2] : memref<78x64xf32, #tpu.memory_space<vmem>>, vector<78x64xf32>
    %2 = arith.addf %0, %1 : vector<78x64xf32>
    %c0_3 = arith.constant 0 : index
    %c0_4 = arith.constant 0 : index
    %3 = vector.load %arg3[%c0_3, %c0_4] : memref<1x64xf32, #tpu.memory_space<vmem>>, vector<1x64xf32>
    %c0_5 = arith.constant 0 : index
    %c0_6 = arith.constant 0 : index
    %4 = vector.load %arg4[%c0_5, %c0_6] : memref<1x64xf32, #tpu.memory_space<vmem>>, vector<1x64xf32>
    %cst = arith.constant dense<0.000000e+00> : vector<78xf32>
    %5 = vector.multi_reduction <add>, %2, %cst [1] : vector<78x64xf32> to vector<78xf32>
    %6 = vector.shape_cast %5 : vector<78xf32> to vector<78x1xf32>
    %cst_7 = arith.constant 6.400000e+01 : f32
    %7 = vector.broadcast %cst_7 : f32 to vector<78x1xf32>
    %8 = arith.divf %6, %7 : vector<78x1xf32>
    %9 = vector.broadcast %8 : vector<78x1xf32> to vector<78x64xf32>
    %10 = arith.subf %2, %9 : vector<78x64xf32>
    %11 = arith.mulf %10, %10 : vector<78x64xf32>
    %cst_8 = arith.constant dense<0.000000e+00> : vector<78xf32>
    %12 = vector.multi_reduction <add>, %11, %cst_8 [1] : vector<78x64xf32> to vector<78xf32>
    %13 = vector.shape_cast %12 : vector<78xf32> to vector<78x1xf32>
    %cst_9 = arith.constant 6.400000e+01 : f32
    %14 = vector.broadcast %cst_9 : f32 to vector<78x1xf32>
    %15 = arith.divf %13, %14 : vector<78x1xf32>
    %16 = vector.broadcast %8 : vector<78x1xf32> to vector<78x64xf32>
    %17 = arith.subf %2, %16 : vector<78x64xf32>
    %cst_10 = arith.constant 9.99999974E-6 : f32
    %18 = vector.broadcast %cst_10 : f32 to vector<78x1xf32>
    %19 = arith.addf %15, %18 : vector<78x1xf32>
    %20 = math.rsqrt %19 : vector<78x1xf32>
    %21 = vector.broadcast %20 : vector<78x1xf32> to vector<78x64xf32>
    %22 = arith.mulf %17, %21 : vector<78x64xf32>
    %23 = vector.broadcast %3 : vector<1x64xf32> to vector<78x64xf32>
    %24 = arith.mulf %22, %23 : vector<78x64xf32>
    %25 = vector.broadcast %4 : vector<1x64xf32> to vector<78x64xf32>
    %26 = arith.addf %24, %25 : vector<78x64xf32>
    %c0_11 = arith.constant 0 : index
    %c0_12 = arith.constant 0 : index
    %27 = vector.load %arg5[%c0_11, %c0_12] : memref<78x64xf32, #tpu.memory_space<vmem>>, vector<78x64xf32>
    tpu.vector_store %arg5[%c0_11, %c0_12], %26 {strides = array<i32>} : memref<78x64xf32, #tpu.memory_space<vmem>>, vector<78x64xf32>,
    return
  }
  func.func @transform_0(%arg0: i32) -> (i32, i32) {
    %c0_i32 = arith.constant 0 : i32
    %c0_i32_0 = arith.constant 0 : i32
    return %arg0, %c0_i32 : i32, i32
  }
  func.func @transform_1(%arg0: i32) -> (i32, i32) {
    %c0_i32 = arith.constant 0 : i32
    %c0_i32_0 = arith.constant 0 : i32
    return %arg0, %c0_i32 : i32, i32
  }
  func.func @transform_2(%arg0: i32) -> (i32, i32) {
    %c0_i32 = arith.constant 0 : i32
    %c0_i32_0 = arith.constant 0 : i32
    %c0_i32_1 = arith.constant 0 : i32
    return %c0_i32, %c0_i32_0 : i32, i32
  }
  func.func @transform_3(%arg0: i32) -> (i32, i32) {
    %c0_i32 = arith.constant 0 : i32
    %c0_i32_0 = arith.constant 0 : i32
    %c0_i32_1 = arith.constant 0 : i32
    return %c0_i32, %c0_i32_0 : i32, i32
  }
  func.func @transform_4(%arg0: i32) -> (i32, i32) {
    %c0_i32 = arith.constant 0 : i32
    %c0_i32_0 = arith.constant 0 : i32
    return %arg0, %c0_i32 : i32, i32
  }
}

module attributes {stable_mosaic.version = 11 : i64} {
  func.func @_encoder_layer_kernel(%arg0: i32, %arg1: memref<1x39x64xf32, #tpu.memory_space<vmem>>, %arg2: memref<1x1x39xf32, #tpu.memory_space<vmem>>, %arg3: memref<64x192xf32, #tpu.memory_space<vmem>>, %arg4: memref<1x192xf32, #tpu.memory_space<vmem>>, %arg5: memref<64x64xf32, #tpu.memory_space<vmem>>, %arg6: memref<1x64xf32, #tpu.memory_space<vmem>>, %arg7: memref<1x64xf32, #tpu.memory_space<vmem>>, %arg8: memref<1x64xf32, #tpu.memory_space<vmem>>, %arg9: memref<64x128xf32, #tpu.memory_space<vmem>>, %arg10: memref<1x128xf32, #tpu.memory_space<vmem>>, %arg11: memref<128x64xf32, #tpu.memory_space<vmem>>, %arg12: memref<1x64xf32, #tpu.memory_space<vmem>>, %arg13: memref<1x64xf32, #tpu.memory_space<vmem>>, %arg14: memref<1x64xf32, #tpu.memory_space<vmem>>, %arg15: memref<1x39x64xf32, #tpu.memory_space<vmem>>) attributes {dimension_semantics = [#tpu.dimension_semantics<parallel>], iteration_bounds = array<i64: 2>, scalar_prefetch = 0 : i64, scratch_operands = 0 : i64, tpu.core_type = #tpu.core_type<tc>, window_params = [{transform_indices = @transform_0, window_bounds = array<i64: 1, 39, 64>}, {transform_indices = @transform_1, window_bounds = array<i64: 1, 1, 39>}, {pipeline_mode = #tpu.pipeline_mode<synchronous>, transform_indices = @transform_2, window_bounds = array<i64: 64, 192>}, {pipeline_mode = #tpu.pipeline_mode<synchronous>, transform_indices = @transform_3, window_bounds = array<i64: 1, 192>}, {pipeline_mode = #tpu.pipeline_mode<synchronous>, transform_indices = @transform_4, window_bounds = array<i64: 64, 64>}, {pipeline_mode = #tpu.pipeline_mode<synchronous>, transform_indices = @transform_5, window_bounds = array<i64: 1, 64>}, {pipeline_mode = #tpu.pipeline_mode<synchronous>, transform_indices = @transform_6, window_bounds = array<i64: 1, 64>}, {pipeline_mode = #tpu.pipeline_mode<synchronous>, transform_indices = @transform_7, window_bounds = array<i64: 1, 64>}, {pipeline_mode = #tpu.pipeline_mode<synchronous>, transform_indices = @transform_8, window_bounds = array<i64: 64, 128>}, {pipeline_mode = #tpu.pipeline_mode<synchronous>, transform_indices = @transform_9, window_bounds = array<i64: 1, 128>}, {pipeline_mode = #tpu.pipeline_mode<synchronous>, transform_indices = @transform_10, window_bounds = array<i64: 128, 64>}, {pipeline_mode = #tpu.pipeline_mode<synchronous>, transform_indices = @transform_11, window_bounds = array<i64: 1, 64>}, {pipeline_mode = #tpu.pipeline_mode<synchronous>, transform_indices = @transform_12, window_bounds = array<i64: 1, 64>}, {pipeline_mode = #tpu.pipeline_mode<synchronous>, transform_indices = @transform_13, window_bounds = array<i64: 1, 64>}, {transform_indices = @transform_14, window_bounds = array<i64: 1, 39, 64>}]} {
    %c0 = arith.constant 0 : index
    %c0_0 = arith.constant 0 : index
    %c0_1 = arith.constant 0 : index
    %0 = vector.load %arg1[%c0, %c0_0, %c0_1] : memref<1x39x64xf32, #tpu.memory_space<vmem>>, vector<1x39x64xf32>
    %1 = vector.shape_cast %0 : vector<1x39x64xf32> to vector<39x64xf32>
    %c0_2 = arith.constant 0 : index
    %c0_3 = arith.constant 0 : index
    %c0_4 = arith.constant 0 : index
    %2 = vector.load %arg2[%c0_2, %c0_3, %c0_4] : memref<1x1x39xf32, #tpu.memory_space<vmem>>, vector<1x1x39xf32>
    %3 = vector.shape_cast %2 : vector<1x1x39xf32> to vector<1x39xf32>
    %c0_5 = arith.constant 0 : index
    %c0_6 = arith.constant 0 : index
    %4 = vector.load %arg3[%c0_5, %c0_6] : memref<64x192xf32, #tpu.memory_space<vmem>>, vector<64x192xf32>
    %cst = arith.constant dense<0.000000e+00> : vector<39x192xf32>
    %5 = tpu.matmul %1, %4, %cst {dimension_numbers = #tpu.dot_dimension_numbers<[1], [0], [0], [1], [0, 0, 1, 1], [], []>} : vector<39x64xf32>, vector<64x192xf32>, vector<39x192xf32> -> vector<39x192xf32>
    %c0_7 = arith.constant 0 : index
    %c0_8 = arith.constant 0 : index
    %6 = vector.load %arg4[%c0_7, %c0_8] : memref<1x192xf32, #tpu.memory_space<vmem>>, vector<1x192xf32>
    %7 = vector.broadcast %6 : vector<1x192xf32> to vector<39x192xf32>
    %8 = arith.addf %5, %7 : vector<39x192xf32>
    %c0_9 = arith.constant 0 : index
    %c0_10 = arith.constant 0 : index
    %9 = vector.load %arg5[%c0_9, %c0_10] : memref<64x64xf32, #tpu.memory_space<vmem>>, vector<64x64xf32>
    %10 = vector.extract_strided_slice %8 {offsets = [0, 0], sizes = [39, 16], strides = [1, 1]} : vector<39x192xf32> to vector<39x16xf32>
    %cst_11 = arith.constant 2.500000e-01 : f32
    %11 = vector.broadcast %cst_11 : f32 to vector<39x16xf32>
    %12 = arith.mulf %10, %11 : vector<39x16xf32>
    %13 = vector.extract_strided_slice %8 {offsets = [0, 64], sizes = [39, 16], strides = [1, 1]} : vector<39x192xf32> to vector<39x16xf32>
    %14 = vector.extract_strided_slice %8 {offsets = [0, 128], sizes = [39, 16], strides = [1, 1]} : vector<39x192xf32> to vector<39x16xf32>
    %cst_12 = arith.constant dense<0.000000e+00> : vector<39x39xf32>
    %15 = tpu.matmul %12, %13, %cst_12 {dimension_numbers = #tpu.dot_dimension_numbers<[1], [1], [0], [0], [0, 0, 1, 0], [], []>} : vector<39x16xf32>, vector<39x16xf32>, vector<39x39xf32> -> vector<39x39xf32>
    %16 = vector.broadcast %3 : vector<1x39xf32> to vector<39x39xf32>
    %17 = arith.addf %15, %16 : vector<39x39xf32>
    %cst_13 = arith.constant dense<0xFF800000> : vector<39xf32>
    %18 = vector.multi_reduction <maximumf>, %17, %cst_13 [1] : vector<39x39xf32> to vector<39xf32>
    %cst_14 = arith.constant 0xFF800000 : f32
    %19 = vector.broadcast %cst_14 : f32 to vector<39xf32>
    %20 = arith.maximumf %19, %18 : vector<39xf32>
    %21 = vector.shape_cast %20 : vector<39xf32> to vector<39x1xf32>
    %22 = vector.broadcast %21 : vector<39x1xf32> to vector<39x39xf32>
    %23 = arith.subf %17, %22 : vector<39x39xf32>
    %24 = math.exp %23 : vector<39x39xf32>
    %cst_15 = arith.constant dense<0.000000e+00> : vector<39xf32>
    %25 = vector.multi_reduction <add>, %24, %cst_15 [1] : vector<39x39xf32> to vector<39xf32>
    %26 = vector.shape_cast %25 : vector<39xf32> to vector<39x1xf32>
    %27 = vector.broadcast %26 : vector<39x1xf32> to vector<39x39xf32>
    %28 = arith.divf %24, %27 : vector<39x39xf32>
    %cst_16 = arith.constant dense<0.000000e+00> : vector<39x16xf32>
    %29 = tpu.matmul %28, %14, %cst_16 {dimension_numbers = #tpu.dot_dimension_numbers<[1], [0], [0], [1], [0, 0, 1, 1], [], []>} : vector<39x39xf32>, vector<39x16xf32>, vector<39x16xf32> -> vector<39x16xf32>
    %30 = vector.extract_strided_slice %9 {offsets = [0, 0], sizes = [16, 64], strides = [1, 1]} : vector<64x64xf32> to vector<16x64xf32>
    %cst_17 = arith.constant dense<0.000000e+00> : vector<39x64xf32>
    %31 = tpu.matmul %29, %30, %cst_17 {dimension_numbers = #tpu.dot_dimension_numbers<[1], [0], [0], [1], [0, 0, 1, 1], [], []>} : vector<39x16xf32>, vector<16x64xf32>, vector<39x64xf32> -> vector<39x64xf32>
    %32 = vector.extract_strided_slice %8 {offsets = [0, 16], sizes = [39, 16], strides = [1, 1]} : vector<39x192xf32> to vector<39x16xf32>
    %cst_18 = arith.constant 2.500000e-01 : f32
    %33 = vector.broadcast %cst_18 : f32 to vector<39x16xf32>
    %34 = arith.mulf %32, %33 : vector<39x16xf32>
    %35 = vector.extract_strided_slice %8 {offsets = [0, 80], sizes = [39, 16], strides = [1, 1]} : vector<39x192xf32> to vector<39x16xf32>
    %36 = vector.extract_strided_slice %8 {offsets = [0, 144], sizes = [39, 16], strides = [1, 1]} : vector<39x192xf32> to vector<39x16xf32>
    %cst_19 = arith.constant dense<0.000000e+00> : vector<39x39xf32>
    %37 = tpu.matmul %34, %35, %cst_19 {dimension_numbers = #tpu.dot_dimension_numbers<[1], [1], [0], [0], [0, 0, 1, 0], [], []>} : vector<39x16xf32>, vector<39x16xf32>, vector<39x39xf32> -> vector<39x39xf32>
    %38 = vector.broadcast %3 : vector<1x39xf32> to vector<39x39xf32>
    %39 = arith.addf %37, %38 : vector<39x39xf32>
    %cst_20 = arith.constant dense<0xFF800000> : vector<39xf32>
    %40 = vector.multi_reduction <maximumf>, %39, %cst_20 [1] : vector<39x39xf32> to vector<39xf32>
    %cst_21 = arith.constant 0xFF800000 : f32
    %41 = vector.broadcast %cst_21 : f32 to vector<39xf32>
    %42 = arith.maximumf %41, %40 : vector<39xf32>
    %43 = vector.shape_cast %42 : vector<39xf32> to vector<39x1xf32>
    %44 = vector.broadcast %43 : vector<39x1xf32> to vector<39x39xf32>
    %45 = arith.subf %39, %44 : vector<39x39xf32>
    %46 = math.exp %45 : vector<39x39xf32>
    %cst_22 = arith.constant dense<0.000000e+00> : vector<39xf32>
    %47 = vector.multi_reduction <add>, %46, %cst_22 [1] : vector<39x39xf32> to vector<39xf32>
    %48 = vector.shape_cast %47 : vector<39xf32> to vector<39x1xf32>
    %49 = vector.broadcast %48 : vector<39x1xf32> to vector<39x39xf32>
    %50 = arith.divf %46, %49 : vector<39x39xf32>
    %cst_23 = arith.constant dense<0.000000e+00> : vector<39x16xf32>
    %51 = tpu.matmul %50, %36, %cst_23 {dimension_numbers = #tpu.dot_dimension_numbers<[1], [0], [0], [1], [0, 0, 1, 1], [], []>} : vector<39x39xf32>, vector<39x16xf32>, vector<39x16xf32> -> vector<39x16xf32>
    %52 = vector.extract_strided_slice %9 {offsets = [16, 0], sizes = [16, 64], strides = [1, 1]} : vector<64x64xf32> to vector<16x64xf32>
    %cst_24 = arith.constant dense<0.000000e+00> : vector<39x64xf32>
    %53 = tpu.matmul %51, %52, %cst_24 {dimension_numbers = #tpu.dot_dimension_numbers<[1], [0], [0], [1], [0, 0, 1, 1], [], []>} : vector<39x16xf32>, vector<16x64xf32>, vector<39x64xf32> -> vector<39x64xf32>
    %54 = arith.addf %31, %53 : vector<39x64xf32>
    %55 = vector.extract_strided_slice %8 {offsets = [0, 32], sizes = [39, 16], strides = [1, 1]} : vector<39x192xf32> to vector<39x16xf32>
    %cst_25 = arith.constant 2.500000e-01 : f32
    %56 = vector.broadcast %cst_25 : f32 to vector<39x16xf32>
    %57 = arith.mulf %55, %56 : vector<39x16xf32>
    %58 = vector.extract_strided_slice %8 {offsets = [0, 96], sizes = [39, 16], strides = [1, 1]} : vector<39x192xf32> to vector<39x16xf32>
    %59 = vector.extract_strided_slice %8 {offsets = [0, 160], sizes = [39, 16], strides = [1, 1]} : vector<39x192xf32> to vector<39x16xf32>
    %cst_26 = arith.constant dense<0.000000e+00> : vector<39x39xf32>
    %60 = tpu.matmul %57, %58, %cst_26 {dimension_numbers = #tpu.dot_dimension_numbers<[1], [1], [0], [0], [0, 0, 1, 0], [], []>} : vector<39x16xf32>, vector<39x16xf32>, vector<39x39xf32> -> vector<39x39xf32>
    %61 = vector.broadcast %3 : vector<1x39xf32> to vector<39x39xf32>
    %62 = arith.addf %60, %61 : vector<39x39xf32>
    %cst_27 = arith.constant dense<0xFF800000> : vector<39xf32>
    %63 = vector.multi_reduction <maximumf>, %62, %cst_27 [1] : vector<39x39xf32> to vector<39xf32>
    %cst_28 = arith.constant 0xFF800000 : f32
    %64 = vector.broadcast %cst_28 : f32 to vector<39xf32>
    %65 = arith.maximumf %64, %63 : vector<39xf32>
    %66 = vector.shape_cast %65 : vector<39xf32> to vector<39x1xf32>
    %67 = vector.broadcast %66 : vector<39x1xf32> to vector<39x39xf32>
    %68 = arith.subf %62, %67 : vector<39x39xf32>
    %69 = math.exp %68 : vector<39x39xf32>
    %cst_29 = arith.constant dense<0.000000e+00> : vector<39xf32>
    %70 = vector.multi_reduction <add>, %69, %cst_29 [1] : vector<39x39xf32> to vector<39xf32>
    %71 = vector.shape_cast %70 : vector<39xf32> to vector<39x1xf32>
    %72 = vector.broadcast %71 : vector<39x1xf32> to vector<39x39xf32>
    %73 = arith.divf %69, %72 : vector<39x39xf32>
    %cst_30 = arith.constant dense<0.000000e+00> : vector<39x16xf32>
    %74 = tpu.matmul %73, %59, %cst_30 {dimension_numbers = #tpu.dot_dimension_numbers<[1], [0], [0], [1], [0, 0, 1, 1], [], []>} : vector<39x39xf32>, vector<39x16xf32>, vector<39x16xf32> -> vector<39x16xf32>
    %75 = vector.extract_strided_slice %9 {offsets = [32, 0], sizes = [16, 64], strides = [1, 1]} : vector<64x64xf32> to vector<16x64xf32>
    %cst_31 = arith.constant dense<0.000000e+00> : vector<39x64xf32>
    %76 = tpu.matmul %74, %75, %cst_31 {dimension_numbers = #tpu.dot_dimension_numbers<[1], [0], [0], [1], [0, 0, 1, 1], [], []>} : vector<39x16xf32>, vector<16x64xf32>, vector<39x64xf32> -> vector<39x64xf32>
    %77 = arith.addf %54, %76 : vector<39x64xf32>
    %78 = vector.extract_strided_slice %8 {offsets = [0, 48], sizes = [39, 16], strides = [1, 1]} : vector<39x192xf32> to vector<39x16xf32>
    %cst_32 = arith.constant 2.500000e-01 : f32
    %79 = vector.broadcast %cst_32 : f32 to vector<39x16xf32>
    %80 = arith.mulf %78, %79 : vector<39x16xf32>
    %81 = vector.extract_strided_slice %8 {offsets = [0, 112], sizes = [39, 16], strides = [1, 1]} : vector<39x192xf32> to vector<39x16xf32>
    %82 = vector.extract_strided_slice %8 {offsets = [0, 176], sizes = [39, 16], strides = [1, 1]} : vector<39x192xf32> to vector<39x16xf32>
    %cst_33 = arith.constant dense<0.000000e+00> : vector<39x39xf32>
    %83 = tpu.matmul %80, %81, %cst_33 {dimension_numbers = #tpu.dot_dimension_numbers<[1], [1], [0], [0], [0, 0, 1, 0], [], []>} : vector<39x16xf32>, vector<39x16xf32>, vector<39x39xf32> -> vector<39x39xf32>
    %84 = vector.broadcast %3 : vector<1x39xf32> to vector<39x39xf32>
    %85 = arith.addf %83, %84 : vector<39x39xf32>
    %cst_34 = arith.constant dense<0xFF800000> : vector<39xf32>
    %86 = vector.multi_reduction <maximumf>, %85, %cst_34 [1] : vector<39x39xf32> to vector<39xf32>
    %cst_35 = arith.constant 0xFF800000 : f32
    %87 = vector.broadcast %cst_35 : f32 to vector<39xf32>
    %88 = arith.maximumf %87, %86 : vector<39xf32>
    %89 = vector.shape_cast %88 : vector<39xf32> to vector<39x1xf32>
    %90 = vector.broadcast %89 : vector<39x1xf32> to vector<39x39xf32>
    %91 = arith.subf %85, %90 : vector<39x39xf32>
    %92 = math.exp %91 : vector<39x39xf32>
    %cst_36 = arith.constant dense<0.000000e+00> : vector<39xf32>
    %93 = vector.multi_reduction <add>, %92, %cst_36 [1] : vector<39x39xf32> to vector<39xf32>
    %94 = vector.shape_cast %93 : vector<39xf32> to vector<39x1xf32>
    %95 = vector.broadcast %94 : vector<39x1xf32> to vector<39x39xf32>
    %96 = arith.divf %92, %95 : vector<39x39xf32>
    %cst_37 = arith.constant dense<0.000000e+00> : vector<39x16xf32>
    %97 = tpu.matmul %96, %82, %cst_37 {dimension_numbers = #tpu.dot_dimension_numbers<[1], [0], [0], [1], [0, 0, 1, 1], [], []>} : vector<39x39xf32>, vector<39x16xf32>, vector<39x16xf32> -> vector<39x16xf32>
    %98 = vector.extract_strided_slice %9 {offsets = [48, 0], sizes = [16, 64], strides = [1, 1]} : vector<64x64xf32> to vector<16x64xf32>
    %cst_38 = arith.constant dense<0.000000e+00> : vector<39x64xf32>
    %99 = tpu.matmul %97, %98, %cst_38 {dimension_numbers = #tpu.dot_dimension_numbers<[1], [0], [0], [1], [0, 0, 1, 1], [], []>} : vector<39x16xf32>, vector<16x64xf32>, vector<39x64xf32> -> vector<39x64xf32>
    %100 = arith.addf %77, %99 : vector<39x64xf32>
    %101 = arith.addf %1, %100 : vector<39x64xf32>
    %c0_39 = arith.constant 0 : index
    %c0_40 = arith.constant 0 : index
    %102 = vector.load %arg6[%c0_39, %c0_40] : memref<1x64xf32, #tpu.memory_space<vmem>>, vector<1x64xf32>
    %103 = vector.broadcast %102 : vector<1x64xf32> to vector<39x64xf32>
    %104 = arith.addf %101, %103 : vector<39x64xf32>
    %c0_41 = arith.constant 0 : index
    %c0_42 = arith.constant 0 : index
    %105 = vector.load %arg7[%c0_41, %c0_42] : memref<1x64xf32, #tpu.memory_space<vmem>>, vector<1x64xf32>
    %c0_43 = arith.constant 0 : index
    %c0_44 = arith.constant 0 : index
    %106 = vector.load %arg8[%c0_43, %c0_44] : memref<1x64xf32, #tpu.memory_space<vmem>>, vector<1x64xf32>
    %cst_45 = arith.constant dense<0.000000e+00> : vector<39xf32>
    %107 = vector.multi_reduction <add>, %104, %cst_45 [1] : vector<39x64xf32> to vector<39xf32>
    %108 = vector.shape_cast %107 : vector<39xf32> to vector<39x1xf32>
    %cst_46 = arith.constant 6.400000e+01 : f32
    %109 = vector.broadcast %cst_46 : f32 to vector<39x1xf32>
    %110 = arith.divf %108, %109 : vector<39x1xf32>
    %111 = vector.broadcast %110 : vector<39x1xf32> to vector<39x64xf32>
    %112 = arith.subf %104, %111 : vector<39x64xf32>
    %113 = arith.mulf %112, %112 : vector<39x64xf32>
    %cst_47 = arith.constant dense<0.000000e+00> : vector<39xf32>
    %114 = vector.multi_reduction <add>, %113, %cst_47 [1] : vector<39x64xf32> to vector<39xf32>
    %115 = vector.shape_cast %114 : vector<39xf32> to vector<39x1xf32>
    %cst_48 = arith.constant 6.400000e+01 : f32
    %116 = vector.broadcast %cst_48 : f32 to vector<39x1xf32>
    %117 = arith.divf %115, %116 : vector<39x1xf32>
    %118 = vector.broadcast %110 : vector<39x1xf32> to vector<39x64xf32>
    %119 = arith.subf %104, %118 : vector<39x64xf32>
    %cst_49 = arith.constant 9.99999974E-6 : f32
    %120 = vector.broadcast %cst_49 : f32 to vector<39x1xf32>
    %121 = arith.addf %117, %120 : vector<39x1xf32>
    %122 = math.rsqrt %121 : vector<39x1xf32>
    %123 = vector.broadcast %122 : vector<39x1xf32> to vector<39x64xf32>
    %124 = arith.mulf %119, %123 : vector<39x64xf32>
    %125 = vector.broadcast %105 : vector<1x64xf32> to vector<39x64xf32>
    %126 = arith.mulf %124, %125 : vector<39x64xf32>
    %127 = vector.broadcast %106 : vector<1x64xf32> to vector<39x64xf32>
    %128 = arith.addf %126, %127 : vector<39x64xf32>
    %c0_50 = arith.constant 0 : index
    %c0_51 = arith.constant 0 : index
    %129 = vector.load %arg9[%c0_50, %c0_51] : memref<64x128xf32, #tpu.memory_space<vmem>>, vector<64x128xf32>
    %cst_52 = arith.constant dense<0.000000e+00> : vector<39x128xf32>
    %130 = tpu.matmul %128, %129, %cst_52 {dimension_numbers = #tpu.dot_dimension_numbers<[1], [0], [0], [1], [0, 0, 1, 1], [], []>} : vector<39x64xf32>, vector<64x128xf32>, vector<39x128xf32> -> vector<39x128xf32>
    %c0_53 = arith.constant 0 : index
    %c0_54 = arith.constant 0 : index
    %131 = vector.load %arg10[%c0_53, %c0_54] : memref<1x128xf32, #tpu.memory_space<vmem>>, vector<1x128xf32>
    %132 = vector.broadcast %131 : vector<1x128xf32> to vector<39x128xf32>
    %133 = arith.addf %130, %132 : vector<39x128xf32>
    %134 = arith.mulf %133, %133 : vector<39x128xf32>
    %135 = arith.mulf %133, %134 : vector<39x128xf32>
    %cst_55 = arith.constant 4.471500e-02 : f32
    %136 = vector.broadcast %cst_55 : f32 to vector<39x128xf32>
    %137 = arith.mulf %136, %135 : vector<39x128xf32>
    %138 = arith.addf %133, %137 : vector<39x128xf32>
    %cst_56 = arith.constant 0.797884583 : f32
    %139 = vector.broadcast %cst_56 : f32 to vector<39x128xf32>
    %140 = arith.mulf %139, %138 : vector<39x128xf32>
    %141 = math.tanh %140 : vector<39x128xf32>
    %cst_57 = arith.constant 1.000000e+00 : f32
    %142 = vector.broadcast %cst_57 : f32 to vector<39x128xf32>
    %143 = arith.addf %142, %141 : vector<39x128xf32>
    %cst_58 = arith.constant 5.000000e-01 : f32
    %144 = vector.broadcast %cst_58 : f32 to vector<39x128xf32>
    %145 = arith.mulf %144, %143 : vector<39x128xf32>
    %146 = arith.mulf %133, %145 : vector<39x128xf32>
    %c0_59 = arith.constant 0 : index
    %c0_60 = arith.constant 0 : index
    %147 = vector.load %arg11[%c0_59, %c0_60] : memref<128x64xf32, #tpu.memory_space<vmem>>, vector<128x64xf32>
    %cst_61 = arith.constant dense<0.000000e+00> : vector<39x64xf32>
    %148 = tpu.matmul %146, %147, %cst_61 {dimension_numbers = #tpu.dot_dimension_numbers<[1], [0], [0], [1], [0, 0, 1, 1], [], []>} : vector<39x128xf32>, vector<128x64xf32>, vector<39x64xf32> -> vector<39x64xf32>
    %c0_62 = arith.constant 0 : index
    %c0_63 = arith.constant 0 : index
    %149 = vector.load %arg12[%c0_62, %c0_63] : memref<1x64xf32, #tpu.memory_space<vmem>>, vector<1x64xf32>
    %150 = vector.broadcast %149 : vector<1x64xf32> to vector<39x64xf32>
    %151 = arith.addf %148, %150 : vector<39x64xf32>
    %152 = arith.addf %128, %151 : vector<39x64xf32>
    %c0_64 = arith.constant 0 : index
    %c0_65 = arith.constant 0 : index
    %153 = vector.load %arg13[%c0_64, %c0_65] : memref<1x64xf32, #tpu.memory_space<vmem>>, vector<1x64xf32>
    %c0_66 = arith.constant 0 : index
    %c0_67 = arith.constant 0 : index
    %154 = vector.load %arg14[%c0_66, %c0_67] : memref<1x64xf32, #tpu.memory_space<vmem>>, vector<1x64xf32>
    %cst_68 = arith.constant dense<0.000000e+00> : vector<39xf32>
    %155 = vector.multi_reduction <add>, %152, %cst_68 [1] : vector<39x64xf32> to vector<39xf32>
    %156 = vector.shape_cast %155 : vector<39xf32> to vector<39x1xf32>
    %cst_69 = arith.constant 6.400000e+01 : f32
    %157 = vector.broadcast %cst_69 : f32 to vector<39x1xf32>
    %158 = arith.divf %156, %157 : vector<39x1xf32>
    %159 = vector.broadcast %158 : vector<39x1xf32> to vector<39x64xf32>
    %160 = arith.subf %152, %159 : vector<39x64xf32>
    %161 = arith.mulf %160, %160 : vector<39x64xf32>
    %cst_70 = arith.constant dense<0.000000e+00> : vector<39xf32>
    %162 = vector.multi_reduction <add>, %161, %cst_70 [1] : vector<39x64xf32> to vector<39xf32>
    %163 = vector.shape_cast %162 : vector<39xf32> to vector<39x1xf32>
    %cst_71 = arith.constant 6.400000e+01 : f32
    %164 = vector.broadcast %cst_71 : f32 to vector<39x1xf32>
    %165 = arith.divf %163, %164 : vector<39x1xf32>
    %166 = vector.broadcast %158 : vector<39x1xf32> to vector<39x64xf32>
    %167 = arith.subf %152, %166 : vector<39x64xf32>
    %cst_72 = arith.constant 9.99999974E-6 : f32
    %168 = vector.broadcast %cst_72 : f32 to vector<39x1xf32>
    %169 = arith.addf %165, %168 : vector<39x1xf32>
    %170 = math.rsqrt %169 : vector<39x1xf32>
    %171 = vector.broadcast %170 : vector<39x1xf32> to vector<39x64xf32>
    %172 = arith.mulf %167, %171 : vector<39x64xf32>
    %173 = vector.broadcast %153 : vector<1x64xf32> to vector<39x64xf32>
    %174 = arith.mulf %172, %173 : vector<39x64xf32>
    %175 = vector.broadcast %154 : vector<1x64xf32> to vector<39x64xf32>
    %176 = arith.addf %174, %175 : vector<39x64xf32>
    %c0_73 = arith.constant 0 : index
    %c0_74 = arith.constant 0 : index
    %c0_75 = arith.constant 0 : index
    %177 = vector.load %arg15[%c0_73, %c0_74, %c0_75] : memref<1x39x64xf32, #tpu.memory_space<vmem>>, vector<1x39x64xf32>
    %178 = vector.shape_cast %177 : vector<1x39x64xf32> to vector<39x64xf32>
    %179 = vector.shape_cast %176 : vector<39x64xf32> to vector<1x39x64xf32>
    tpu.vector_store %arg15[%c0_73, %c0_74, %c0_75], %179 {strides = array<i32>} : memref<1x39x64xf32, #tpu.memory_space<vmem>>, vector<1x39x64xf32>,
    return
  }
  func.func @transform_0(%arg0: i32) -> (i32, i32, i32) {
    %c0_i32 = arith.constant 0 : i32
    %c0_i32_0 = arith.constant 0 : i32
    %c0_i32_1 = arith.constant 0 : i32
    return %arg0, %c0_i32, %c0_i32_0 : i32, i32, i32
  }
  func.func @transform_1(%arg0: i32) -> (i32, i32, i32) {
    %c0_i32 = arith.constant 0 : i32
    %c0_i32_0 = arith.constant 0 : i32
    %c0_i32_1 = arith.constant 0 : i32
    return %arg0, %c0_i32, %c0_i32_0 : i32, i32, i32
  }
  func.func @transform_2(%arg0: i32) -> (i32, i32) {
    %c0_i32 = arith.constant 0 : i32
    %c0_i32_0 = arith.constant 0 : i32
    %c0_i32_1 = arith.constant 0 : i32
    return %c0_i32, %c0_i32_0 : i32, i32
  }
  func.func @transform_3(%arg0: i32) -> (i32, i32) {
    %c0_i32 = arith.constant 0 : i32
    %c0_i32_0 = arith.constant 0 : i32
    %c0_i32_1 = arith.constant 0 : i32
    return %c0_i32, %c0_i32_0 : i32, i32
  }
  func.func @transform_4(%arg0: i32) -> (i32, i32) {
    %c0_i32 = arith.constant 0 : i32
    %c0_i32_0 = arith.constant 0 : i32
    %c0_i32_1 = arith.constant 0 : i32
    return %c0_i32, %c0_i32_0 : i32, i32
  }
  func.func @transform_5(%arg0: i32) -> (i32, i32) {
    %c0_i32 = arith.constant 0 : i32
    %c0_i32_0 = arith.constant 0 : i32
    %c0_i32_1 = arith.constant 0 : i32
    return %c0_i32, %c0_i32_0 : i32, i32
  }
  func.func @transform_6(%arg0: i32) -> (i32, i32) {
    %c0_i32 = arith.constant 0 : i32
    %c0_i32_0 = arith.constant 0 : i32
    %c0_i32_1 = arith.constant 0 : i32
    return %c0_i32, %c0_i32_0 : i32, i32
  }
  func.func @transform_7(%arg0: i32) -> (i32, i32) {
    %c0_i32 = arith.constant 0 : i32
    %c0_i32_0 = arith.constant 0 : i32
    %c0_i32_1 = arith.constant 0 : i32
    return %c0_i32, %c0_i32_0 : i32, i32
  }
  func.func @transform_8(%arg0: i32) -> (i32, i32) {
    %c0_i32 = arith.constant 0 : i32
    %c0_i32_0 = arith.constant 0 : i32
    %c0_i32_1 = arith.constant 0 : i32
    return %c0_i32, %c0_i32_0 : i32, i32
  }
  func.func @transform_9(%arg0: i32) -> (i32, i32) {
    %c0_i32 = arith.constant 0 : i32
    %c0_i32_0 = arith.constant 0 : i32
    %c0_i32_1 = arith.constant 0 : i32
    return %c0_i32, %c0_i32_0 : i32, i32
  }
  func.func @transform_10(%arg0: i32) -> (i32, i32) {
    %c0_i32 = arith.constant 0 : i32
    %c0_i32_0 = arith.constant 0 : i32
    %c0_i32_1 = arith.constant 0 : i32
    return %c0_i32, %c0_i32_0 : i32, i32
  }
  func.func @transform_11(%arg0: i32) -> (i32, i32) {
    %c0_i32 = arith.constant 0 : i32
    %c0_i32_0 = arith.constant 0 : i32
    %c0_i32_1 = arith.constant 0 : i32
    return %c0_i32, %c0_i32_0 : i32, i32
  }
  func.func @transform_12(%arg0: i32) -> (i32, i32) {
    %c0_i32 = arith.constant 0 : i32
    %c0_i32_0 = arith.constant 0 : i32
    %c0_i32_1 = arith.constant 0 : i32
    return %c0_i32, %c0_i32_0 : i32, i32
  }
  func.func @transform_13(%arg0: i32) -> (i32, i32) {
    %c0_i32 = arith.constant 0 : i32
    %c0_i32_0 = arith.constant 0 : i32
    %c0_i32_1 = arith.constant 0 : i32
    return %c0_i32, %c0_i32_0 : i32, i32
  }
  func.func @transform_14(%arg0: i32) -> (i32, i32, i32) {
    %c0_i32 = arith.constant 0 : i32
    %c0_i32_0 = arith.constant 0 : i32
    %c0_i32_1 = arith.constant 0 : i32
    return %arg0, %c0_i32, %c0_i32_0 : i32, i32, i32
  }
}

</mosaic_0001>

<llo_original>
// kernel: wavlm_encoder_forward.9
$region0: #{wavlm_encoder_forward.9}
  #allocation0 [shape = 'u32[]', space=smem, size = 0x4, offset = 0x4, fixed_abs, tag = 'smem constant byte address 0x4 - core index']
  #allocation1 [shape = 'u32[144,128]{1,0:T(1,128)}', space=vmem, size = 0x12000, scoped, tag = 'internal scratch']
  %s0 = inlined_call_operand.vmem [shape: f32[2,79,32], index: 0, kind: input, shape index: {}]
  %s1 = inlined_call_operand.vmem [shape: f32[1,32], index: 1, kind: input, shape index: {}]
  %s2 = inlined_call_operand.vmem [shape: f32[1,32], index: 2, kind: input, shape index: {}]
  %s3 = inlined_call_operand.vmem [shape: f32[2,79,32], index: 3, kind: output, shape index: {}]
  %s4 = sld [smem:[#allocation0]]
  $region45: #{wavlm_encoder_forward.9} parent=0
    _
  %s6 = ssub.s32 1, %s4
  %s7 = scalar_select 0, %s6, %s4
  loop: start=0, step=1, limit=4
  $region2: #{wavlm_encoder_forward.9} parent=0 // loop_pre_header
    _
  $region3: #{wavlm_encoder_forward.9} parent=0 // loop_header
    %s9 = sphi 0, %s13
    %p10 = scmp.ge.s32.totalorder %s9, 4
    %s19 = sphi 0, %s21
    %s22 = sphi 0, %s19
    %s23 = sphi 0, %s22
    %s39 = sphi 0, %s23
    %s43 = sphi 0, %s43
    %s45 = sphi 0, %s43
    %s46 = sphi 0, %s45
    %s60 = sphi 0, %s46
    %s64 = sphi 0, %s64
    %s66 = sphi 0, %s64
    %s67 = sphi 0, %s66
    %s81 = sphi 0, %s67
    %s87 = sphi 0, %s89
    %s90 = sphi 0, %s87
    %s91 = sphi 0, %s90
    %s107 = sphi 0, %s91
  $region4: #{wavlm_encoder_forward.9} parent=0 // loop_header_branch
    %12 = sbr.rel (%p10) target = $region8
  $region5: #{wavlm_encoder_forward.9} parent=0 // loop_body
    %s14 = ssub.s32 %s9, 1
    %s15 = ssub.s32 %s9, 2
    %s16 = sadd.s32 %s9, 1
    %s17 = ssub.s32 %s9, %s16
    %p18 = scmp.eq.s32.totalorder %s17, 0
    %s20 = sadd.s32 %s19, 1
    %s21 = scalar_select %p18, %s19, %s20
    %p24 = pneg %p18
    %p25 = scmp.eq.s32.totalorder %s9, 1
    %p26 = por %p24, %p25
    %p27 = scmp.ne.s32.totalorder %s19, %s22
    %p28 = scmp.eq.s32.totalorder %s9, 0
    %p29 = por %p27, %p28
    %p30 = scmp.ne.s32.totalorder %s19, %s22
    %p31 = scmp.eq.s32.totalorder %s14, 1
    %p32 = por %p30, %p31
    %p33 = scmp.ne.s32.totalorder %s22, %s23
    %p34 = scmp.eq.s32.totalorder %s14, 0
    %p35 = por %p33, %p34
    %p36 = scmp.ne.s32.totalorder %s22, %s23
    %p37 = scmp.eq.s32.totalorder %s15, 1
    %p38 = por %p36, %p37
    %p40 = scmp.ne.s32.totalorder %s23, %s39
    %p41 = scmp.eq.s32.totalorder %s15, 0
    %p42 = por %p40, %p41
    %s44 = sadd.s32 %s43, 1
    %p47 = scmp.eq.s32.totalorder %s9, 1
    %p48 = scmp.ne.s32.totalorder %s43, %s45
    %p49 = scmp.eq.s32.totalorder %s9, 0
    %p50 = por %p48, %p49
    %p51 = scmp.ne.s32.totalorder %s43, %s45
    %p52 = scmp.eq.s32.totalorder %s14, 1
    %p53 = por %p51, %p52
    %p54 = scmp.ne.s32.totalorder %s45, %s46
    %p55 = scmp.eq.s32.totalorder %s14, 0
    %p56 = por %p54, %p55
    %p57 = scmp.ne.s32.totalorder %s45, %s46
    %p58 = scmp.eq.s32.totalorder %s15, 1
    %p59 = por %p57, %p58
    %p61 = scmp.ne.s32.totalorder %s46, %s60
    %p62 = scmp.eq.s32.totalorder %s15, 0
    %p63 = por %p61, %p62
    %s65 = sadd.s32 %s64, 1
    %p68 = scmp.eq.s32.totalorder %s9, 1
    %p69 = scmp.ne.s32.totalorder %s64, %s66
    %p70 = scmp.eq.s32.totalorder %s9, 0
    %p71 = por %p69, %p70
    %p72 = scmp.ne.s32.totalorder %s64, %s66
    %p73 = scmp.eq.s32.totalorder %s14, 1
    %p74 = por %p72, %p73
    %p75 = scmp.ne.s32.totalorder %s66, %s67
    %p76 = scmp.eq.s32.totalorder %s14, 0
    %p77 = por %p75, %p76
    %p78 = scmp.ne.s32.totalorder %s66, %s67
    %p79 = scmp.eq.s32.totalorder %s15, 1
    %p80 = por %p78, %p79
    %p82 = scmp.ne.s32.totalorder %s67, %s81
    %p83 = scmp.eq.s32.totalorder %s15, 0
    %p84 = por %p82, %p83
    %s85 = ssub.s32 %s9, %s16
    %p86 = scmp.eq.s32.totalorder %s85, 0
    %s88 = sadd.s32 %s87, 1
    %s89 = scalar_select %p86, %s87, %s88
    %p92 = pneg %p86
    %p93 = scmp.eq.s32.totalorder %s9, 1
    %p94 = por %p92, %p93
    %p95 = scmp.ne.s32.totalorder %s87, %s90
    %p96 = scmp.eq.s32.totalorder %s9, 0
    %p97 = por %p95, %p96
    %p98 = scmp.ne.s32.totalorder %s87, %s90
    %p99 = scmp.eq.s32.totalorder %s14, 1
    %p100 = por %p98, %p99
    %p101 = scmp.ne.s32.totalorder %s90, %s91
    %p102 = scmp.eq.s32.totalorder %s14, 0
    %p103 = por %p101, %p102
    %p104 = scmp.ne.s32.totalorder %s90, %s91
    %p105 = scmp.eq.s32.totalorder %s15, 1
    %p106 = por %p104, %p105
    %p108 = scmp.ne.s32.totalorder %s91, %s107
    %p109 = scmp.eq.s32.totalorder %s15, 0
    %p110 = por %p108, %p109
    %p111 = scmp.le.s32.totalorder 1, %s9
    %p112 = scmp.lt.s32.totalorder %s9, 3
    %p113 = pnand %p111, %p112
    %p114 = pneg %p113
    // Predicated region
    $region9: #{wavlm_encoder_forward.9} parent=5 // pred_check
      _
    $region10: #{wavlm_encoder_forward.9} parent=5 // pred_check_branch
      %116 = sbr.rel (%p113) target = $region12
    $region11: #{wavlm_encoder_forward.9} parent=5 // pred_region
      %s117 = ssub.s32 %s9, 1
      // Predicated region
      $region13: #{wavlm_encoder_forward.9} parent=11 // pred_check
        %p118 = pneg %p56
      $region14: #{wavlm_encoder_forward.9} parent=11 // pred_check_branch
        %120 = sbr.rel (%p118) target = $region16
      $region15: #{wavlm_encoder_forward.9} parent=11 // pred_region
        _
      $region16: #{wavlm_encoder_forward.9} parent=11 // pred_fallthru
        _
      // Predicated region
      $region17: #{wavlm_encoder_forward.9} parent=11 // pred_check
        %p121 = pneg %p77
      $region18: #{wavlm_encoder_forward.9} parent=11 // pred_check_branch
        %123 = sbr.rel (%p121) target = $region20
      $region19: #{wavlm_encoder_forward.9} parent=11 // pred_region
        _
      $region20: #{wavlm_encoder_forward.9} parent=11 // pred_fallthru
        _
    $region12: #{wavlm_encoder_forward.9} parent=5 // pred_fallthru
      _
    %p124 = scmp.lt.s32.totalorder %s9, 2
    // Predicated region
    $region21: #{wavlm_encoder_forward.9} parent=5 // pred_check
      %p125 = pneg %p124
    $region22: #{wavlm_encoder_forward.9} parent=5 // pred_check_branch
      %127 = sbr.rel (%p125) target = $region24
    $region23: #{wavlm_encoder_forward.9} parent=5 // pred_region
      // Predicated region
      $region25: #{wavlm_encoder_forward.9} parent=23 // pred_check
        %p128 = pneg %p29
      $region26: #{wavlm_encoder_forward.9} parent=23 // pred_check_branch
        %130 = sbr.rel (%p128) target = $region28
      $region27: #{wavlm_encoder_forward.9} parent=23 // pred_region
        %p131 = scmp.lt.s32.totalorder %s9, 1
        %s132 = scalar_select %p131, %s9, 1
        %s133 = smul.addr %s132, 10
        %s134 = smul.addr %s133, 8
        %s135 = scalar_lea.vmem %s0, %s134
      $region28: #{wavlm_encoder_forward.9} parent=23 // pred_fallthru
        _
    $region24: #{wavlm_encoder_forward.9} parent=5 // pred_fallthru
      _
    %p136 = scmp.le.s32.totalorder 1, %s9
    %p137 = scmp.lt.s32.totalorder %s9, 3
    %p138 = pnand %p136, %p137
    %p139 = pneg %p138
    // Predicated region
    $region29: #{wavlm_encoder_forward.9} parent=5 // pred_check
      _
    $region30: #{wavlm_encoder_forward.9} parent=5 // pred_check_branch
      %141 = sbr.rel (%p138) target = $region32
    $region31: #{wavlm_encoder_forward.9} parent=5 // pred_region
      %s142 = ssub.s32 %s9, 1
      %p143 = scmp.lt.s32.totalorder %s14, 1
      %s144 = scalar_select %p143, %s14, 1
      %s145 = smul.addr %s144, 10
      %s146 = smul.addr %s145, 8
      %s147 = scalar_lea.vmem %s0, %s146
      %p148 = pneg %p35
      %p149 = pneg %p32
      %p150 = pneg %p56
      %p151 = pneg %p53
      %p152 = pneg %p77
      %p153 = pneg %p74
      %p154 = pneg %p103
      %p155 = pneg %p100
      %p156 = scmp.lt.s32.totalorder %s14, 1
      %s157 = scalar_select %p156, %s14, 1
      %s158 = smul.addr %s157, 10
      %s159 = smul.addr %s158, 8
      %s160 = scalar_lea.vmem %s3, %s159
      %p161 = scmp.lt.s32.totalorder %s14, 1
      %s162 = scalar_select %p161, %s14, 1
      %s163 = smul.addr %s162, 10
      %s164 = smul.addr %s163, 8
      %s165 = scalar_lea.vmem %s0, %s164
      %p166 = scmp.lt.s32.totalorder %s14, 1
      %s167 = scalar_select %p166, %s14, 1
      %s168 = smul.addr %s167, 10
      %s169 = smul.addr %s168, 8
      %s170 = scalar_lea.vmem %s3, %s169
      %v171 = vld [vmem:[%s165] sm:$0xff]
      %v172 = vld [vmem:[%s165 + $0x8] sm:$0xff]
      %v173 = vld [vmem:[%s165 + $0x10] sm:$0xff]
      %v174 = vld [vmem:[%s165 + $0x18] sm:$0xff]
      %v175 = vld [vmem:[%s165 + $0x20] sm:$0xff]
      %v176 = vld [vmem:[%s165 + $0x28] sm:$0xff]
      %v177 = vld [vmem:[%s165 + $0x30] sm:$0xff]
      %v178 = vld [vmem:[%s165 + $0x38] sm:$0xff]
      %v179 = vld [vmem:[%s165 + $0x40] sm:$0xff]
      %v180 = vld [vmem:[%s165 + $0x48] sm:$0x7f]
      %vm181 = vcmask 261120
      %v182 = vsel %vm181, %v171, 0.0
      %v183 = vsel %vm181, %v172, 0.0
      %v184 = vadd.f32 %v182, %v183
      %v185 = vsel %vm181, %v173, 0.0
      %v186 = vadd.f32 %v184, %v185
      %v187 = vsel %vm181, %v174, 0.0
      %v188 = vadd.f32 %v186, %v187
      %v189 = vsel %vm181, %v175, 0.0
      %v190 = vadd.f32 %v188, %v189
      %v191 = vsel %vm181, %v176, 0.0
      %v192 = vadd.f32 %v190, %v191
      %v193 = vsel %vm181, %v177, 0.0
      %v194 = vadd.f32 %v192, %v193
      %v195 = vsel %vm181, %v178, 0.0
      %v196 = vadd.f32 %v194, %v195
      %v197 = vsel %vm181, %v179, 0.0
      %v198 = vadd.f32 %v196, %v197
      %vm199 = vcmask 260096
      %v200 = vsel %vm199, %v180, 0.0
      %v201 = vadd.f32 %v198, %v200
      %v202 = vrot.slane %v201, 4
      %v203 = vadd.f32 %v201, %v202
      %v204 = vrot.slane %v203, 2
      %v205 = vadd.f32 %v203, %v204
      %v206 = vrot.slane %v205, 1
      %v207 = vadd.f32 %v205, %v206
      %v208 = vrcp.pop 79.0
      %v209 = vmul.f32 %v207, %v208
      %v210 = vsub.f32 %v171, %v209
      %v211 = vsub.f32 %v172, %v209
      %v212 = vsub.f32 %v173, %v209
      %v213 = vsub.f32 %v174, %v209
      %v214 = vsub.f32 %v175, %v209
      %v215 = vsub.f32 %v176, %v209
      %v216 = vsub.f32 %v177, %v209
      %v217 = vsub.f32 %v178, %v209
      %v218 = vsub.f32 %v179, %v209
      %v219 = vsub.f32 %v180, %v209
      %v220 = vmul.f32 %v210, %v210
      %v221 = vmul.f32 %v211, %v211
      %v222 = vmul.f32 %v212, %v212
      %v223 = vmul.f32 %v213, %v213
      %v224 = vmul.f32 %v214, %v214
      %v225 = vmul.f32 %v215, %v215
      %v226 = vmul.f32 %v216, %v216
      %v227 = vmul.f32 %v217, %v217
      %v228 = vmul.f32 %v218, %v218
      %v229 = vmul.f32 %v219, %v219
      %v230 = vsel %vm181, %v220, 0.0
      %v231 = vsel %vm181, %v221, 0.0
      %v232 = vadd.f32 %v230, %v231
      %v233 = vsel %vm181, %v222, 0.0
      %v234 = vadd.f32 %v232, %v233
      %v235 = vsel %vm181, %v223, 0.0
      %v236 = vadd.f32 %v234, %v235
      %v237 = vsel %vm181, %v224, 0.0
      %v238 = vadd.f32 %v236, %v237
      %v239 = vsel %vm181, %v225, 0.0
      %v240 = vadd.f32 %v238, %v239
      %v241 = vsel %vm181, %v226, 0.0
      %v242 = vadd.f32 %v240, %v241
      %v243 = vsel %vm181, %v227, 0.0
      %v244 = vadd.f32 %v242, %v243
      %v245 = vsel %vm181, %v228, 0.0
      %v246 = vadd.f32 %v244, %v245
      %v247 = vsel %vm199, %v229, 0.0
      %v248 = vadd.f32 %v246, %v247
      %v249 = vrot.slane %v248, 4
      %v250 = vadd.f32 %v248, %v249
      %v251 = vrot.slane %v250, 2
      %v252 = vadd.f32 %v250, %v251
      %v253 = vrot.slane %v252, 1
      %v254 = vadd.f32 %v252, %v253
      %v255 = vmul.f32 %v254, %v208
      %v256 = vadd.f32 %v255, 1e-05
      %v257 = vrsqrt.pop %v256
      %v258 = vmul.f32 %v210, %v257
      %v259 = vmul.f32 %v211, %v257
      %v260 = vmul.f32 %v212, %v257
      %v261 = vmul.f32 %v213, %v257
      %v262 = vmul.f32 %v214, %v257
      %v263 = vmul.f32 %v215, %v257
      %v264 = vmul.f32 %v216, %v257
      %v265 = vmul.f32 %v217, %v257
      %v266 = vmul.f32 %v218, %v257
      %v267 = vmul.f32 %v219, %v257
      %v268 = vld [vmem:[%s1] sm:$0x1]
      %v270 = vlaneseq
      %v271 = vshrl.u32 %v270, 7
      %v272 = vsub.s32 0, %v271
      %v273 = vrot.slane %v268, %v272
      %v275 = vmul.f32 %v258, %v273
      %v276 = vmul.f32 %v259, %v273
      %v277 = vmul.f32 %v260, %v273
      %v278 = vmul.f32 %v261, %v273
      %v279 = vmul.f32 %v262, %v273
      %v280 = vmul.f32 %v263, %v273
      %v281 = vmul.f32 %v264, %v273
      %v282 = vmul.f32 %v265, %v273
      %v283 = vmul.f32 %v266, %v273
      %v284 = vmul.f32 %v267, %v273
      %v285 = vld [vmem:[%s2] sm:$0x1]
      %v287 = vlaneseq
      %v288 = vshrl.u32 %v287, 7
      %v289 = vsub.s32 0, %v288
      %v290 = vrot.slane %v285, %v289
      %v292 = vadd.f32 %v275, %v290
      %v293 = vadd.f32 %v276, %v290
      %v294 = vadd.f32 %v277, %v290
      %v295 = vadd.f32 %v278, %v290
      %v296 = vadd.f32 %v279, %v290
      %v297 = vadd.f32 %v280, %v290
      %v298 = vadd.f32 %v281, %v290
      %v299 = vadd.f32 %v282, %v290
      %v300 = vadd.f32 %v283, %v290
      %v301 = vadd.f32 %v284, %v290
      %v302 = vmul.f32 %v292, %v292
      %v303 = vmul.f32 %v293, %v293
      %v304 = vmul.f32 %v294, %v294
      %v305 = vmul.f32 %v295, %v295
      %v306 = vmul.f32 %v296, %v296
      %v307 = vmul.f32 %v297, %v297
      %v308 = vmul.f32 %v298, %v298
      %v309 = vmul.f32 %v299, %v299
      %v310 = vmul.f32 %v300, %v300
      %v311 = vmul.f32 %v301, %v301
      %v312 = vmul.f32 %v292, %v302
      %v313 = vmul.f32 %v293, %v303
      %v314 = vmul.f32 %v294, %v304
      %v315 = vmul.f32 %v295, %v305
      %v316 = vmul.f32 %v296, %v306
      %v317 = vmul.f32 %v297, %v307
      %v318 = vmul.f32 %v298, %v308
      %v319 = vmul.f32 %v299, %v309
      %v320 = vmul.f32 %v300, %v310
      %v321 = vmul.f32 %v301, %v311
      %v322 = vmul.f32 %v312, 0.044715
      %v323 = vmul.f32 %v313, 0.044715
      %v324 = vmul.f32 %v314, 0.044715
      %v325 = vmul.f32 %v315, 0.044715
      %v326 = vmul.f32 %v316, 0.044715
      %v327 = vmul.f32 %v317, 0.044715
      %v328 = vmul.f32 %v318, 0.044715
      %v329 = vmul.f32 %v319, 0.044715
      %v330 = vmul.f32 %v320, 0.044715
      %v331 = vmul.f32 %v321, 0.044715
      %v332 = vadd.f32 %v292, %v322
      %v333 = vadd.f32 %v293, %v323
      %v334 = vadd.f32 %v294, %v324
      %v335 = vadd.f32 %v295, %v325
      %v336 = vadd.f32 %v296, %v326
      %v337 = vadd.f32 %v297, %v327
      %v338 = vadd.f32 %v298, %v328
      %v339 = vadd.f32 %v299, %v329
      %v340 = vadd.f32 %v300, %v330
      %v341 = vadd.f32 %v301, %v331
      %v342 = vmul.f32 %v332, 0.7978846
      %v343 = vmul.f32 %v333, 0.7978846
      %v344 = vmul.f32 %v334, 0.7978846
      %v345 = vmul.f32 %v335, 0.7978846
      %v346 = vmul.f32 %v336, 0.7978846
      %v347 = vmul.f32 %v337, 0.7978846
      %v348 = vmul.f32 %v338, 0.7978846
      %v349 = vmul.f32 %v339, 0.7978846
      %v350 = vmul.f32 %v340, 0.7978846
      %v351 = vmul.f32 %v341, 0.7978846
      %v352 = vtanh.pop %v342
      %v353 = vtanh.pop %v343
      %v354 = vtanh.pop %v344
      %v355 = vtanh.pop %v345
      %v356 = vtanh.pop %v346
      %v357 = vtanh.pop %v347
      %v358 = vtanh.pop %v348
      %v359 = vtanh.pop %v349
      %v360 = vtanh.pop %v350
      %v361 = vtanh.pop %v351
      %v362 = vadd.f32 %v352, 1.0
      %v363 = vadd.f32 %v353, 1.0
      %v364 = vadd.f32 %v354, 1.0
      %v365 = vadd.f32 %v355, 1.0
      %v366 = vadd.f32 %v356, 1.0
      %v367 = vadd.f32 %v357, 1.0
      %v368 = vadd.f32 %v358, 1.0
      %v369 = vadd.f32 %v359, 1.0
      %v370 = vadd.f32 %v360, 1.0
      %v371 = vadd.f32 %v361, 1.0
      %v372 = vmul.f32 %v362, 0.5
      %v373 = vmul.f32 %v363, 0.5
      %v374 = vmul.f32 %v364, 0.5
      %v375 = vmul.f32 %v365, 0.5
      %v376 = vmul.f32 %v366, 0.5
      %v377 = vmul.f32 %v367, 0.5
      %v378 = vmul.f32 %v368, 0.5
      %v379 = vmul.f32 %v369, 0.5
      %v380 = vmul.f32 %v370, 0.5
      %v381 = vmul.f32 %v371, 0.5
      %v382 = vmul.f32 %v292, %v372
      %v383 = vmul.f32 %v293, %v373
      %v384 = vmul.f32 %v294, %v374
      %v385 = vmul.f32 %v295, %v375
      %v386 = vmul.f32 %v296, %v376
      %v387 = vmul.f32 %v297, %v377
      %v388 = vmul.f32 %v298, %v378
      %v389 = vmul.f32 %v299, %v379
      %v390 = vmul.f32 %v300, %v380
      %v391 = vmul.f32 %v301, %v381
      %392 = vst.msk [vmem:[%s170] sm:$0xff] %vm181, %v382
      %393 = vst.msk [vmem:[%s170 + $0x8] sm:$0xff] %vm181, %v383
      %394 = vst.msk [vmem:[%s170 + $0x10] sm:$0xff] %vm181, %v384
      %395 = vst.msk [vmem:[%s170 + $0x18] sm:$0xff] %vm181, %v385
      %396 = vst.msk [vmem:[%s170 + $0x20] sm:$0xff] %vm181, %v386
      %397 = vst.msk [vmem:[%s170 + $0x28] sm:$0xff] %vm181, %v387
      %398 = vst.msk [vmem:[%s170 + $0x30] sm:$0xff] %vm181, %v388
      %399 = vst.msk [vmem:[%s170 + $0x38] sm:$0xff] %vm181, %v389
      %400 = vst.msk [vmem:[%s170 + $0x40] sm:$0xff] %vm181, %v390
      %401 = vst.msk [vmem:[%s170 + $0x48] sm:$0x7f] %vm199, %v391
      %p402 = scmp.lt.s32.totalorder %s14, 1
      %s403 = scalar_select %p402, %s14, 1
      %s404 = smul.addr %s403, 10
      %s405 = smul.addr %s404, 8
      %s406 = scalar_lea.vmem %s3, %s405
      // Predicated region
      $region33: #{wavlm_encoder_forward.9} parent=31 // pred_check
        %p407 = pneg %p100
      $region34: #{wavlm_encoder_forward.9} parent=31 // pred_check_branch
        %409 = sbr.rel (%p407) target = $region36
      $region35: #{wavlm_encoder_forward.9} parent=31 // pred_region
        _
      $region36: #{wavlm_encoder_forward.9} parent=31 // pred_fallthru
        _
    $region32: #{wavlm_encoder_forward.9} parent=5 // pred_fallthru
      _
    %p410 = scmp.le.s32.totalorder 2, %s9
    // Predicated region
    $region37: #{wavlm_encoder_forward.9} parent=5 // pred_check
      %p411 = pneg %p410
    $region38: #{wavlm_encoder_forward.9} parent=5 // pred_check_branch
      %413 = sbr.rel (%p411) target = $region40
    $region39: #{wavlm_encoder_forward.9} parent=5 // pred_region
      %s414 = ssub.s32 %s9, 2
      // Predicated region
      $region41: #{wavlm_encoder_forward.9} parent=39 // pred_check
        %p415 = pneg %p106
      $region42: #{wavlm_encoder_forward.9} parent=39 // pred_check_branch
        %417 = sbr.rel (%p415) target = $region44
      $region43: #{wavlm_encoder_forward.9} parent=39 // pred_region
        %p418 = scmp.lt.s32.totalorder %s15, 1
        %s419 = scalar_select %p418, %s15, 1
        %s420 = smul.addr %s419, 10
        %s421 = smul.addr %s420, 8
        %s422 = scalar_lea.vmem %s3, %s421
      $region44: #{wavlm_encoder_forward.9} parent=39 // pred_fallthru
        _
    $region40: #{wavlm_encoder_forward.9} parent=5 // pred_fallthru
      _
  $region6: #{wavlm_encoder_forward.9} parent=0 // loop_footer
    %s13 = sadd.s32 1, %s9
  $region7: #{wavlm_encoder_forward.9} parent=0 // loop_footer_branch
    %8 = sbr.rel target = $region3
  $region8: #{wavlm_encoder_forward.9} parent=0 // loop_exit
    _

// kernel: wavlm_encoder_forward.8
$region0: #{wavlm_encoder_forward.8}
  #allocation0 [shape = 'u32[]', space=smem, size = 0x4, offset = 0x4, fixed_abs, tag = 'smem constant byte address 0x4 - core index']
  #allocation1 [shape = 'u32[144,128]{1,0:T(1,128)}', space=vmem, size = 0x12000, scoped, tag = 'internal scratch']
  %s0 = inlined_call_operand.vmem [shape: f32[158,10], index: 0, kind: input, shape index: {}]
  %s1 = inlined_call_operand.vmem [shape: f32[10,32], index: 1, kind: input, shape index: {}]
  %s2 = inlined_call_operand.vmem [shape: f32[1,32], index: 2, kind: input, shape index: {}]
  %s3 = inlined_call_operand.vmem [shape: f32[158,32], index: 3, kind: output, shape index: {}]
  %s4 = sld [smem:[#allocation0]]
  $region22: #{wavlm_encoder_forward.8} parent=0
    _
  %s6 = ssub.s32 1, %s4
  %s7 = scalar_select 0, %s6, %s4
  // Predicated region
  $region2: #{wavlm_encoder_forward.8} parent=0 // pred_check
    _
  $region3: #{wavlm_encoder_forward.8} parent=0 // pred_check_branch
    %9 = sbr.rel (0) target = $region5
  $region4: #{wavlm_encoder_forward.8} parent=0 // pred_region
    _
  $region5: #{wavlm_encoder_forward.8} parent=0 // pred_fallthru
    _
  // Predicated region
  $region6: #{wavlm_encoder_forward.8} parent=0 // pred_check
    _
  $region7: #{wavlm_encoder_forward.8} parent=0 // pred_check_branch
    %11 = sbr.rel (0) target = $region9
  $region8: #{wavlm_encoder_forward.8} parent=0 // pred_region
    _
  $region9: #{wavlm_encoder_forward.8} parent=0 // pred_fallthru
    _
  // Predicated region
  $region10: #{wavlm_encoder_forward.8} parent=0 // pred_check
    _
  $region11: #{wavlm_encoder_forward.8} parent=0 // pred_check_branch
    %13 = sbr.rel (0) target = $region13
  $region12: #{wavlm_encoder_forward.8} parent=0 // pred_region
    _
  $region13: #{wavlm_encoder_forward.8} parent=0 // pred_fallthru
    _
  %v14 = vld [vmem:[%s0] sm:$0xff]
  %v15 = vld [vmem:[%s0 + $0x8] sm:$0xff]
  %v16 = vld [vmem:[%s0 + $0x10] sm:$0xff]
  %v17 = vld [vmem:[%s0 + $0x18] sm:$0xff]
  %v18 = vld [vmem:[%s0 + $0x20] sm:$0xff]
  %v19 = vld [vmem:[%s0 + $0x28] sm:$0xff]
  %v20 = vld [vmem:[%s0 + $0x30] sm:$0xff]
  %v21 = vld [vmem:[%s0 + $0x38] sm:$0xff]
  %v22 = vld [vmem:[%s0 + $0x40] sm:$0xff]
  %v23 = vld [vmem:[%s0 + $0x48] sm:$0xff]
  %v24 = vld [vmem:[%s0 + $0x50] sm:$0xff]
  %v25 = vld [vmem:[%s0 + $0x58] sm:$0xff]
  %v26 = vld [vmem:[%s0 + $0x60] sm:$0xff]
  %v27 = vld [vmem:[%s0 + $0x68] sm:$0xff]
  %v28 = vld [vmem:[%s0 + $0x70] sm:$0xff]
  %v29 = vld [vmem:[%s0 + $0x78] sm:$0xff]
  %v30 = vld [vmem:[%s0 + $0x80] sm:$0xff]
  %v31 = vld [vmem:[%s0 + $0x88] sm:$0xff]
  %v32 = vld [vmem:[%s0 + $0x90] sm:$0xff]
  %v33 = vld [vmem:[%s0 + $0x98] sm:$0x3f]
  %v34 = vld [vmem:[%s1] sm:$0xff]
  %v35 = vld [vmem:[%s1 + $0x8] sm:$0x3]
  %v36 = vld [vmem:[%s2] sm:$0x1]
  %v38 = vlaneseq
  %v39 = vshrl.u32 %v38, 7
  %v40 = vsub.s32 0, %v39
  %v41 = vrot.slane %v36, %v40
  %vm43 = vcmask 80896
  %v45 = vsel %vm43, %v14, 0
  %v48 = vsel %vm43, %v15, 0
  %v51 = vsel %vm43, %v16, 0
  %v54 = vsel %vm43, %v17, 0
  %v57 = vsel %vm43, %v18, 0
  %v60 = vsel %vm43, %v19, 0
  %v63 = vsel %vm43, %v20, 0
  %v66 = vsel %vm43, %v21, 0
  %v69 = vsel %vm43, %v22, 0
  %v72 = vsel %vm43, %v23, 0
  %v75 = vsel %vm43, %v24, 0
  %v78 = vsel %vm43, %v25, 0
  %v81 = vsel %vm43, %v26, 0
  %v84 = vsel %vm43, %v27, 0
  %v87 = vsel %vm43, %v28, 0
  %v90 = vsel %vm43, %v29, 0
  %v93 = vsel %vm43, %v30, 0
  %v96 = vsel %vm43, %v31, 0
  %v99 = vsel %vm43, %v32, 0
  %v102 = vsel %vm43, %v33, 0
  %vm104 = vcmask 1041408
  %v106 = vsel %vm104, %v35, 0
  %108 = vmatprep.subr.mxu0 0.0
  %109 = vmatpush1.msra.mxu0 %v34
  %110 = vmatprep.subr.mxu0 0.0
  %111 = vmatpush1.msra.mxu0 %v106
  %112 = vmatprep.subr.mxu0 0.0
  %113 = vmatpush1.msra.mxu0 0.0
  %114 = vmatprep.subr.mxu0 0.0
  %115 = vmatpush1.msra.mxu0 0.0
  %116 = vmatprep.subr.mxu0 0.0
  %117 = vmatpush1.msra.mxu0 0.0
  %118 = vmatprep.subr.mxu0 0.0
  %119 = vmatpush1.msra.mxu0 0.0
  %120 = vmatprep.subr.mxu0 0.0
  %121 = vmatpush1.msra.mxu0 0.0
  %122 = vmatprep.subr.mxu0 0.0
  %123 = vmatpush1.msra.mxu0 0.0
  %124 = vmatprep.subr.mxu0 0.0
  %125 = vmatpush1.msra.mxu0 0.0
  %126 = vmatprep.subr.mxu0 0.0
  %127 = vmatpush1.msra.mxu0 0.0
  %128 = vmatprep.subr.mxu0 0.0
  %129 = vmatpush1.msra.mxu0 0.0
  %130 = vmatprep.subr.mxu0 0.0
  %131 = vmatpush1.msra.mxu0 0.0
  %132 = vmatprep.subr.mxu0 0.0
  %133 = vmatpush1.msra.mxu0 0.0
  %134 = vmatprep.subr.mxu0 0.0
  %135 = vmatpush1.msra.mxu0 0.0
  %136 = vmatprep.subr.mxu0 0.0
  %137 = vmatpush1.msra.mxu0 0.0
  %138 = vmatprep.subr.mxu0 0.0
  %139 = vmatpush1.msra.mxu0 0.0
  %140 = vmatprep.subr.mxu0 0.0
  %141 = vmatpush1.msra.mxu0 0.0
  %142 = vmatprep.subr.mxu0 0.0
  %143 = vmatpush1.msra.mxu0 0.0
  %144 = vmatprep.subr.mxu0 0.0
  %145 = vmatpush1.msra.mxu0 0.0
  %146 = vmatprep.subr.mxu0 0.0
  %147 = vmatpush1.msra.mxu0 0.0
  %148 = vmatprep.subr.mxu0 0.0
  %149 = vmatpush1.msra.mxu0 0.0
  %150 = vmatprep.subr.mxu0 0.0
  %151 = vmatpush1.msra.mxu0 0.0
  %152 = vmatprep.subr.mxu0 0.0
  %153 = vmatpush1.msra.mxu0 0.0
  %154 = vmatprep.subr.mxu0 0.0
  %155 = vmatpush1.msra.mxu0 0.0
  %156 = vmatprep.subr.mxu0 0.0
  %157 = vmatpush1.msra.mxu0 0.0
  %158 = vmatprep.subr.mxu0 0.0
  %159 = vmatpush1.msra.mxu0 0.0
  %160 = vmatprep.subr.mxu0 0.0
  %161 = vmatpush1.msra.mxu0 0.0
  %162 = vmatprep.subr.mxu0 0.0
  %163 = vmatpush1.msra.mxu0 0.0
  %164 = vmatprep.subr.mxu0 0.0
  %165 = vmatpush1.msra.mxu0 0.0
  %166 = vmatprep.subr.mxu0 0.0
  %167 = vmatpush1.msra.mxu0 0.0
  %168 = vmatprep.subr.mxu0 0.0
  %169 = vmatpush1.msra.mxu0 0.0
  %170 = vmatprep.subr.mxu0 0.0
  %171 = vmatpush1.msra.mxu0 0.0
  %172 = vmatprep.mubr.f32.mxu0 0.0
  %173 = vmatmul.mubr.f32.gmra.mrb[0].mxu0 %v45
  %v174 = vpop.f32.mrb[0].mxu0
  %v175 = vadd.f32 %v41, %v174
  %v176 = vpop.f32.mrb[0].mxu0
  %177 = vmatprep.mubr.f32.mxu0 0.0
  %178 = vmatmul.mubr.f32.gmra.mrb[0].mxu0 %v48
  %v179 = vpop.f32.mrb[0].mxu0
  %v180 = vadd.f32 %v41, %v179
  %v181 = vpop.f32.mrb[0].mxu0
  %182 = vmatprep.mubr.f32.mxu0 0.0
  %183 = vmatmul.mubr.f32.gmra.mrb[0].mxu0 %v51
  %v184 = vpop.f32.mrb[0].mxu0
  %v185 = vadd.f32 %v41, %v184
  %v186 = vpop.f32.mrb[0].mxu0
  %187 = vmatprep.mubr.f32.mxu0 0.0
  %188 = vmatmul.mubr.f32.gmra.mrb[0].mxu0 %v54
  %v189 = vpop.f32.mrb[0].mxu0
  %v190 = vadd.f32 %v41, %v189
  %v191 = vpop.f32.mrb[0].mxu0
  %192 = vmatprep.mubr.f32.mxu0 0.0
  %193 = vmatmul.mubr.f32.gmra.mrb[0].mxu0 %v57
  %v194 = vpop.f32.mrb[0].mxu0
  %v195 = vadd.f32 %v41, %v194
  %v196 = vpop.f32.mrb[0].mxu0
  %197 = vmatprep.mubr.f32.mxu0 0.0
  %198 = vmatmul.mubr.f32.gmra.mrb[0].mxu0 %v60
  %v199 = vpop.f32.mrb[0].mxu0
  %v200 = vadd.f32 %v41, %v199
  %v201 = vpop.f32.mrb[0].mxu0
  %202 = vmatprep.mubr.f32.mxu0 0.0
  %203 = vmatmul.mubr.f32.gmra.mrb[0].mxu0 %v63
  %v204 = vpop.f32.mrb[0].mxu0
  %v205 = vadd.f32 %v41, %v204
  %v206 = vpop.f32.mrb[0].mxu0
  %207 = vmatprep.mubr.f32.mxu0 0.0
  %208 = vmatmul.mubr.f32.gmra.mrb[0].mxu0 %v66
  %v209 = vpop.f32.mrb[0].mxu0
  %v210 = vadd.f32 %v41, %v209
  %v211 = vpop.f32.mrb[0].mxu0
  %212 = vmatprep.mubr.f32.mxu0 0.0
  %213 = vmatmul.mubr.f32.gmra.mrb[0].mxu0 %v69
  %v214 = vpop.f32.mrb[0].mxu0
  %v215 = vadd.f32 %v41, %v214
  %v216 = vpop.f32.mrb[0].mxu0
  %217 = vmatprep.mubr.f32.mxu0 0.0
  %218 = vmatmul.mubr.f32.gmra.mrb[0].mxu0 %v72
  %v219 = vpop.f32.mrb[0].mxu0
  %v220 = vadd.f32 %v41, %v219
  %v221 = vpop.f32.mrb[0].mxu0
  %222 = vmatprep.mubr.f32.mxu0 0.0
  %223 = vmatmul.mubr.f32.gmra.mrb[0].mxu0 %v75
  %v224 = vpop.f32.mrb[0].mxu0
  %v225 = vadd.f32 %v41, %v224
  %v226 = vpop.f32.mrb[0].mxu0
  %227 = vmatprep.mubr.f32.mxu0 0.0
  %228 = vmatmul.mubr.f32.gmra.mrb[0].mxu0 %v78
  %v229 = vpop.f32.mrb[0].mxu0
  %v230 = vadd.f32 %v41, %v229
  %v231 = vpop.f32.mrb[0].mxu0
  %232 = vmatprep.mubr.f32.mxu0 0.0
  %233 = vmatmul.mubr.f32.gmra.mrb[0].mxu0 %v81
  %v234 = vpop.f32.mrb[0].mxu0
  %v235 = vadd.f32 %v41, %v234
  %v236 = vpop.f32.mrb[0].mxu0
  %237 = vmatprep.mubr.f32.mxu0 0.0
  %238 = vmatmul.mubr.f32.gmra.mrb[0].mxu0 %v84
  %v239 = vpop.f32.mrb[0].mxu0
  %v240 = vadd.f32 %v41, %v239
  %v241 = vpop.f32.mrb[0].mxu0
  %242 = vmatprep.mubr.f32.mxu0 0.0
  %243 = vmatmul.mubr.f32.gmra.mrb[0].mxu0 %v87
  %v244 = vpop.f32.mrb[0].mxu0
  %v245 = vadd.f32 %v41, %v244
  %v246 = vpop.f32.mrb[0].mxu0
  %247 = vmatprep.mubr.f32.mxu0 0.0
  %248 = vmatmul.mubr.f32.gmra.mrb[0].mxu0 %v90
  %v249 = vpop.f32.mrb[0].mxu0
  %v250 = vadd.f32 %v41, %v249
  %v251 = vpop.f32.mrb[0].mxu0
  %252 = vmatprep.mubr.f32.mxu0 0.0
  %253 = vmatmul.mubr.f32.gmra.mrb[0].mxu0 %v93
  %v254 = vpop.f32.mrb[0].mxu0
  %v255 = vadd.f32 %v41, %v254
  %v256 = vpop.f32.mrb[0].mxu0
  %257 = vmatprep.mubr.f32.mxu0 0.0
  %258 = vmatmul.mubr.f32.gmra.mrb[0].mxu0 %v96
  %v259 = vpop.f32.mrb[0].mxu0
  %v260 = vadd.f32 %v41, %v259
  %v261 = vpop.f32.mrb[0].mxu0
  %262 = vmatprep.mubr.f32.mxu0 0.0
  %263 = vmatmul.mubr.f32.gmra.mrb[0].mxu0 %v99
  %v264 = vpop.f32.mrb[0].mxu0
  %v265 = vadd.f32 %v41, %v264
  %v266 = vpop.f32.mrb[0].mxu0
  %267 = vmatprep.mubr.f32.mxu0 0.0
  %268 = vmatmul.mubr.f32.gmra.mrb[0].mxu0 %v102
  %v269 = vpop.f32.mrb[0].mxu0
  %v270 = vadd.f32 %v41, %v269
  %v271 = vpop.f32.mrb[0].mxu0
  %272 = vdwg.mxu0
  %vm273 = vcmask 261120
  %274 = vst.msk [vmem:[%s3] sm:$0xff] %vm273, %v175
  %275 = vst.msk [vmem:[%s3 + $0x8] sm:$0xff] %vm273, %v180
  %276 = vst.msk [vmem:[%s3 + $0x10] sm:$0xff] %vm273, %v185
  %277 = vst.msk [vmem:[%s3 + $0x18] sm:$0xff] %vm273, %v190
  %278 = vst.msk [vmem:[%s3 + $0x20] sm:$0xff] %vm273, %v195
  %279 = vst.msk [vmem:[%s3 + $0x28] sm:$0xff] %vm273, %v200
  %280 = vst.msk [vmem:[%s3 + $0x30] sm:$0xff] %vm273, %v205
  %281 = vst.msk [vmem:[%s3 + $0x38] sm:$0xff] %vm273, %v210
  %282 = vst.msk [vmem:[%s3 + $0x40] sm:$0xff] %vm273, %v215
  %283 = vst.msk [vmem:[%s3 + $0x48] sm:$0xff] %vm273, %v220
  %284 = vst.msk [vmem:[%s3 + $0x50] sm:$0xff] %vm273, %v225
  %285 = vst.msk [vmem:[%s3 + $0x58] sm:$0xff] %vm273, %v230
  %286 = vst.msk [vmem:[%s3 + $0x60] sm:$0xff] %vm273, %v235
  %287 = vst.msk [vmem:[%s3 + $0x68] sm:$0xff] %vm273, %v240
  %288 = vst.msk [vmem:[%s3 + $0x70] sm:$0xff] %vm273, %v245
  %289 = vst.msk [vmem:[%s3 + $0x78] sm:$0xff] %vm273, %v250
  %290 = vst.msk [vmem:[%s3 + $0x80] sm:$0xff] %vm273, %v255
  %291 = vst.msk [vmem:[%s3 + $0x88] sm:$0xff] %vm273, %v260
  %292 = vst.msk [vmem:[%s3 + $0x90] sm:$0xff] %vm273, %v265
  %vm293 = vcmask 259072
  %294 = vst.msk [vmem:[%s3 + $0x98] sm:$0x3f] %vm293, %v270
  // Predicated region
  $region14: #{wavlm_encoder_forward.8} parent=0 // pred_check
    _
  $region15: #{wavlm_encoder_forward.8} parent=0 // pred_check_branch
    %296 = sbr.rel (0) target = $region17
  $region16: #{wavlm_encoder_forward.8} parent=0 // pred_region
    _
  $region17: #{wavlm_encoder_forward.8} parent=0 // pred_fallthru
    _
  // Predicated region
  $region18: #{wavlm_encoder_forward.8} parent=0 // pred_check
    _
  $region19: #{wavlm_encoder_forward.8} parent=0 // pred_check_branch
    %298 = sbr.rel (0) target = $region21
  $region20: #{wavlm_encoder_forward.8} parent=0 // pred_region
    _
  $region21: #{wavlm_encoder_forward.8} parent=0 // pred_fallthru
    _

// kernel: wavlm_encoder_forward.10
$region0: #{wavlm_encoder_forward.10}
  #allocation0 [shape = 'u32[]', space=smem, size = 0x4, offset = 0x4, fixed_abs, tag = 'smem constant byte address 0x4 - core index']
  #allocation1 [shape = 'u32[144,128]{1,0:T(1,128)}', space=vmem, size = 0x12000, scoped, tag = 'internal scratch']
  %s0 = inlined_call_operand.vmem [shape: f32[78,96], index: 0, kind: input, shape index: {}]
  %s1 = inlined_call_operand.vmem [shape: f32[96,32], index: 1, kind: input, shape index: {}]
  %s2 = inlined_call_operand.vmem [shape: f32[1,32], index: 2, kind: input, shape index: {}]
  %s3 = inlined_call_operand.vmem [shape: f32[78,32], index: 3, kind: output, shape index: {}]
  %s4 = sld [smem:[#allocation0]]
  $region22: #{wavlm_encoder_forward.10} parent=0
    _
  %s6 = ssub.s32 1, %s4
  %s7 = scalar_select 0, %s6, %s4
  // Predicated region
  $region2: #{wavlm_encoder_forward.10} parent=0 // pred_check
    _
  $region3: #{wavlm_encoder_forward.10} parent=0 // pred_check_branch
    %9 = sbr.rel (0) target = $region5
  $region4: #{wavlm_encoder_forward.10} parent=0 // pred_region
    _
  $region5: #{wavlm_encoder_forward.10} parent=0 // pred_fallthru
    _
  // Predicated region
  $region6: #{wavlm_encoder_forward.10} parent=0 // pred_check
    _
  $region7: #{wavlm_encoder_forward.10} parent=0 // pred_check_branch
    %11 = sbr.rel (0) target = $region9
  $region8: #{wavlm_encoder_forward.10} parent=0 // pred_region
    _
  $region9: #{wavlm_encoder_forward.10} parent=0 // pred_fallthru
    _
  // Predicated region
  $region10: #{wavlm_encoder_forward.10} parent=0 // pred_check
    _
  $region11: #{wavlm_encoder_forward.10} parent=0 // pred_check_branch
    %13 = sbr.rel (0) target = $region13
  $region12: #{wavlm_encoder_forward.10} parent=0 // pred_region
    _
  $region13: #{wavlm_encoder_forward.10} parent=0 // pred_fallthru
    _
  %v14 = vld [vmem:[%s0] sm:$0xff]
  %v15 = vld [vmem:[%s0 + $0x8] sm:$0xff]
  %v16 = vld [vmem:[%s0 + $0x10] sm:$0xff]
  %v17 = vld [vmem:[%s0 + $0x18] sm:$0xff]
  %v18 = vld [vmem:[%s0 + $0x20] sm:$0xff]
  %v19 = vld [vmem:[%s0 + $0x28] sm:$0xff]
  %v20 = vld [vmem:[%s0 + $0x30] sm:$0xff]
  %v21 = vld [vmem:[%s0 + $0x38] sm:$0xff]
  %v22 = vld [vmem:[%s0 + $0x40] sm:$0xff]
  %v23 = vld [vmem:[%s0 + $0x48] sm:$0x3f]
  %v24 = vld [vmem:[%s1] sm:$0xff]
  %v25 = vld [vmem:[%s1 + $0x8] sm:$0xff]
  %v26 = vld [vmem:[%s1 + $0x10] sm:$0xff]
  %v27 = vld [vmem:[%s1 + $0x18] sm:$0xff]
  %v28 = vld [vmem:[%s1 + $0x20] sm:$0xff]
  %v29 = vld [vmem:[%s1 + $0x28] sm:$0xff]
  %v30 = vld [vmem:[%s1 + $0x30] sm:$0xff]
  %v31 = vld [vmem:[%s1 + $0x38] sm:$0xff]
  %v32 = vld [vmem:[%s1 + $0x40] sm:$0xff]
  %v33 = vld [vmem:[%s1 + $0x48] sm:$0xff]
  %v34 = vld [vmem:[%s1 + $0x50] sm:$0xff]
  %v35 = vld [vmem:[%s1 + $0x58] sm:$0xff]
  %v36 = vld [vmem:[%s2] sm:$0x1]
  %v38 = vlaneseq
  %v39 = vshrl.u32 %v38, 7
  %v40 = vsub.s32 0, %v39
  %v41 = vrot.slane %v36, %v40
  %vm43 = vcmask 785408
  %v45 = vsel %vm43, %v14, 0
  %v48 = vsel %vm43, %v15, 0
  %v51 = vsel %vm43, %v16, 0
  %v54 = vsel %vm43, %v17, 0
  %v57 = vsel %vm43, %v18, 0
  %v60 = vsel %vm43, %v19, 0
  %v63 = vsel %vm43, %v20, 0
  %v66 = vsel %vm43, %v21, 0
  %v69 = vsel %vm43, %v22, 0
  %v72 = vsel %vm43, %v23, 0
  %74 = vmatprep.subr.mxu0 0.0
  %75 = vmatpush1.msra.mxu0 %v24
  %76 = vmatprep.subr.mxu0 0.0
  %77 = vmatpush1.msra.mxu0 %v25
  %78 = vmatprep.subr.mxu0 0.0
  %79 = vmatpush1.msra.mxu0 %v26
  %80 = vmatprep.subr.mxu0 0.0
  %81 = vmatpush1.msra.mxu0 %v27
  %82 = vmatprep.subr.mxu0 0.0
  %83 = vmatpush1.msra.mxu0 %v28
  %84 = vmatprep.subr.mxu0 0.0
  %85 = vmatpush1.msra.mxu0 %v29
  %86 = vmatprep.subr.mxu0 0.0
  %87 = vmatpush1.msra.mxu0 %v30
  %88 = vmatprep.subr.mxu0 0.0
  %89 = vmatpush1.msra.mxu0 %v31
  %90 = vmatprep.subr.mxu0 0.0
  %91 = vmatpush1.msra.mxu0 %v32
  %92 = vmatprep.subr.mxu0 0.0
  %93 = vmatpush1.msra.mxu0 %v33
  %94 = vmatprep.subr.mxu0 0.0
  %95 = vmatpush1.msra.mxu0 %v34
  %96 = vmatprep.subr.mxu0 0.0
  %97 = vmatpush1.msra.mxu0 %v35
  %98 = vmatprep.subr.mxu0 0.0
  %99 = vmatpush1.msra.mxu0 0.0
  %100 = vmatprep.subr.mxu0 0.0
  %101 = vmatpush1.msra.mxu0 0.0
  %102 = vmatprep.subr.mxu0 0.0
  %103 = vmatpush1.msra.mxu0 0.0
  %104 = vmatprep.subr.mxu0 0.0
  %105 = vmatpush1.msra.mxu0 0.0
  %106 = vmatprep.subr.mxu0 0.0
  %107 = vmatpush1.msra.mxu0 0.0
  %108 = vmatprep.subr.mxu0 0.0
  %109 = vmatpush1.msra.mxu0 0.0
  %110 = vmatprep.subr.mxu0 0.0
  %111 = vmatpush1.msra.mxu0 0.0
  %112 = vmatprep.subr.mxu0 0.0
  %113 = vmatpush1.msra.mxu0 0.0
  %114 = vmatprep.subr.mxu0 0.0
  %115 = vmatpush1.msra.mxu0 0.0
  %116 = vmatprep.subr.mxu0 0.0
  %117 = vmatpush1.msra.mxu0 0.0
  %118 = vmatprep.subr.mxu0 0.0
  %119 = vmatpush1.msra.mxu0 0.0
  %120 = vmatprep.subr.mxu0 0.0
  %121 = vmatpush1.msra.mxu0 0.0
  %122 = vmatprep.subr.mxu0 0.0
  %123 = vmatpush1.msra.mxu0 0.0
  %124 = vmatprep.subr.mxu0 0.0
  %125 = vmatpush1.msra.mxu0 0.0
  %126 = vmatprep.subr.mxu0 0.0
  %127 = vmatpush1.msra.mxu0 0.0
  %128 = vmatprep.subr.mxu0 0.0
  %129 = vmatpush1.msra.mxu0 0.0
  %130 = vmatprep.subr.mxu0 0.0
  %131 = vmatpush1.msra.mxu0 0.0
  %132 = vmatprep.subr.mxu0 0.0
  %133 = vmatpush1.msra.mxu0 0.0
  %134 = vmatprep.subr.mxu0 0.0
  %135 = vmatpush1.msra.mxu0 0.0
  %136 = vmatprep.subr.mxu0 0.0
  %137 = vmatpush1.msra.mxu0 0.0
  %138 = vmatprep.mubr.f32.mxu0 0.0
  %139 = vmatmul.mubr.f32.gmra.mrb[0].mxu0 %v45
  %v140 = vpop.f32.mrb[0].mxu0
  %v141 = vadd.f32 %v41, %v140
  %v142 = vpop.f32.mrb[0].mxu0
  %143 = vmatprep.mubr.f32.mxu0 0.0
  %144 = vmatmul.mubr.f32.gmra.mrb[0].mxu0 %v48
  %v145 = vpop.f32.mrb[0].mxu0
  %v146 = vadd.f32 %v41, %v145
  %v147 = vpop.f32.mrb[0].mxu0
  %148 = vmatprep.mubr.f32.mxu0 0.0
  %149 = vmatmul.mubr.f32.gmra.mrb[0].mxu0 %v51
  %v150 = vpop.f32.mrb[0].mxu0
  %v151 = vadd.f32 %v41, %v150
  %v152 = vpop.f32.mrb[0].mxu0
  %153 = vmatprep.mubr.f32.mxu0 0.0
  %154 = vmatmul.mubr.f32.gmra.mrb[0].mxu0 %v54
  %v155 = vpop.f32.mrb[0].mxu0
  %v156 = vadd.f32 %v41, %v155
  %v157 = vpop.f32.mrb[0].mxu0
  %158 = vmatprep.mubr.f32.mxu0 0.0
  %159 = vmatmul.mubr.f32.gmra.mrb[0].mxu0 %v57
  %v160 = vpop.f32.mrb[0].mxu0
  %v161 = vadd.f32 %v41, %v160
  %v162 = vpop.f32.mrb[0].mxu0
  %163 = vmatprep.mubr.f32.mxu0 0.0
  %164 = vmatmul.mubr.f32.gmra.mrb[0].mxu0 %v60
  %v165 = vpop.f32.mrb[0].mxu0
  %v166 = vadd.f32 %v41, %v165
  %v167 = vpop.f32.mrb[0].mxu0
  %168 = vmatprep.mubr.f32.mxu0 0.0
  %169 = vmatmul.mubr.f32.gmra.mrb[0].mxu0 %v63
  %v170 = vpop.f32.mrb[0].mxu0
  %v171 = vadd.f32 %v41, %v170
  %v172 = vpop.f32.mrb[0].mxu0
  %173 = vmatprep.mubr.f32.mxu0 0.0
  %174 = vmatmul.mubr.f32.gmra.mrb[0].mxu0 %v66
  %v175 = vpop.f32.mrb[0].mxu0
  %v176 = vadd.f32 %v41, %v175
  %v177 = vpop.f32.mrb[0].mxu0
  %178 = vmatprep.mubr.f32.mxu0 0.0
  %179 = vmatmul.mubr.f32.gmra.mrb[0].mxu0 %v69
  %v180 = vpop.f32.mrb[0].mxu0
  %v181 = vadd.f32 %v41, %v180
  %v182 = vpop.f32.mrb[0].mxu0
  %183 = vmatprep.mubr.f32.mxu0 0.0
  %184 = vmatmul.mubr.f32.gmra.mrb[0].mxu0 %v72
  %v185 = vpop.f32.mrb[0].mxu0
  %v186 = vadd.f32 %v41, %v185
  %v187 = vpop.f32.mrb[0].mxu0
  %188 = vdwg.mxu0
  %v189 = vmul.f32 %v141, %v141
  %v190 = vmul.f32 %v146, %v146
  %v191 = vmul.f32 %v151, %v151
  %v192 = vmul.f32 %v156, %v156
  %v193 = vmul.f32 %v161, %v161
  %v194 = vmul.f32 %v166, %v166
  %v195 = vmul.f32 %v171, %v171
  %v196 = vmul.f32 %v176, %v176
  %v197 = vmul.f32 %v181, %v181
  %v198 = vmul.f32 %v186, %v186
  %v199 = vmul.f32 %v141, %v189
  %v200 = vmul.f32 %v146, %v190
  %v201 = vmul.f32 %v151, %v191
  %v202 = vmul.f32 %v156, %v192
  %v203 = vmul.f32 %v161, %v193
  %v204 = vmul.f32 %v166, %v194
  %v205 = vmul.f32 %v171, %v195
  %v206 = vmul.f32 %v176, %v196
  %v207 = vmul.f32 %v181, %v197
  %v208 = vmul.f32 %v186, %v198
  %v209 = vmul.f32 %v199, 0.044715
  %v210 = vmul.f32 %v200, 0.044715
  %v211 = vmul.f32 %v201, 0.044715
  %v212 = vmul.f32 %v202, 0.044715
  %v213 = vmul.f32 %v203, 0.044715
  %v214 = vmul.f32 %v204, 0.044715
  %v215 = vmul.f32 %v205, 0.044715
  %v216 = vmul.f32 %v206, 0.044715
  %v217 = vmul.f32 %v207, 0.044715
  %v218 = vmul.f32 %v208, 0.044715
  %v219 = vadd.f32 %v141, %v209
  %v220 = vadd.f32 %v146, %v210
  %v221 = vadd.f32 %v151, %v211
  %v222 = vadd.f32 %v156, %v212
  %v223 = vadd.f32 %v161, %v213
  %v224 = vadd.f32 %v166, %v214
  %v225 = vadd.f32 %v171, %v215
  %v226 = vadd.f32 %v176, %v216
  %v227 = vadd.f32 %v181, %v217
  %v228 = vadd.f32 %v186, %v218
  %v229 = vmul.f32 %v219, 0.7978846
  %v230 = vmul.f32 %v220, 0.7978846
  %v231 = vmul.f32 %v221, 0.7978846
  %v232 = vmul.f32 %v222, 0.7978846
  %v233 = vmul.f32 %v223, 0.7978846
  %v234 = vmul.f32 %v224, 0.7978846
  %v235 = vmul.f32 %v225, 0.7978846
  %v236 = vmul.f32 %v226, 0.7978846
  %v237 = vmul.f32 %v227, 0.7978846
  %v238 = vmul.f32 %v228, 0.7978846
  %v239 = vtanh.pop %v229
  %v240 = vtanh.pop %v230
  %v241 = vtanh.pop %v231
  %v242 = vtanh.pop %v232
  %v243 = vtanh.pop %v233
  %v244 = vtanh.pop %v234
  %v245 = vtanh.pop %v235
  %v246 = vtanh.pop %v236
  %v247 = vtanh.pop %v237
  %v248 = vtanh.pop %v238
  %v249 = vadd.f32 %v239, 1.0
  %v250 = vadd.f32 %v240, 1.0
  %v251 = vadd.f32 %v241, 1.0
  %v252 = vadd.f32 %v242, 1.0
  %v253 = vadd.f32 %v243, 1.0
  %v254 = vadd.f32 %v244, 1.0
  %v255 = vadd.f32 %v245, 1.0
  %v256 = vadd.f32 %v246, 1.0
  %v257 = vadd.f32 %v247, 1.0
  %v258 = vadd.f32 %v248, 1.0
  %v259 = vmul.f32 %v249, 0.5
  %v260 = vmul.f32 %v250, 0.5
  %v261 = vmul.f32 %v251, 0.5
  %v262 = vmul.f32 %v252, 0.5
  %v263 = vmul.f32 %v253, 0.5
  %v264 = vmul.f32 %v254, 0.5
  %v265 = vmul.f32 %v255, 0.5
  %v266 = vmul.f32 %v256, 0.5
  %v267 = vmul.f32 %v257, 0.5
  %v268 = vmul.f32 %v258, 0.5
  %v269 = vmul.f32 %v141, %v259
  %v270 = vmul.f32 %v146, %v260
  %v271 = vmul.f32 %v151, %v261
  %v272 = vmul.f32 %v156, %v262
  %v273 = vmul.f32 %v161, %v263
  %v274 = vmul.f32 %v166, %v264
  %v275 = vmul.f32 %v171, %v265
  %v276 = vmul.f32 %v176, %v266
  %v277 = vmul.f32 %v181, %v267
  %v278 = vmul.f32 %v186, %v268
  %vm279 = vcmask 261120
  %280 = vst.msk [vmem:[%s3] sm:$0xff] %vm279, %v269
  %281 = vst.msk [vmem:[%s3 + $0x8] sm:$0xff] %vm279, %v270
  %282 = vst.msk [vmem:[%s3 + $0x10] sm:$0xff] %vm279, %v271
  %283 = vst.msk [vmem:[%s3 + $0x18] sm:$0xff] %vm279, %v272
  %284 = vst.msk [vmem:[%s3 + $0x20] sm:$0xff] %vm279, %v273
  %285 = vst.msk [vmem:[%s3 + $0x28] sm:$0xff] %vm279, %v274
  %286 = vst.msk [vmem:[%s3 + $0x30] sm:$0xff] %vm279, %v275
  %287 = vst.msk [vmem:[%s3 + $0x38] sm:$0xff] %vm279, %v276
  %288 = vst.msk [vmem:[%s3 + $0x40] sm:$0xff] %vm279, %v277
  %vm289 = vcmask 259072
  %290 = vst.msk [vmem:[%s3 + $0x48] sm:$0x3f] %vm289, %v278
  // Predicated region
  $region14: #{wavlm_encoder_forward.10} parent=0 // pred_check
    _
  $region15: #{wavlm_encoder_forward.10} parent=0 // pred_check_branch
    %292 = sbr.rel (0) target = $region17
  $region16: #{wavlm_encoder_forward.10} parent=0 // pred_region
    _
  $region17: #{wavlm_encoder_forward.10} parent=0 // pred_fallthru
    _
  // Predicated region
  $region18: #{wavlm_encoder_forward.10} parent=0 // pred_check
    _
  $region19: #{wavlm_encoder_forward.10} parent=0 // pred_check_branch
    %294 = sbr.rel (0) target = $region21
  $region20: #{wavlm_encoder_forward.10} parent=0 // pred_region
    _
  $region21: #{wavlm_encoder_forward.10} parent=0 // pred_fallthru
    _

// kernel: wavlm_encoder_forward.11
$region0: #{wavlm_encoder_forward.11}
  #allocation0 [shape = 'u32[]', space=smem, size = 0x4, offset = 0x4, fixed_abs, tag = 'smem constant byte address 0x4 - core index']
  #allocation1 [shape = 'u32[144,128]{1,0:T(1,128)}', space=vmem, size = 0x12000, scoped, tag = 'internal scratch']
  %s0 = inlined_call_operand.vmem [shape: f32[78,32], index: 0, kind: input, shape index: {}]
  %s1 = inlined_call_operand.vmem [shape: f32[1,32], index: 1, kind: input, shape index: {}]
  %s2 = inlined_call_operand.vmem [shape: f32[1,32], index: 2, kind: input, shape index: {}]
  %s3 = inlined_call_operand.vmem [shape: f32[32,64], index: 3, kind: input, shape index: {}]
  %s4 = inlined_call_operand.vmem [shape: f32[1,64], index: 4, kind: input, shape index: {}]
  %s5 = inlined_call_operand.vmem [shape: f32[78,64], index: 5, kind: output, shape index: {}]
  %s6 = sld [smem:[#allocation0]]
  $region30: #{wavlm_encoder_forward.11} parent=0
    _
  %s8 = ssub.s32 1, %s6
  %s9 = scalar_select 0, %s8, %s6
  // Predicated region
  $region2: #{wavlm_encoder_forward.11} parent=0 // pred_check
    _
  $region3: #{wavlm_encoder_forward.11} parent=0 // pred_check_branch
    %11 = sbr.rel (0) target = $region5
  $region4: #{wavlm_encoder_forward.11} parent=0 // pred_region
    _
  $region5: #{wavlm_encoder_forward.11} parent=0 // pred_fallthru
    _
  // Predicated region
  $region6: #{wavlm_encoder_forward.11} parent=0 // pred_check
    _
  $region7: #{wavlm_encoder_forward.11} parent=0 // pred_check_branch
    %13 = sbr.rel (0) target = $region9
  $region8: #{wavlm_encoder_forward.11} parent=0 // pred_region
    _
  $region9: #{wavlm_encoder_forward.11} parent=0 // pred_fallthru
    _
  // Predicated region
  $region10: #{wavlm_encoder_forward.11} parent=0 // pred_check
    _
  $region11: #{wavlm_encoder_forward.11} parent=0 // pred_check_branch
    %15 = sbr.rel (0) target = $region13
  $region12: #{wavlm_encoder_forward.11} parent=0 // pred_region
    _
  $region13: #{wavlm_encoder_forward.11} parent=0 // pred_fallthru
    _
  // Predicated region
  $region14: #{wavlm_encoder_forward.11} parent=0 // pred_check
    _
  $region15: #{wavlm_encoder_forward.11} parent=0 // pred_check_branch
    %17 = sbr.rel (0) target = $region17
  $region16: #{wavlm_encoder_forward.11} parent=0 // pred_region
    _
  $region17: #{wavlm_encoder_forward.11} parent=0 // pred_fallthru
    _
  // Predicated region
  $region18: #{wavlm_encoder_forward.11} parent=0 // pred_check
    _
  $region19: #{wavlm_encoder_forward.11} parent=0 // pred_check_branch
    %19 = sbr.rel (0) target = $region21
  $region20: #{wavlm_encoder_forward.11} parent=0 // pred_region
    _
  $region21: #{wavlm_encoder_forward.11} parent=0 // pred_fallthru
    _
  %v20 = vld [vmem:[%s0] sm:$0xff]
  %v21 = vld [vmem:[%s0 + $0x8] sm:$0xff]
  %v22 = vld [vmem:[%s0 + $0x10] sm:$0xff]
  %v23 = vld [vmem:[%s0 + $0x18] sm:$0xff]
  %v24 = vld [vmem:[%s0 + $0x20] sm:$0xff]
  %v25 = vld [vmem:[%s0 + $0x28] sm:$0xff]
  %v26 = vld [vmem:[%s0 + $0x30] sm:$0xff]
  %v27 = vld [vmem:[%s0 + $0x38] sm:$0xff]
  %v28 = vld [vmem:[%s0 + $0x40] sm:$0xff]
  %v29 = vld [vmem:[%s0 + $0x48] sm:$0x3f]
  %v30 = vld [vmem:[%s1] sm:$0x1]
  %v31 = vld [vmem:[%s2] sm:$0x1]
  %vm32 = vcmask 261120
  %v33 = vsel %vm32, %v20, 0.0
  %34 = vadd.xlane.f32.xlu0 %v33
  %v35 = vpop.xlane.xlu0 %34
  %v36 = vsel %vm32, %v21, 0.0
  %37 = vadd.xlane.f32.xlu0 %v36
  %v38 = vpop.xlane.xlu0 %37
  %v39 = vsel %vm32, %v22, 0.0
  %40 = vadd.xlane.f32.xlu0 %v39
  %v41 = vpop.xlane.xlu0 %40
  %v42 = vsel %vm32, %v23, 0.0
  %43 = vadd.xlane.f32.xlu0 %v42
  %v44 = vpop.xlane.xlu0 %43
  %v45 = vsel %vm32, %v24, 0.0
  %46 = vadd.xlane.f32.xlu0 %v45
  %v47 = vpop.xlane.xlu0 %46
  %v48 = vsel %vm32, %v25, 0.0
  %49 = vadd.xlane.f32.xlu0 %v48
  %v50 = vpop.xlane.xlu0 %49
  %v51 = vsel %vm32, %v26, 0.0
  %52 = vadd.xlane.f32.xlu0 %v51
  %v53 = vpop.xlane.xlu0 %52
  %v54 = vsel %vm32, %v27, 0.0
  %55 = vadd.xlane.f32.xlu0 %v54
  %v56 = vpop.xlane.xlu0 %55
  %v57 = vsel %vm32, %v28, 0.0
  %58 = vadd.xlane.f32.xlu0 %v57
  %v59 = vpop.xlane.xlu0 %58
  %vm60 = vcmask 259072
  %v61 = vsel %vm60, %v29, 0.0
  %62 = vadd.xlane.f32.xlu0 %v61
  %v63 = vpop.xlane.xlu0 %62
  %v64 = vrcp.pop 32.0
  %v65 = vmul.f32 %v35, %v64
  %v66 = vmul.f32 %v38, %v64
  %v67 = vmul.f32 %v41, %v64
  %v68 = vmul.f32 %v44, %v64
  %v69 = vmul.f32 %v47, %v64
  %v70 = vmul.f32 %v50, %v64
  %v71 = vmul.f32 %v53, %v64
  %v72 = vmul.f32 %v56, %v64
  %v73 = vmul.f32 %v59, %v64
  %v74 = vmul.f32 %v63, %v64
  %v75 = vsub.f32 %v20, %v65
  %v76 = vsub.f32 %v21, %v66
  %v77 = vsub.f32 %v22, %v67
  %v78 = vsub.f32 %v23, %v68
  %v79 = vsub.f32 %v24, %v69
  %v80 = vsub.f32 %v25, %v70
  %v81 = vsub.f32 %v26, %v71
  %v82 = vsub.f32 %v27, %v72
  %v83 = vsub.f32 %v28, %v73
  %v84 = vsub.f32 %v29, %v74
  %v85 = vmul.f32 %v75, %v75
  %v86 = vmul.f32 %v76, %v76
  %v87 = vmul.f32 %v77, %v77
  %v88 = vmul.f32 %v78, %v78
  %v89 = vmul.f32 %v79, %v79
  %v90 = vmul.f32 %v80, %v80
  %v91 = vmul.f32 %v81, %v81
  %v92 = vmul.f32 %v82, %v82
  %v93 = vmul.f32 %v83, %v83
  %v94 = vmul.f32 %v84, %v84
  %v95 = vsel %vm32, %v85, 0.0
  %96 = vadd.xlane.f32.xlu0 %v95
  %v97 = vpop.xlane.xlu0 %96
  %v98 = vsel %vm32, %v86, 0.0
  %99 = vadd.xlane.f32.xlu0 %v98
  %v100 = vpop.xlane.xlu0 %99
  %v101 = vsel %vm32, %v87, 0.0
  %102 = vadd.xlane.f32.xlu0 %v101
  %v103 = vpop.xlane.xlu0 %102
  %v104 = vsel %vm32, %v88, 0.0
  %105 = vadd.xlane.f32.xlu0 %v104
  %v106 = vpop.xlane.xlu0 %105
  %v107 = vsel %vm32, %v89, 0.0
  %108 = vadd.xlane.f32.xlu0 %v107
  %v109 = vpop.xlane.xlu0 %108
  %v110 = vsel %vm32, %v90, 0.0
  %111 = vadd.xlane.f32.xlu0 %v110
  %v112 = vpop.xlane.xlu0 %111
  %v113 = vsel %vm32, %v91, 0.0
  %114 = vadd.xlane.f32.xlu0 %v113
  %v115 = vpop.xlane.xlu0 %114
  %v116 = vsel %vm32, %v92, 0.0
  %117 = vadd.xlane.f32.xlu0 %v116
  %v118 = vpop.xlane.xlu0 %117
  %v119 = vsel %vm32, %v93, 0.0
  %120 = vadd.xlane.f32.xlu0 %v119
  %v121 = vpop.xlane.xlu0 %120
  %v122 = vsel %vm60, %v94, 0.0
  %123 = vadd.xlane.f32.xlu0 %v122
  %v124 = vpop.xlane.xlu0 %123
  %v125 = vmul.f32 %v97, %v64
  %v126 = vmul.f32 %v100, %v64
  %v127 = vmul.f32 %v103, %v64
  %v128 = vmul.f32 %v106, %v64
  %v129 = vmul.f32 %v109, %v64
  %v130 = vmul.f32 %v112, %v64
  %v131 = vmul.f32 %v115, %v64
  %v132 = vmul.f32 %v118, %v64
  %v133 = vmul.f32 %v121, %v64
  %v134 = vmul.f32 %v124, %v64
  %v135 = vadd.f32 %v125, 1e-05
  %v136 = vadd.f32 %v126, 1e-05
  %v137 = vadd.f32 %v127, 1e-05
  %v138 = vadd.f32 %v128, 1e-05
  %v139 = vadd.f32 %v129, 1e-05
  %v140 = vadd.f32 %v130, 1e-05
  %v141 = vadd.f32 %v131, 1e-05
  %v142 = vadd.f32 %v132, 1e-05
  %v143 = vadd.f32 %v133, 1e-05
  %v144 = vadd.f32 %v134, 1e-05
  %v145 = vrsqrt.pop %v135
  %v146 = vrsqrt.pop %v136
  %v147 = vrsqrt.pop %v137
  %v148 = vrsqrt.pop %v138
  %v149 = vrsqrt.pop %v139
  %v150 = vrsqrt.pop %v140
  %v151 = vrsqrt.pop %v141
  %v152 = vrsqrt.pop %v142
  %v153 = vrsqrt.pop %v143
  %v154 = vrsqrt.pop %v144
  %v155 = vmul.f32 %v75, %v145
  %v156 = vmul.f32 %v76, %v146
  %v157 = vmul.f32 %v77, %v147
  %v158 = vmul.f32 %v78, %v148
  %v159 = vmul.f32 %v79, %v149
  %v160 = vmul.f32 %v80, %v150
  %v161 = vmul.f32 %v81, %v151
  %v162 = vmul.f32 %v82, %v152
  %v163 = vmul.f32 %v83, %v153
  %v164 = vmul.f32 %v84, %v154
  %v166 = vlaneseq
  %v167 = vshrl.u32 %v166, 7
  %v168 = vsub.s32 0, %v167
  %v169 = vrot.slane %v30, %v168
  %v171 = vmul.f32 %v155, %v169
  %v172 = vmul.f32 %v156, %v169
  %v173 = vmul.f32 %v157, %v169
  %v174 = vmul.f32 %v158, %v169
  %v175 = vmul.f32 %v159, %v169
  %v176 = vmul.f32 %v160, %v169
  %v177 = vmul.f32 %v161, %v169
  %v178 = vmul.f32 %v162, %v169
  %v179 = vmul.f32 %v163, %v169
  %v180 = vmul.f32 %v164, %v169
  %v182 = vlaneseq
  %v183 = vshrl.u32 %v182, 7
  %v184 = vsub.s32 0, %v183
  %v185 = vrot.slane %v31, %v184
  %v187 = vadd.f32 %v171, %v185
  %v188 = vadd.f32 %v172, %v185
  %v189 = vadd.f32 %v173, %v185
  %v190 = vadd.f32 %v174, %v185
  %v191 = vadd.f32 %v175, %v185
  %v192 = vadd.f32 %v176, %v185
  %v193 = vadd.f32 %v177, %v185
  %v194 = vadd.f32 %v178, %v185
  %v195 = vadd.f32 %v179, %v185
  %v196 = vadd.f32 %v180, %v185
  %v197 = vld [vmem:[%s3] sm:$0xff]
  %v198 = vld [vmem:[%s3 + $0x8] sm:$0xff]
  %v199 = vld [vmem:[%s3 + $0x10] sm:$0xff]
  %v200 = vld [vmem:[%s3 + $0x18] sm:$0xff]
  %v201 = vld [vmem:[%s4] sm:$0x1]
  %v203 = vlaneseq
  %v204 = vshrl.u32 %v203, 7
  %v205 = vsub.s32 0, %v204
  %v206 = vrot.slane %v201, %v205
  %v209 = vsel %vm32, %v187, 0
  %v212 = vsel %vm32, %v188, 0
  %v215 = vsel %vm32, %v189, 0
  %v218 = vsel %vm32, %v190, 0
  %v221 = vsel %vm32, %v191, 0
  %v224 = vsel %vm32, %v192, 0
  %v227 = vsel %vm32, %v193, 0
  %v230 = vsel %vm32, %v194, 0
  %v233 = vsel %vm32, %v195, 0
  %v236 = vsel %vm32, %v196, 0
  %238 = vmatprep.subr.mxu0 0.0
  %239 = vmatpush1.msra.mxu0 %v197
  %240 = vmatprep.subr.mxu0 0.0
  %241 = vmatpush1.msra.mxu0 %v198
  %242 = vmatprep.subr.mxu0 0.0
  %243 = vmatpush1.msra.mxu0 %v199
  %244 = vmatprep.subr.mxu0 0.0
  %245 = vmatpush1.msra.mxu0 %v200
  %246 = vmatprep.subr.mxu0 0.0
  %247 = vmatpush1.msra.mxu0 0.0
  %248 = vmatprep.subr.mxu0 0.0
  %249 = vmatpush1.msra.mxu0 0.0
  %250 = vmatprep.subr.mxu0 0.0
  %251 = vmatpush1.msra.mxu0 0.0
  %252 = vmatprep.subr.mxu0 0.0
  %253 = vmatpush1.msra.mxu0 0.0
  %254 = vmatprep.subr.mxu0 0.0
  %255 = vmatpush1.msra.mxu0 0.0
  %256 = vmatprep.subr.mxu0 0.0
  %257 = vmatpush1.msra.mxu0 0.0
  %258 = vmatprep.subr.mxu0 0.0
  %259 = vmatpush1.msra.mxu0 0.0
  %260 = vmatprep.subr.mxu0 0.0
  %261 = vmatpush1.msra.mxu0 0.0
  %262 = vmatprep.subr.mxu0 0.0
  %263 = vmatpush1.msra.mxu0 0.0
  %264 = vmatprep.subr.mxu0 0.0
  %265 = vmatpush1.msra.mxu0 0.0
  %266 = vmatprep.subr.mxu0 0.0
  %267 = vmatpush1.msra.mxu0 0.0
  %268 = vmatprep.subr.mxu0 0.0
  %269 = vmatpush1.msra.mxu0 0.0
  %270 = vmatprep.subr.mxu0 0.0
  %271 = vmatpush1.msra.mxu0 0.0
  %272 = vmatprep.subr.mxu0 0.0
  %273 = vmatpush1.msra.mxu0 0.0
  %274 = vmatprep.subr.mxu0 0.0
  %275 = vmatpush1.msra.mxu0 0.0
  %276 = vmatprep.subr.mxu0 0.0
  %277 = vmatpush1.msra.mxu0 0.0
  %278 = vmatprep.subr.mxu0 0.0
  %279 = vmatpush1.msra.mxu0 0.0
  %280 = vmatprep.subr.mxu0 0.0
  %281 = vmatpush1.msra.mxu0 0.0
  %282 = vmatprep.subr.mxu0 0.0
  %283 = vmatpush1.msra.mxu0 0.0
  %284 = vmatprep.subr.mxu0 0.0
  %285 = vmatpush1.msra.mxu0 0.0
  %286 = vmatprep.subr.mxu0 0.0
  %287 = vmatpush1.msra.mxu0 0.0
  %288 = vmatprep.subr.mxu0 0.0
  %289 = vmatpush1.msra.mxu0 0.0
  %290 = vmatprep.subr.mxu0 0.0
  %291 = vmatpush1.msra.mxu0 0.0
  %292 = vmatprep.subr.mxu0 0.0
  %293 = vmatpush1.msra.mxu0 0.0
  %294 = vmatprep.subr.mxu0 0.0
  %295 = vmatpush1.msra.mxu0 0.0
  %296 = vmatprep.subr.mxu0 0.0
  %297 = vmatpush1.msra.mxu0 0.0
  %298 = vmatprep.subr.mxu0 0.0
  %299 = vmatpush1.msra.mxu0 0.0
  %300 = vmatprep.subr.mxu0 0.0
  %301 = vmatpush1.msra.mxu0 0.0
  %302 = vmatprep.mubr.f32.mxu0 0.0
  %303 = vmatmul.mubr.f32.gmra.mrb[0].mxu0 %v209
  %v304 = vpop.f32.mrb[0].mxu0
  %v305 = vadd.f32 %v206, %v304
  %v306 = vpop.f32.mrb[0].mxu0
  %307 = vmatprep.mubr.f32.mxu0 0.0
  %308 = vmatmul.mubr.f32.gmra.mrb[0].mxu0 %v212
  %v309 = vpop.f32.mrb[0].mxu0
  %v310 = vadd.f32 %v206, %v309
  %v311 = vpop.f32.mrb[0].mxu0
  %312 = vmatprep.mubr.f32.mxu0 0.0
  %313 = vmatmul.mubr.f32.gmra.mrb[0].mxu0 %v215
  %v314 = vpop.f32.mrb[0].mxu0
  %v315 = vadd.f32 %v206, %v314
  %v316 = vpop.f32.mrb[0].mxu0
  %317 = vmatprep.mubr.f32.mxu0 0.0
  %318 = vmatmul.mubr.f32.gmra.mrb[0].mxu0 %v218
  %v319 = vpop.f32.mrb[0].mxu0
  %v320 = vadd.f32 %v206, %v319
  %v321 = vpop.f32.mrb[0].mxu0
  %322 = vmatprep.mubr.f32.mxu0 0.0
  %323 = vmatmul.mubr.f32.gmra.mrb[0].mxu0 %v221
  %v324 = vpop.f32.mrb[0].mxu0
  %v325 = vadd.f32 %v206, %v324
  %v326 = vpop.f32.mrb[0].mxu0
  %327 = vmatprep.mubr.f32.mxu0 0.0
  %328 = vmatmul.mubr.f32.gmra.mrb[0].mxu0 %v224
  %v329 = vpop.f32.mrb[0].mxu0
  %v330 = vadd.f32 %v206, %v329
  %v331 = vpop.f32.mrb[0].mxu0
  %332 = vmatprep.mubr.f32.mxu0 0.0
  %333 = vmatmul.mubr.f32.gmra.mrb[0].mxu0 %v227
  %v334 = vpop.f32.mrb[0].mxu0
  %v335 = vadd.f32 %v206, %v334
  %v336 = vpop.f32.mrb[0].mxu0
  %337 = vmatprep.mubr.f32.mxu0 0.0
  %338 = vmatmul.mubr.f32.gmra.mrb[0].mxu0 %v230
  %v339 = vpop.f32.mrb[0].mxu0
  %v340 = vadd.f32 %v206, %v339
  %v341 = vpop.f32.mrb[0].mxu0
  %342 = vmatprep.mubr.f32.mxu0 0.0
  %343 = vmatmul.mubr.f32.gmra.mrb[0].mxu0 %v233
  %v344 = vpop.f32.mrb[0].mxu0
  %v345 = vadd.f32 %v206, %v344
  %v346 = vpop.f32.mrb[0].mxu0
  %347 = vmatprep.mubr.f32.mxu0 0.0
  %348 = vmatmul.mubr.f32.gmra.mrb[0].mxu0 %v236
  %v349 = vpop.f32.mrb[0].mxu0
  %v350 = vadd.f32 %v206, %v349
  %v351 = vpop.f32.mrb[0].mxu0
  %352 = vdwg.mxu0
  %vm353 = vcmask 523264
  %354 = vst.msk [vmem:[%s5] sm:$0xff] %vm353, %v305
  %355 = vst.msk [vmem:[%s5 + $0x8] sm:$0xff] %vm353, %v310
  %356 = vst.msk [vmem:[%s5 + $0x10] sm:$0xff] %vm353, %v315
  %357 = vst.msk [vmem:[%s5 + $0x18] sm:$0xff] %vm353, %v320
  %358 = vst.msk [vmem:[%s5 + $0x20] sm:$0xff] %vm353, %v325
  %359 = vst.msk [vmem:[%s5 + $0x28] sm:$0xff] %vm353, %v330
  %360 = vst.msk [vmem:[%s5 + $0x30] sm:$0xff] %vm353, %v335
  %361 = vst.msk [vmem:[%s5 + $0x38] sm:$0xff] %vm353, %v340
  %362 = vst.msk [vmem:[%s5 + $0x40] sm:$0xff] %vm353, %v345
  %vm363 = vcmask 521216
  %364 = vst.msk [vmem:[%s5 + $0x48] sm:$0x3f] %vm363, %v350
  // Predicated region
  $region22: #{wavlm_encoder_forward.11} parent=0 // pred_check
    _
  $region23: #{wavlm_encoder_forward.11} parent=0 // pred_check_branch
    %366 = sbr.rel (0) target = $region25
  $region24: #{wavlm_encoder_forward.11} parent=0 // pred_region
    _
  $region25: #{wavlm_encoder_forward.11} parent=0 // pred_fallthru
    _
  // Predicated region
  $region26: #{wavlm_encoder_forward.11} parent=0 // pred_check
    _
  $region27: #{wavlm_encoder_forward.11} parent=0 // pred_check_branch
    %368 = sbr.rel (0) target = $region29
  $region28: #{wavlm_encoder_forward.11} parent=0 // pred_region
    _
  $region29: #{wavlm_encoder_forward.11} parent=0 // pred_fallthru
    _

// kernel: wavlm_encoder_forward.12
$region0: #{wavlm_encoder_forward.12}
  #allocation0 [shape = 'u32[]', space=smem, size = 0x4, offset = 0x4, fixed_abs, tag = 'smem constant byte address 0x4 - core index']
  #allocation1 [shape = 'u32[144,128]{1,0:T(1,128)}', space=vmem, size = 0x12000, scoped, tag = 'internal scratch']
  %s0 = inlined_call_operand.vmem [shape: f32[78,320], index: 0, kind: input, shape index: {}]
  %s1 = inlined_call_operand.vmem [shape: f32[320,64], index: 1, kind: input, shape index: {}]
  %s2 = inlined_call_operand.vmem [shape: f32[1,64], index: 2, kind: input, shape index: {}]
  %s3 = inlined_call_operand.vmem [shape: f32[78,64], index: 3, kind: output, shape index: {}]
  %s4 = sld [smem:[#allocation0]]
  $region22: #{wavlm_encoder_forward.12} parent=0
    _
  %s6 = ssub.s32 1, %s4
  %s7 = scalar_select 0, %s6, %s4
  // Predicated region
  $region2: #{wavlm_encoder_forward.12} parent=0 // pred_check
    _
  $region3: #{wavlm_encoder_forward.12} parent=0 // pred_check_branch
    %9 = sbr.rel (0) target = $region5
  $region4: #{wavlm_encoder_forward.12} parent=0 // pred_region
    _
  $region5: #{wavlm_encoder_forward.12} parent=0 // pred_fallthru
    _
  // Predicated region
  $region6: #{wavlm_encoder_forward.12} parent=0 // pred_check
    _
  $region7: #{wavlm_encoder_forward.12} parent=0 // pred_check_branch
    %11 = sbr.rel (0) target = $region9
  $region8: #{wavlm_encoder_forward.12} parent=0 // pred_region
    _
  $region9: #{wavlm_encoder_forward.12} parent=0 // pred_fallthru
    _
  // Predicated region
  $region10: #{wavlm_encoder_forward.12} parent=0 // pred_check
    _
  $region11: #{wavlm_encoder_forward.12} parent=0 // pred_check_branch
    %13 = sbr.rel (0) target = $region13
  $region12: #{wavlm_encoder_forward.12} parent=0 // pred_region
    _
  $region13: #{wavlm_encoder_forward.12} parent=0 // pred_fallthru
    _
  %v14 = vld [vmem:[%s0] sm:$0xff]
  %v15 = vld [vmem:[%s0 + $0x8] sm:$0xff]
  %v16 = vld [vmem:[%s0 + $0x10] sm:$0xff]
  %v17 = vld [vmem:[%s0 + $0x18] sm:$0xff]
  %v18 = vld [vmem:[%s0 + $0x20] sm:$0xff]
  %v19 = vld [vmem:[%s0 + $0x28] sm:$0xff]
  %v20 = vld [vmem:[%s0 + $0x30] sm:$0xff]
  %v21 = vld [vmem:[%s0 + $0x38] sm:$0xff]
  %v22 = vld [vmem:[%s0 + $0x40] sm:$0xff]
  %v23 = vld [vmem:[%s0 + $0x48] sm:$0xff]
  %v24 = vld [vmem:[%s0 + $0x50] sm:$0xff]
  %v25 = vld [vmem:[%s0 + $0x58] sm:$0xff]
  %v26 = vld [vmem:[%s0 + $0x60] sm:$0xff]
  %v27 = vld [vmem:[%s0 + $0x68] sm:$0xff]
  %v28 = vld [vmem:[%s0 + $0x70] sm:$0xff]
  %v29 = vld [vmem:[%s0 + $0x78] sm:$0xff]
  %v30 = vld [vmem:[%s0 + $0x80] sm:$0xff]
  %v31 = vld [vmem:[%s0 + $0x88] sm:$0xff]
  %v32 = vld [vmem:[%s0 + $0x90] sm:$0xff]
  %v33 = vld [vmem:[%s0 + $0x98] sm:$0xff]
  %v34 = vld [vmem:[%s0 + $0xa0] sm:$0xff]
  %v35 = vld [vmem:[%s0 + $0xa8] sm:$0xff]
  %v36 = vld [vmem:[%s0 + $0xb0] sm:$0xff]
  %v37 = vld [vmem:[%s0 + $0xb8] sm:$0xff]
  %v38 = vld [vmem:[%s0 + $0xc0] sm:$0xff]
  %v39 = vld [vmem:[%s0 + $0xc8] sm:$0xff]
  %v40 = vld [vmem:[%s0 + $0xd0] sm:$0xff]
  %v41 = vld [vmem:[%s0 + $0xd8] sm:$0x3f]
  %v42 = vld [vmem:[%s0 + $0xe0] sm:$0x3f]
  %v43 = vld [vmem:[%s0 + $0xe8] sm:$0x3f]
  %v44 = vld [vmem:[%s1] sm:$0xff]
  %v45 = vld [vmem:[%s1 + $0x8] sm:$0xff]
  %v46 = vld [vmem:[%s1 + $0x10] sm:$0xff]
  %v47 = vld [vmem:[%s1 + $0x18] sm:$0xff]
  %v48 = vld [vmem:[%s1 + $0x20] sm:$0xff]
  %v49 = vld [vmem:[%s1 + $0x28] sm:$0xff]
  %v50 = vld [vmem:[%s1 + $0x30] sm:$0xff]
  %v51 = vld [vmem:[%s1 + $0x38] sm:$0xff]
  %v52 = vld [vmem:[%s1 + $0x40] sm:$0xff]
  %v53 = vld [vmem:[%s1 + $0x48] sm:$0xff]
  %v54 = vld [vmem:[%s1 + $0x50] sm:$0xff]
  %v55 = vld [vmem:[%s1 + $0x58] sm:$0xff]
  %v56 = vld [vmem:[%s1 + $0x60] sm:$0xff]
  %v57 = vld [vmem:[%s1 + $0x68] sm:$0xff]
  %v58 = vld [vmem:[%s1 + $0x70] sm:$0xff]
  %v59 = vld [vmem:[%s1 + $0x78] sm:$0xff]
  %v60 = vld [vmem:[%s1 + $0x80] sm:$0xff]
  %v61 = vld [vmem:[%s1 + $0x88] sm:$0xff]
  %v62 = vld [vmem:[%s1 + $0x90] sm:$0xff]
  %v63 = vld [vmem:[%s1 + $0x98] sm:$0xff]
  %v64 = vld [vmem:[%s1 + $0xa0] sm:$0xff]
  %v65 = vld [vmem:[%s1 + $0xa8] sm:$0xff]
  %v66 = vld [vmem:[%s1 + $0xb0] sm:$0xff]
  %v67 = vld [vmem:[%s1 + $0xb8] sm:$0xff]
  %v68 = vld [vmem:[%s1 + $0xc0] sm:$0xff]
  %v69 = vld [vmem:[%s1 + $0xc8] sm:$0xff]
  %v70 = vld [vmem:[%s1 + $0xd0] sm:$0xff]
  %v71 = vld [vmem:[%s1 + $0xd8] sm:$0xff]
  %v72 = vld [vmem:[%s1 + $0xe0] sm:$0xff]
  %v73 = vld [vmem:[%s1 + $0xe8] sm:$0xff]
  %v74 = vld [vmem:[%s1 + $0xf0] sm:$0xff]
  %v75 = vld [vmem:[%s1 + $0xf8] sm:$0xff]
  %v76 = vld [vmem:[%s1 + $0x100] sm:$0xff]
  %v77 = vld [vmem:[%s1 + $0x108] sm:$0xff]
  %v78 = vld [vmem:[%s1 + $0x110] sm:$0xff]
  %v79 = vld [vmem:[%s1 + $0x118] sm:$0xff]
  %v80 = vld [vmem:[%s1 + $0x120] sm:$0xff]
  %v81 = vld [vmem:[%s1 + $0x128] sm:$0xff]
  %v82 = vld [vmem:[%s1 + $0x130] sm:$0xff]
  %v83 = vld [vmem:[%s1 + $0x138] sm:$0xff]
  %v84 = vld [vmem:[%s2] sm:$0x1]
  %v86 = vlaneseq
  %v87 = vshrl.u32 %v86, 7
  %v88 = vsub.s32 0, %v87
  %v89 = vrot.slane %v84, %v88
  %vm91 = vcmask 523264
  %v93 = vsel %vm91, %v16, 0
  %v96 = vsel %vm91, %v19, 0
  %v99 = vsel %vm91, %v22, 0
  %v102 = vsel %vm91, %v25, 0
  %v105 = vsel %vm91, %v28, 0
  %v108 = vsel %vm91, %v31, 0
  %v111 = vsel %vm91, %v34, 0
  %v114 = vsel %vm91, %v37, 0
  %v117 = vsel %vm91, %v40, 0
  %v120 = vsel %vm91, %v43, 0
  %122 = vmatprep.subr.mxu0 0.0
  %123 = vmatpush1.msra.mxu0 %v44
  %124 = vmatprep.subr.mxu0 0.0
  %125 = vmatpush1.msra.mxu0 %v45
  %126 = vmatprep.subr.mxu0 0.0
  %127 = vmatpush1.msra.mxu0 %v46
  %128 = vmatprep.subr.mxu0 0.0
  %129 = vmatpush1.msra.mxu0 %v47
  %130 = vmatprep.subr.mxu0 0.0
  %131 = vmatpush1.msra.mxu0 %v48
  %132 = vmatprep.subr.mxu0 0.0
  %133 = vmatpush1.msra.mxu0 %v49
  %134 = vmatprep.subr.mxu0 0.0
  %135 = vmatpush1.msra.mxu0 %v50
  %136 = vmatprep.subr.mxu0 0.0
  %137 = vmatpush1.msra.mxu0 %v51
  %138 = vmatprep.subr.mxu0 0.0
  %139 = vmatpush1.msra.mxu0 %v52
  %140 = vmatprep.subr.mxu0 0.0
  %141 = vmatpush1.msra.mxu0 %v53
  %142 = vmatprep.subr.mxu0 0.0
  %143 = vmatpush1.msra.mxu0 %v54
  %144 = vmatprep.subr.mxu0 0.0
  %145 = vmatpush1.msra.mxu0 %v55
  %146 = vmatprep.subr.mxu0 0.0
  %147 = vmatpush1.msra.mxu0 %v56
  %148 = vmatprep.subr.mxu0 0.0
  %149 = vmatpush1.msra.mxu0 %v57
  %150 = vmatprep.subr.mxu0 0.0
  %151 = vmatpush1.msra.mxu0 %v58
  %152 = vmatprep.subr.mxu0 0.0
  %153 = vmatpush1.msra.mxu0 %v59
  %154 = vmatprep.subr.mxu0 0.0
  %155 = vmatpush1.msra.mxu0 %v60
  %156 = vmatprep.subr.mxu0 0.0
  %157 = vmatpush1.msra.mxu0 %v61
  %158 = vmatprep.subr.mxu0 0.0
  %159 = vmatpush1.msra.mxu0 %v62
  %160 = vmatprep.subr.mxu0 0.0
  %161 = vmatpush1.msra.mxu0 %v63
  %162 = vmatprep.subr.mxu0 0.0
  %163 = vmatpush1.msra.mxu0 %v64
  %164 = vmatprep.subr.mxu0 0.0
  %165 = vmatpush1.msra.mxu0 %v65
  %166 = vmatprep.subr.mxu0 0.0
  %167 = vmatpush1.msra.mxu0 %v66
  %168 = vmatprep.subr.mxu0 0.0
  %169 = vmatpush1.msra.mxu0 %v67
  %170 = vmatprep.subr.mxu0 0.0
  %171 = vmatpush1.msra.mxu0 %v68
  %172 = vmatprep.subr.mxu0 0.0
  %173 = vmatpush1.msra.mxu0 %v69
  %174 = vmatprep.subr.mxu0 0.0
  %175 = vmatpush1.msra.mxu0 %v70
  %176 = vmatprep.subr.mxu0 0.0
  %177 = vmatpush1.msra.mxu0 %v71
  %178 = vmatprep.subr.mxu0 0.0
  %179 = vmatpush1.msra.mxu0 %v72
  %180 = vmatprep.subr.mxu0 0.0
  %181 = vmatpush1.msra.mxu0 %v73
  %182 = vmatprep.subr.mxu0 0.0
  %183 = vmatpush1.msra.mxu0 %v74
  %184 = vmatprep.subr.mxu0 0.0
  %185 = vmatpush1.msra.mxu0 %v75
  %186 = vmatprep.mubr.f32.mxu0 %v15
  %187 = vmatmul.mubr.f32.gmra.mrb[0].mxu0 %v14
  %v188 = vpop.f32.mrb[0].mxu0
  %v189 = vadd.f32 %v89, %v188
  %v190 = vpop.f32.mrb[0].mxu0
  %191 = vmatprep.mubr.f32.mxu0 %v18
  %192 = vmatmul.mubr.f32.gmra.mrb[0].mxu0 %v17
  %v193 = vpop.f32.mrb[0].mxu0
  %v194 = vadd.f32 %v89, %v193
  %v195 = vpop.f32.mrb[0].mxu0
  %196 = vmatprep.mubr.f32.mxu0 %v21
  %197 = vmatmul.mubr.f32.gmra.mrb[0].mxu0 %v20
  %v198 = vpop.f32.mrb[0].mxu0
  %v199 = vadd.f32 %v89, %v198
  %v200 = vpop.f32.mrb[0].mxu0
  %201 = vmatprep.mubr.f32.mxu0 %v24
  %202 = vmatmul.mubr.f32.gmra.mrb[0].mxu0 %v23
  %v203 = vpop.f32.mrb[0].mxu0
  %v204 = vadd.f32 %v89, %v203
  %v205 = vpop.f32.mrb[0].mxu0
  %206 = vmatprep.mubr.f32.mxu0 %v27
  %207 = vmatmul.mubr.f32.gmra.mrb[0].mxu0 %v26
  %v208 = vpop.f32.mrb[0].mxu0
  %v209 = vadd.f32 %v89, %v208
  %v210 = vpop.f32.mrb[0].mxu0
  %211 = vmatprep.mubr.f32.mxu0 %v30
  %212 = vmatmul.mubr.f32.gmra.mrb[0].mxu0 %v29
  %v213 = vpop.f32.mrb[0].mxu0
  %v214 = vadd.f32 %v89, %v213
  %v215 = vpop.f32.mrb[0].mxu0
  %216 = vmatprep.mubr.f32.mxu0 %v33
  %217 = vmatmul.mubr.f32.gmra.mrb[0].mxu0 %v32
  %v218 = vpop.f32.mrb[0].mxu0
  %v219 = vadd.f32 %v89, %v218
  %v220 = vpop.f32.mrb[0].mxu0
  %221 = vmatprep.mubr.f32.mxu0 %v36
  %222 = vmatmul.mubr.f32.gmra.mrb[0].mxu0 %v35
  %v223 = vpop.f32.mrb[0].mxu0
  %v224 = vadd.f32 %v89, %v223
  %v225 = vpop.f32.mrb[0].mxu0
  %226 = vmatprep.mubr.f32.mxu0 %v39
  %227 = vmatmul.mubr.f32.gmra.mrb[0].mxu0 %v38
  %v228 = vpop.f32.mrb[0].mxu0
  %v229 = vadd.f32 %v89, %v228
  %v230 = vpop.f32.mrb[0].mxu0
  %231 = vmatprep.mubr.f32.mxu0 %v42
  %232 = vmatmul.mubr.f32.gmra.mrb[0].mxu0 %v41
  %v233 = vpop.f32.mrb[0].mxu0
  %v234 = vadd.f32 %v89, %v233
  %v235 = vpop.f32.mrb[0].mxu0
  %236 = vdwg.mxu0
  %237 = vmatprep.subr.mxu0 0.0
  %238 = vmatpush1.msra.mxu0 %v76
  %239 = vmatprep.subr.mxu0 0.0
  %240 = vmatpush1.msra.mxu0 %v77
  %241 = vmatprep.subr.mxu0 0.0
  %242 = vmatpush1.msra.mxu0 %v78
  %243 = vmatprep.subr.mxu0 0.0
  %244 = vmatpush1.msra.mxu0 %v79
  %245 = vmatprep.subr.mxu0 0.0
  %246 = vmatpush1.msra.mxu0 %v80
  %247 = vmatprep.subr.mxu0 0.0
  %248 = vmatpush1.msra.mxu0 %v81
  %249 = vmatprep.subr.mxu0 0.0
  %250 = vmatpush1.msra.mxu0 %v82
  %251 = vmatprep.subr.mxu0 0.0
  %252 = vmatpush1.msra.mxu0 %v83
  %253 = vmatprep.subr.mxu0 0.0
  %254 = vmatpush1.msra.mxu0 0.0
  %255 = vmatprep.subr.mxu0 0.0
  %256 = vmatpush1.msra.mxu0 0.0
  %257 = vmatprep.subr.mxu0 0.0
  %258 = vmatpush1.msra.mxu0 0.0
  %259 = vmatprep.subr.mxu0 0.0
  %260 = vmatpush1.msra.mxu0 0.0
  %261 = vmatprep.subr.mxu0 0.0
  %262 = vmatpush1.msra.mxu0 0.0
  %263 = vmatprep.subr.mxu0 0.0
  %264 = vmatpush1.msra.mxu0 0.0
  %265 = vmatprep.subr.mxu0 0.0
  %266 = vmatpush1.msra.mxu0 0.0
  %267 = vmatprep.subr.mxu0 0.0
  %268 = vmatpush1.msra.mxu0 0.0
  %269 = vmatprep.subr.mxu0 0.0
  %270 = vmatpush1.msra.mxu0 0.0
  %271 = vmatprep.subr.mxu0 0.0
  %272 = vmatpush1.msra.mxu0 0.0
  %273 = vmatprep.subr.mxu0 0.0
  %274 = vmatpush1.msra.mxu0 0.0
  %275 = vmatprep.subr.mxu0 0.0
  %276 = vmatpush1.msra.mxu0 0.0
  %277 = vmatprep.subr.mxu0 0.0
  %278 = vmatpush1.msra.mxu0 0.0
  %279 = vmatprep.subr.mxu0 0.0
  %280 = vmatpush1.msra.mxu0 0.0
  %281 = vmatprep.subr.mxu0 0.0
  %282 = vmatpush1.msra.mxu0 0.0
  %283 = vmatprep.subr.mxu0 0.0
  %284 = vmatpush1.msra.mxu0 0.0
  %285 = vmatprep.subr.mxu0 0.0
  %286 = vmatpush1.msra.mxu0 0.0
  %287 = vmatprep.subr.mxu0 0.0
  %288 = vmatpush1.msra.mxu0 0.0
  %289 = vmatprep.subr.mxu0 0.0
  %290 = vmatpush1.msra.mxu0 0.0
  %291 = vmatprep.subr.mxu0 0.0
  %292 = vmatpush1.msra.mxu0 0.0
  %293 = vmatprep.subr.mxu0 0.0
  %294 = vmatpush1.msra.mxu0 0.0
  %295 = vmatprep.subr.mxu0 0.0
  %296 = vmatpush1.msra.mxu0 0.0
  %297 = vmatprep.subr.mxu0 0.0
  %298 = vmatpush1.msra.mxu0 0.0
  %299 = vmatprep.subr.mxu0 0.0
  %300 = vmatpush1.msra.mxu0 0.0
  %301 = vmatprep.mubr.f32.mxu0 0.0
  %302 = vmatmul.mubr.f32.gmra.mrb[0].mxu0 %v93
  %v303 = vpop.f32.mrb[0].mxu0
  %v304 = vadd.f32 %v189, %v303
  %v305 = vpop.f32.mrb[0].mxu0
  %306 = vmatprep.mubr.f32.mxu0 0.0
  %307 = vmatmul.mubr.f32.gmra.mrb[0].mxu0 %v96
  %v308 = vpop.f32.mrb[0].mxu0
  %v309 = vadd.f32 %v194, %v308
  %v310 = vpop.f32.mrb[0].mxu0
  %311 = vmatprep.mubr.f32.mxu0 0.0
  %312 = vmatmul.mubr.f32.gmra.mrb[0].mxu0 %v99
  %v313 = vpop.f32.mrb[0].mxu0
  %v314 = vadd.f32 %v199, %v313
  %v315 = vpop.f32.mrb[0].mxu0
  %316 = vmatprep.mubr.f32.mxu0 0.0
  %317 = vmatmul.mubr.f32.gmra.mrb[0].mxu0 %v102
  %v318 = vpop.f32.mrb[0].mxu0
  %v319 = vadd.f32 %v204, %v318
  %v320 = vpop.f32.mrb[0].mxu0
  %321 = vmatprep.mubr.f32.mxu0 0.0
  %322 = vmatmul.mubr.f32.gmra.mrb[0].mxu0 %v105
  %v323 = vpop.f32.mrb[0].mxu0
  %v324 = vadd.f32 %v209, %v323
  %v325 = vpop.f32.mrb[0].mxu0
  %326 = vmatprep.mubr.f32.mxu0 0.0
  %327 = vmatmul.mubr.f32.gmra.mrb[0].mxu0 %v108
  %v328 = vpop.f32.mrb[0].mxu0
  %v329 = vadd.f32 %v214, %v328
  %v330 = vpop.f32.mrb[0].mxu0
  %331 = vmatprep.mubr.f32.mxu0 0.0
  %332 = vmatmul.mubr.f32.gmra.mrb[0].mxu0 %v111
  %v333 = vpop.f32.mrb[0].mxu0
  %v334 = vadd.f32 %v219, %v333
  %v335 = vpop.f32.mrb[0].mxu0
  %336 = vmatprep.mubr.f32.mxu0 0.0
  %337 = vmatmul.mubr.f32.gmra.mrb[0].mxu0 %v114
  %v338 = vpop.f32.mrb[0].mxu0
  %v339 = vadd.f32 %v224, %v338
  %v340 = vpop.f32.mrb[0].mxu0
  %341 = vmatprep.mubr.f32.mxu0 0.0
  %342 = vmatmul.mubr.f32.gmra.mrb[0].mxu0 %v117
  %v343 = vpop.f32.mrb[0].mxu0
  %v344 = vadd.f32 %v229, %v343
  %v345 = vpop.f32.mrb[0].mxu0
  %346 = vmatprep.mubr.f32.mxu0 0.0
  %347 = vmatmul.mubr.f32.gmra.mrb[0].mxu0 %v120
  %v348 = vpop.f32.mrb[0].mxu0
  %v349 = vadd.f32 %v234, %v348
  %v350 = vpop.f32.mrb[0].mxu0
  %351 = vdwg.mxu0
  %v352 = vmul.f32 %v304, %v304
  %v353 = vmul.f32 %v309, %v309
  %v354 = vmul.f32 %v314, %v314
  %v355 = vmul.f32 %v319, %v319
  %v356 = vmul.f32 %v324, %v324
  %v357 = vmul.f32 %v329, %v329
  %v358 = vmul.f32 %v334, %v334
  %v359 = vmul.f32 %v339, %v339
  %v360 = vmul.f32 %v344, %v344
  %v361 = vmul.f32 %v349, %v349
  %v362 = vmul.f32 %v304, %v352
  %v363 = vmul.f32 %v309, %v353
  %v364 = vmul.f32 %v314, %v354
  %v365 = vmul.f32 %v319, %v355
  %v366 = vmul.f32 %v324, %v356
  %v367 = vmul.f32 %v329, %v357
  %v368 = vmul.f32 %v334, %v358
  %v369 = vmul.f32 %v339, %v359
  %v370 = vmul.f32 %v344, %v360
  %v371 = vmul.f32 %v349, %v361
  %v372 = vmul.f32 %v362, 0.044715
  %v373 = vmul.f32 %v363, 0.044715
  %v374 = vmul.f32 %v364, 0.044715
  %v375 = vmul.f32 %v365, 0.044715
  %v376 = vmul.f32 %v366, 0.044715
  %v377 = vmul.f32 %v367, 0.044715
  %v378 = vmul.f32 %v368, 0.044715
  %v379 = vmul.f32 %v369, 0.044715
  %v380 = vmul.f32 %v370, 0.044715
  %v381 = vmul.f32 %v371, 0.044715
  %v382 = vadd.f32 %v304, %v372
  %v383 = vadd.f32 %v309, %v373
  %v384 = vadd.f32 %v314, %v374
  %v385 = vadd.f32 %v319, %v375
  %v386 = vadd.f32 %v324, %v376
  %v387 = vadd.f32 %v329, %v377
  %v388 = vadd.f32 %v334, %v378
  %v389 = vadd.f32 %v339, %v379
  %v390 = vadd.f32 %v344, %v380
  %v391 = vadd.f32 %v349, %v381
  %v392 = vmul.f32 %v382, 0.7978846
  %v393 = vmul.f32 %v383, 0.7978846
  %v394 = vmul.f32 %v384, 0.7978846
  %v395 = vmul.f32 %v385, 0.7978846
  %v396 = vmul.f32 %v386, 0.7978846
  %v397 = vmul.f32 %v387, 0.7978846
  %v398 = vmul.f32 %v388, 0.7978846
  %v399 = vmul.f32 %v389, 0.7978846
  %v400 = vmul.f32 %v390, 0.7978846
  %v401 = vmul.f32 %v391, 0.7978846
  %v402 = vtanh.pop %v392
  %v403 = vtanh.pop %v393
  %v404 = vtanh.pop %v394
  %v405 = vtanh.pop %v395
  %v406 = vtanh.pop %v396
  %v407 = vtanh.pop %v397
  %v408 = vtanh.pop %v398
  %v409 = vtanh.pop %v399
  %v410 = vtanh.pop %v400
  %v411 = vtanh.pop %v401
  %v412 = vadd.f32 %v402, 1.0
  %v413 = vadd.f32 %v403, 1.0
  %v414 = vadd.f32 %v404, 1.0
  %v415 = vadd.f32 %v405, 1.0
  %v416 = vadd.f32 %v406, 1.0
  %v417 = vadd.f32 %v407, 1.0
  %v418 = vadd.f32 %v408, 1.0
  %v419 = vadd.f32 %v409, 1.0
  %v420 = vadd.f32 %v410, 1.0
  %v421 = vadd.f32 %v411, 1.0
  %v422 = vmul.f32 %v412, 0.5
  %v423 = vmul.f32 %v413, 0.5
  %v424 = vmul.f32 %v414, 0.5
  %v425 = vmul.f32 %v415, 0.5
  %v426 = vmul.f32 %v416, 0.5
  %v427 = vmul.f32 %v417, 0.5
  %v428 = vmul.f32 %v418, 0.5
  %v429 = vmul.f32 %v419, 0.5
  %v430 = vmul.f32 %v420, 0.5
  %v431 = vmul.f32 %v421, 0.5
  %v432 = vmul.f32 %v304, %v422
  %v433 = vmul.f32 %v309, %v423
  %v434 = vmul.f32 %v314, %v424
  %v435 = vmul.f32 %v319, %v425
  %v436 = vmul.f32 %v324, %v426
  %v437 = vmul.f32 %v329, %v427
  %v438 = vmul.f32 %v334, %v428
  %v439 = vmul.f32 %v339, %v429
  %v440 = vmul.f32 %v344, %v430
  %v441 = vmul.f32 %v349, %v431
  %442 = vst.msk [vmem:[%s3] sm:$0xff] %vm91, %v432
  %443 = vst.msk [vmem:[%s3 + $0x8] sm:$0xff] %vm91, %v433
  %444 = vst.msk [vmem:[%s3 + $0x10] sm:$0xff] %vm91, %v434
  %445 = vst.msk [vmem:[%s3 + $0x18] sm:$0xff] %vm91, %v435
  %446 = vst.msk [vmem:[%s3 + $0x20] sm:$0xff] %vm91, %v436
  %447 = vst.msk [vmem:[%s3 + $0x28] sm:$0xff] %vm91, %v437
  %448 = vst.msk [vmem:[%s3 + $0x30] sm:$0xff] %vm91, %v438
  %449 = vst.msk [vmem:[%s3 + $0x38] sm:$0xff] %vm91, %v439
  %450 = vst.msk [vmem:[%s3 + $0x40] sm:$0xff] %vm91, %v440
  %vm451 = vcmask 521216
  %452 = vst.msk [vmem:[%s3 + $0x48] sm:$0x3f] %vm451, %v441
  // Predicated region
  $region14: #{wavlm_encoder_forward.12} parent=0 // pred_check
    _
  $region15: #{wavlm_encoder_forward.12} parent=0 // pred_check_branch
    %454 = sbr.rel (0) target = $region17
  $region16: #{wavlm_encoder_forward.12} parent=0 // pred_region
    _
  $region17: #{wavlm_encoder_forward.12} parent=0 // pred_fallthru
    _
  // Predicated region
  $region18: #{wavlm_encoder_forward.12} parent=0 // pred_check
    _
  $region19: #{wavlm_encoder_forward.12} parent=0 // pred_check_branch
    %456 = sbr.rel (0) target = $region21
  $region20: #{wavlm_encoder_forward.12} parent=0 // pred_region
    _
  $region21: #{wavlm_encoder_forward.12} parent=0 // pred_fallthru
    _

// kernel: wavlm_encoder_forward.13
$region0: #{wavlm_encoder_forward.13}
  #allocation0 [shape = 'u32[]', space=smem, size = 0x4, offset = 0x4, fixed_abs, tag = 'smem constant byte address 0x4 - core index']
  #allocation1 [shape = 'u32[144,128]{1,0:T(1,128)}', space=vmem, size = 0x12000, scoped, tag = 'internal scratch']
  %s0 = inlined_call_operand.vmem [shape: f32[78,64], index: 0, kind: input, shape index: {}]
  %s1 = inlined_call_operand.vmem [shape: f32[78,64], index: 1, kind: input, shape index: {}]
  %s2 = inlined_call_operand.vmem [shape: f32[1,64], index: 2, kind: input, shape index: {}]
  %s3 = inlined_call_operand.vmem [shape: f32[1,64], index: 3, kind: input, shape index: {}]
  %s4 = inlined_call_operand.vmem [shape: f32[78,64], index: 4, kind: output, shape index: {}]
  %s5 = sld [smem:[#allocation0]]
  $region26: #{wavlm_encoder_forward.13} parent=0
    _
  %s7 = ssub.s32 1, %s5
  %s8 = scalar_select 0, %s7, %s5
  // Predicated region
  $region2: #{wavlm_encoder_forward.13} parent=0 // pred_check
    _
  $region3: #{wavlm_encoder_forward.13} parent=0 // pred_check_branch
    %10 = sbr.rel (0) target = $region5
  $region4: #{wavlm_encoder_forward.13} parent=0 // pred_region
    _
  $region5: #{wavlm_encoder_forward.13} parent=0 // pred_fallthru
    _
  // Predicated region
  $region6: #{wavlm_encoder_forward.13} parent=0 // pred_check
    _
  $region7: #{wavlm_encoder_forward.13} parent=0 // pred_check_branch
    %12 = sbr.rel (0) target = $region9
  $region8: #{wavlm_encoder_forward.13} parent=0 // pred_region
    _
  $region9: #{wavlm_encoder_forward.13} parent=0 // pred_fallthru
    _
  // Predicated region
  $region10: #{wavlm_encoder_forward.13} parent=0 // pred_check
    _
  $region11: #{wavlm_encoder_forward.13} parent=0 // pred_check_branch
    %14 = sbr.rel (0) target = $region13
  $region12: #{wavlm_encoder_forward.13} parent=0 // pred_region
    _
  $region13: #{wavlm_encoder_forward.13} parent=0 // pred_fallthru
    _
  // Predicated region
  $region14: #{wavlm_encoder_forward.13} parent=0 // pred_check
    _
  $region15: #{wavlm_encoder_forward.13} parent=0 // pred_check_branch
    %16 = sbr.rel (0) target = $region17
  $region16: #{wavlm_encoder_forward.13} parent=0 // pred_region
    _
  $region17: #{wavlm_encoder_forward.13} parent=0 // pred_fallthru
    _
  %v17 = vld [vmem:[%s0] sm:$0xff]
  %v18 = vld [vmem:[%s0 + $0x8] sm:$0xff]
  %v19 = vld [vmem:[%s0 + $0x10] sm:$0xff]
  %v20 = vld [vmem:[%s0 + $0x18] sm:$0xff]
  %v21 = vld [vmem:[%s0 + $0x20] sm:$0xff]
  %v22 = vld [vmem:[%s0 + $0x28] sm:$0xff]
  %v23 = vld [vmem:[%s0 + $0x30] sm:$0xff]
  %v24 = vld [vmem:[%s0 + $0x38] sm:$0xff]
  %v25 = vld [vmem:[%s0 + $0x40] sm:$0xff]
  %v26 = vld [vmem:[%s0 + $0x48] sm:$0x3f]
  %v27 = vld [vmem:[%s1] sm:$0xff]
  %v28 = vld [vmem:[%s1 + $0x8] sm:$0xff]
  %v29 = vld [vmem:[%s1 + $0x10] sm:$0xff]
  %v30 = vld [vmem:[%s1 + $0x18] sm:$0xff]
  %v31 = vld [vmem:[%s1 + $0x20] sm:$0xff]
  %v32 = vld [vmem:[%s1 + $0x28] sm:$0xff]
  %v33 = vld [vmem:[%s1 + $0x30] sm:$0xff]
  %v34 = vld [vmem:[%s1 + $0x38] sm:$0xff]
  %v35 = vld [vmem:[%s1 + $0x40] sm:$0xff]
  %v36 = vld [vmem:[%s1 + $0x48] sm:$0x3f]
  %v37 = vadd.f32 %v17, %v27
  %v38 = vadd.f32 %v18, %v28
  %v39 = vadd.f32 %v19, %v29
  %v40 = vadd.f32 %v20, %v30
  %v41 = vadd.f32 %v21, %v31
  %v42 = vadd.f32 %v22, %v32
  %v43 = vadd.f32 %v23, %v33
  %v44 = vadd.f32 %v24, %v34
  %v45 = vadd.f32 %v25, %v35
  %v46 = vadd.f32 %v26, %v36
  %v47 = vld [vmem:[%s2] sm:$0x1]
  %v48 = vld [vmem:[%s3] sm:$0x1]
  %vm49 = vcmask 523264
  %v50 = vsel %vm49, %v37, 0.0
  %51 = vadd.xlane.f32.xlu0 %v50
  %v52 = vpop.xlane.xlu0 %51
  %v53 = vsel %vm49, %v38, 0.0
  %54 = vadd.xlane.f32.xlu0 %v53
  %v55 = vpop.xlane.xlu0 %54
  %v56 = vsel %vm49, %v39, 0.0
  %57 = vadd.xlane.f32.xlu0 %v56
  %v58 = vpop.xlane.xlu0 %57
  %v59 = vsel %vm49, %v40, 0.0
  %60 = vadd.xlane.f32.xlu0 %v59
  %v61 = vpop.xlane.xlu0 %60
  %v62 = vsel %vm49, %v41, 0.0
  %63 = vadd.xlane.f32.xlu0 %v62
  %v64 = vpop.xlane.xlu0 %63
  %v65 = vsel %vm49, %v42, 0.0
  %66 = vadd.xlane.f32.xlu0 %v65
  %v67 = vpop.xlane.xlu0 %66
  %v68 = vsel %vm49, %v43, 0.0
  %69 = vadd.xlane.f32.xlu0 %v68
  %v70 = vpop.xlane.xlu0 %69
  %v71 = vsel %vm49, %v44, 0.0
  %72 = vadd.xlane.f32.xlu0 %v71
  %v73 = vpop.xlane.xlu0 %72
  %v74 = vsel %vm49, %v45, 0.0
  %75 = vadd.xlane.f32.xlu0 %v74
  %v76 = vpop.xlane.xlu0 %75
  %vm77 = vcmask 521216
  %v78 = vsel %vm77, %v46, 0.0
  %79 = vadd.xlane.f32.xlu0 %v78
  %v80 = vpop.xlane.xlu0 %79
  %v81 = vrcp.pop 64.0
  %v82 = vmul.f32 %v52, %v81
  %v83 = vmul.f32 %v55, %v81
  %v84 = vmul.f32 %v58, %v81
  %v85 = vmul.f32 %v61, %v81
  %v86 = vmul.f32 %v64, %v81
  %v87 = vmul.f32 %v67, %v81
  %v88 = vmul.f32 %v70, %v81
  %v89 = vmul.f32 %v73, %v81
  %v90 = vmul.f32 %v76, %v81
  %v91 = vmul.f32 %v80, %v81
  %v92 = vsub.f32 %v37, %v82
  %v93 = vsub.f32 %v38, %v83
  %v94 = vsub.f32 %v39, %v84
  %v95 = vsub.f32 %v40, %v85
  %v96 = vsub.f32 %v41, %v86
  %v97 = vsub.f32 %v42, %v87
  %v98 = vsub.f32 %v43, %v88
  %v99 = vsub.f32 %v44, %v89
  %v100 = vsub.f32 %v45, %v90
  %v101 = vsub.f32 %v46, %v91
  %v102 = vmul.f32 %v92, %v92
  %v103 = vmul.f32 %v93, %v93
  %v104 = vmul.f32 %v94, %v94
  %v105 = vmul.f32 %v95, %v95
  %v106 = vmul.f32 %v96, %v96
  %v107 = vmul.f32 %v97, %v97
  %v108 = vmul.f32 %v98, %v98
  %v109 = vmul.f32 %v99, %v99
  %v110 = vmul.f32 %v100, %v100
  %v111 = vmul.f32 %v101, %v101
  %v112 = vsel %vm49, %v102, 0.0
  %113 = vadd.xlane.f32.xlu0 %v112
  %v114 = vpop.xlane.xlu0 %113
  %v115 = vsel %vm49, %v103, 0.0
  %116 = vadd.xlane.f32.xlu0 %v115
  %v117 = vpop.xlane.xlu0 %116
  %v118 = vsel %vm49, %v104, 0.0
  %119 = vadd.xlane.f32.xlu0 %v118
  %v120 = vpop.xlane.xlu0 %119
  %v121 = vsel %vm49, %v105, 0.0
  %122 = vadd.xlane.f32.xlu0 %v121
  %v123 = vpop.xlane.xlu0 %122
  %v124 = vsel %vm49, %v106, 0.0
  %125 = vadd.xlane.f32.xlu0 %v124
  %v126 = vpop.xlane.xlu0 %125
  %v127 = vsel %vm49, %v107, 0.0
  %128 = vadd.xlane.f32.xlu0 %v127
  %v129 = vpop.xlane.xlu0 %128
  %v130 = vsel %vm49, %v108, 0.0
  %131 = vadd.xlane.f32.xlu0 %v130
  %v132 = vpop.xlane.xlu0 %131
  %v133 = vsel %vm49, %v109, 0.0
  %134 = vadd.xlane.f32.xlu0 %v133
  %v135 = vpop.xlane.xlu0 %134
  %v136 = vsel %vm49, %v110, 0.0
  %137 = vadd.xlane.f32.xlu0 %v136
  %v138 = vpop.xlane.xlu0 %137
  %v139 = vsel %vm77, %v111, 0.0
  %140 = vadd.xlane.f32.xlu0 %v139
  %v141 = vpop.xlane.xlu0 %140
  %v142 = vmul.f32 %v114, %v81
  %v143 = vmul.f32 %v117, %v81
  %v144 = vmul.f32 %v120, %v81
  %v145 = vmul.f32 %v123, %v81
  %v146 = vmul.f32 %v126, %v81
  %v147 = vmul.f32 %v129, %v81
  %v148 = vmul.f32 %v132, %v81
  %v149 = vmul.f32 %v135, %v81
  %v150 = vmul.f32 %v138, %v81
  %v151 = vmul.f32 %v141, %v81
  %v152 = vadd.f32 %v142, 1e-05
  %v153 = vadd.f32 %v143, 1e-05
  %v154 = vadd.f32 %v144, 1e-05
  %v155 = vadd.f32 %v145, 1e-05
  %v156 = vadd.f32 %v146, 1e-05
  %v157 = vadd.f32 %v147, 1e-05
  %v158 = vadd.f32 %v148, 1e-05
  %v159 = vadd.f32 %v149, 1e-05
  %v160 = vadd.f32 %v150, 1e-05
  %v161 = vadd.f32 %v151, 1e-05
  %v162 = vrsqrt.pop %v152
  %v163 = vrsqrt.pop %v153
  %v164 = vrsqrt.pop %v154
  %v165 = vrsqrt.pop %v155
  %v166 = vrsqrt.pop %v156
  %v167 = vrsqrt.pop %v157
  %v168 = vrsqrt.pop %v158
  %v169 = vrsqrt.pop %v159
  %v170 = vrsqrt.pop %v160
  %v171 = vrsqrt.pop %v161
  %v172 = vmul.f32 %v92, %v162
  %v173 = vmul.f32 %v93, %v163
  %v174 = vmul.f32 %v94, %v164
  %v175 = vmul.f32 %v95, %v165
  %v176 = vmul.f32 %v96, %v166
  %v177 = vmul.f32 %v97, %v167
  %v178 = vmul.f32 %v98, %v168
  %v179 = vmul.f32 %v99, %v169
  %v180 = vmul.f32 %v100, %v170
  %v181 = vmul.f32 %v101, %v171
  %v183 = vlaneseq
  %v184 = vshrl.u32 %v183, 7
  %v185 = vsub.s32 0, %v184
  %v186 = vrot.slane %v47, %v185
  %v188 = vmul.f32 %v172, %v186
  %v189 = vmul.f32 %v173, %v186
  %v190 = vmul.f32 %v174, %v186
  %v191 = vmul.f32 %v175, %v186
  %v192 = vmul.f32 %v176, %v186
  %v193 = vmul.f32 %v177, %v186
  %v194 = vmul.f32 %v178, %v186
  %v195 = vmul.f32 %v179, %v186
  %v196 = vmul.f32 %v180, %v186
  %v197 = vmul.f32 %v181, %v186
  %v199 = vlaneseq
  %v200 = vshrl.u32 %v199, 7
  %v201 = vsub.s32 0, %v200
  %v202 = vrot.slane %v48, %v201
  %v204 = vadd.f32 %v188, %v202
  %v205 = vadd.f32 %v189, %v202
  %v206 = vadd.f32 %v190, %v202
  %v207 = vadd.f32 %v191, %v202
  %v208 = vadd.f32 %v192, %v202
  %v209 = vadd.f32 %v193, %v202
  %v210 = vadd.f32 %v194, %v202
  %v211 = vadd.f32 %v195, %v202
  %v212 = vadd.f32 %v196, %v202
  %v213 = vadd.f32 %v197, %v202
  %214 = vst.msk [vmem:[%s4] sm:$0xff] %vm49, %v204
  %215 = vst.msk [vmem:[%s4 + $0x8] sm:$0xff] %vm49, %v205
  %216 = vst.msk [vmem:[%s4 + $0x10] sm:$0xff] %vm49, %v206
  %217 = vst.msk [vmem:[%s4 + $0x18] sm:$0xff] %vm49, %v207
  %218 = vst.msk [vmem:[%s4 + $0x20] sm:$0xff] %vm49, %v208
  %219 = vst.msk [vmem:[%s4 + $0x28] sm:$0xff] %vm49, %v209
  %220 = vst.msk [vmem:[%s4 + $0x30] sm:$0xff] %vm49, %v210
  %221 = vst.msk [vmem:[%s4 + $0x38] sm:$0xff] %vm49, %v211
  %222 = vst.msk [vmem:[%s4 + $0x40] sm:$0xff] %vm49, %v212
  %223 = vst.msk [vmem:[%s4 + $0x48] sm:$0x3f] %vm77, %v213
  // Predicated region
  $region18: #{wavlm_encoder_forward.13} parent=0 // pred_check
    _
  $region19: #{wavlm_encoder_forward.13} parent=0 // pred_check_branch
    %225 = sbr.rel (0) target = $region21
  $region20: #{wavlm_encoder_forward.13} parent=0 // pred_region
    _
  $region21: #{wavlm_encoder_forward.13} parent=0 // pred_fallthru
    _
  // Predicated region
  $region22: #{wavlm_encoder_forward.13} parent=0 // pred_check
    _
  $region23: #{wavlm_encoder_forward.13} parent=0 // pred_check_branch
    %227 = sbr.rel (0) target = $region25
  $region24: #{wavlm_encoder_forward.13} parent=0 // pred_region
    _
  $region25: #{wavlm_encoder_forward.13} parent=0 // pred_fallthru
    _

// kernel: wavlm_encoder_forward.14
$region0: #{wavlm_encoder_forward.14}
  #allocation0 [shape = 'u32[]', space=smem, size = 0x4, offset = 0x4, fixed_abs, tag = 'smem constant byte address 0x4 - core index']
  #allocation1 [shape = 'u32[144,128]{1,0:T(1,128)}', space=vmem, size = 0x12000, scoped, tag = 'internal scratch']
  %s0 = inlined_call_operand.vmem [shape: f32[2,39,64], index: 0, kind: input, shape index: {}]
  %s1 = inlined_call_operand.vmem [shape: f32[2,1,39], index: 1, kind: input, shape index: {}]
  %s2 = inlined_call_operand.vmem [shape: f32[64,192], index: 2, kind: input, shape index: {}]
  %s3 = inlined_call_operand.vmem [shape: f32[1,192], index: 3, kind: input, shape index: {}]
  %s4 = inlined_call_operand.vmem [shape: f32[64,64], index: 4, kind: input, shape index: {}]
  %s5 = inlined_call_operand.vmem [shape: f32[1,64], index: 5, kind: input, shape index: {}, may-alias: {5,7,11,13}]
  %s6 = inlined_call_operand.vmem [shape: f32[1,64], index: 6, kind: input, shape index: {}, may-alias: {6,12}]
  %s7 = inlined_call_operand.vmem [shape: f32[1,64], index: 7, kind: input, shape index: {}, may-alias: {5,7,11,13}]
  %s8 = inlined_call_operand.vmem [shape: f32[64,128], index: 8, kind: input, shape index: {}]
  %s9 = inlined_call_operand.vmem [shape: f32[1,128], index: 9, kind: input, shape index: {}]
  %s10 = inlined_call_operand.vmem [shape: f32[128,64], index: 10, kind: input, shape index: {}]
  %s11 = inlined_call_operand.vmem [shape: f32[1,64], index: 11, kind: input, shape index: {}, may-alias: {5,7,11,13}]
  %s12 = inlined_call_operand.vmem [shape: f32[1,64], index: 12, kind: input, shape index: {}, may-alias: {6,12}]
  %s13 = inlined_call_operand.vmem [shape: f32[1,64], index: 13, kind: input, shape index: {}, may-alias: {5,7,11,13}]
  %s14 = inlined_call_operand.vmem [shape: f32[2,39,64], index: 14, kind: output, shape index: {}]
  %s15 = sld [smem:[#allocation0]]
  $region89: #{wavlm_encoder_forward.14} parent=0
    _
  %s17 = ssub.s32 1, %s15
  %s18 = scalar_select 0, %s17, %s15
  loop: start=0, step=1, limit=4
  $region2: #{wavlm_encoder_forward.14} parent=0 // loop_pre_header
    _
  $region3: #{wavlm_encoder_forward.14} parent=0 // loop_header
    %s20 = sphi 0, %s24
    %p21 = scmp.ge.s32.totalorder %s20, 4
    %s30 = sphi 0, %s32
    %s33 = sphi 0, %s30
    %s34 = sphi 0, %s33
    %s50 = sphi 0, %s34
    %s56 = sphi 0, %s58
    %s59 = sphi 0, %s56
    %s60 = sphi 0, %s59
    %s76 = sphi 0, %s60
    %s80 = sphi 0, %s80
    %s82 = sphi 0, %s80
    %s83 = sphi 0, %s82
    %s97 = sphi 0, %s83
    %s101 = sphi 0, %s101
    %s103 = sphi 0, %s101
    %s104 = sphi 0, %s103
    %s118 = sphi 0, %s104
    %s122 = sphi 0, %s122
    %s124 = sphi 0, %s122
    %s125 = sphi 0, %s124
    %s139 = sphi 0, %s125
    %s143 = sphi 0, %s143
    %s145 = sphi 0, %s143
    %s146 = sphi 0, %s145
    %s160 = sphi 0, %s146
    %s164 = sphi 0, %s164
    %s166 = sphi 0, %s164
    %s167 = sphi 0, %s166
    %s181 = sphi 0, %s167
    %s185 = sphi 0, %s185
    %s187 = sphi 0, %s185
    %s188 = sphi 0, %s187
    %s202 = sphi 0, %s188
    %s206 = sphi 0, %s206
    %s208 = sphi 0, %s206
    %s209 = sphi 0, %s208
    %s223 = sphi 0, %s209
    %s227 = sphi 0, %s227
    %s229 = sphi 0, %s227
    %s230 = sphi 0, %s229
    %s244 = sphi 0, %s230
    %s248 = sphi 0, %s248
    %s250 = sphi 0, %s248
    %s251 = sphi 0, %s250
    %s265 = sphi 0, %s251
    %s269 = sphi 0, %s269
    %s271 = sphi 0, %s269
    %s272 = sphi 0, %s271
    %s286 = sphi 0, %s272
    %s290 = sphi 0, %s290
    %s292 = sphi 0, %s290
    %s293 = sphi 0, %s292
    %s307 = sphi 0, %s293
    %s311 = sphi 0, %s311
    %s313 = sphi 0, %s311
    %s314 = sphi 0, %s313
    %s328 = sphi 0, %s314
    %s334 = sphi 0, %s336
    %s337 = sphi 0, %s334
    %s338 = sphi 0, %s337
    %s354 = sphi 0, %s338
  $region4: #{wavlm_encoder_forward.14} parent=0 // loop_header_branch
    %23 = sbr.rel (%p21) target = $region8
  $region5: #{wavlm_encoder_forward.14} parent=0 // loop_body
    %s25 = ssub.s32 %s20, 1
    %s26 = ssub.s32 %s20, 2
    %s27 = sadd.s32 %s20, 1
    %s28 = ssub.s32 %s20, %s27
    %p29 = scmp.eq.s32.totalorder %s28, 0
    %s31 = sadd.s32 %s30, 1
    %s32 = scalar_select %p29, %s30, %s31
    %p35 = pneg %p29
    %p36 = scmp.eq.s32.totalorder %s20, 1
    %p37 = por %p35, %p36
    %p38 = scmp.ne.s32.totalorder %s30, %s33
    %p39 = scmp.eq.s32.totalorder %s20, 0
    %p40 = por %p38, %p39
    %p41 = scmp.ne.s32.totalorder %s30, %s33
    %p42 = scmp.eq.s32.totalorder %s25, 1
    %p43 = por %p41, %p42
    %p44 = scmp.ne.s32.totalorder %s33, %s34
    %p45 = scmp.eq.s32.totalorder %s25, 0
    %p46 = por %p44, %p45
    %p47 = scmp.ne.s32.totalorder %s33, %s34
    %p48 = scmp.eq.s32.totalorder %s26, 1
    %p49 = por %p47, %p48
    %p51 = scmp.ne.s32.totalorder %s34, %s50
    %p52 = scmp.eq.s32.totalorder %s26, 0
    %p53 = por %p51, %p52
    %s54 = ssub.s32 %s20, %s27
    %p55 = scmp.eq.s32.totalorder %s54, 0
    %s57 = sadd.s32 %s56, 1
    %s58 = scalar_select %p55, %s56, %s57
    %p61 = pneg %p55
    %p62 = scmp.eq.s32.totalorder %s20, 1
    %p63 = por %p61, %p62
    %p64 = scmp.ne.s32.totalorder %s56, %s59
    %p65 = scmp.eq.s32.totalorder %s20, 0
    %p66 = por %p64, %p65
    %p67 = scmp.ne.s32.totalorder %s56, %s59
    %p68 = scmp.eq.s32.totalorder %s25, 1
    %p69 = por %p67, %p68
    %p70 = scmp.ne.s32.totalorder %s59, %s60
    %p71 = scmp.eq.s32.totalorder %s25, 0
    %p72 = por %p70, %p71
    %p73 = scmp.ne.s32.totalorder %s59, %s60
    %p74 = scmp.eq.s32.totalorder %s26, 1
    %p75 = por %p73, %p74
    %p77 = scmp.ne.s32.totalorder %s60, %s76
    %p78 = scmp.eq.s32.totalorder %s26, 0
    %p79 = por %p77, %p78
    %s81 = sadd.s32 %s80, 1
    %p84 = scmp.eq.s32.totalorder %s20, 1
    %p85 = scmp.ne.s32.totalorder %s80, %s82
    %p86 = scmp.eq.s32.totalorder %s20, 0
    %p87 = por %p85, %p86
    %p88 = scmp.ne.s32.totalorder %s80, %s82
    %p89 = scmp.eq.s32.totalorder %s25, 1
    %p90 = por %p88, %p89
    %p91 = scmp.ne.s32.totalorder %s82, %s83
    %p92 = scmp.eq.s32.totalorder %s25, 0
    %p93 = por %p91, %p92
    %p94 = scmp.ne.s32.totalorder %s82, %s83
    %p95 = scmp.eq.s32.totalorder %s26, 1
    %p96 = por %p94, %p95
    %p98 = scmp.ne.s32.totalorder %s83, %s97
    %p99 = scmp.eq.s32.totalorder %s26, 0
    %p100 = por %p98, %p99
    %s102 = sadd.s32 %s101, 1
    %p105 = scmp.eq.s32.totalorder %s20, 1
    %p106 = scmp.ne.s32.totalorder %s101, %s103
    %p107 = scmp.eq.s32.totalorder %s20, 0
    %p108 = por %p106, %p107
    %p109 = scmp.ne.s32.totalorder %s101, %s103
    %p110 = scmp.eq.s32.totalorder %s25, 1
    %p111 = por %p109, %p110
    %p112 = scmp.ne.s32.totalorder %s103, %s104
    %p113 = scmp.eq.s32.totalorder %s25, 0
    %p114 = por %p112, %p113
    %p115 = scmp.ne.s32.totalorder %s103, %s104
    %p116 = scmp.eq.s32.totalorder %s26, 1
    %p117 = por %p115, %p116
    %p119 = scmp.ne.s32.totalorder %s104, %s118
    %p120 = scmp.eq.s32.totalorder %s26, 0
    %p121 = por %p119, %p120
    %s123 = sadd.s32 %s122, 1
    %p126 = scmp.eq.s32.totalorder %s20, 1
    %p127 = scmp.ne.s32.totalorder %s122, %s124
    %p128 = scmp.eq.s32.totalorder %s20, 0
    %p129 = por %p127, %p128
    %p130 = scmp.ne.s32.totalorder %s122, %s124
    %p131 = scmp.eq.s32.totalorder %s25, 1
    %p132 = por %p130, %p131
    %p133 = scmp.ne.s32.totalorder %s124, %s125
    %p134 = scmp.eq.s32.totalorder %s25, 0
    %p135 = por %p133, %p134
    %p136 = scmp.ne.s32.totalorder %s124, %s125
    %p137 = scmp.eq.s32.totalorder %s26, 1
    %p138 = por %p136, %p137
    %p140 = scmp.ne.s32.totalorder %s125, %s139
    %p141 = scmp.eq.s32.totalorder %s26, 0
    %p142 = por %p140, %p141
    %s144 = sadd.s32 %s143, 1
    %p147 = scmp.eq.s32.totalorder %s20, 1
    %p148 = scmp.ne.s32.totalorder %s143, %s145
    %p149 = scmp.eq.s32.totalorder %s20, 0
    %p150 = por %p148, %p149
    %p151 = scmp.ne.s32.totalorder %s143, %s145
    %p152 = scmp.eq.s32.totalorder %s25, 1
    %p153 = por %p151, %p152
    %p154 = scmp.ne.s32.totalorder %s145, %s146
    %p155 = scmp.eq.s32.totalorder %s25, 0
    %p156 = por %p154, %p155
    %p157 = scmp.ne.s32.totalorder %s145, %s146
    %p158 = scmp.eq.s32.totalorder %s26, 1
    %p159 = por %p157, %p158
    %p161 = scmp.ne.s32.totalorder %s146, %s160
    %p162 = scmp.eq.s32.totalorder %s26, 0
    %p163 = por %p161, %p162
    %s165 = sadd.s32 %s164, 1
    %p168 = scmp.eq.s32.totalorder %s20, 1
    %p169 = scmp.ne.s32.totalorder %s164, %s166
    %p170 = scmp.eq.s32.totalorder %s20, 0
    %p171 = por %p169, %p170
    %p172 = scmp.ne.s32.totalorder %s164, %s166
    %p173 = scmp.eq.s32.totalorder %s25, 1
    %p174 = por %p172, %p173
    %p175 = scmp.ne.s32.totalorder %s166, %s167
    %p176 = scmp.eq.s32.totalorder %s25, 0
    %p177 = por %p175, %p176
    %p178 = scmp.ne.s32.totalorder %s166, %s167
    %p179 = scmp.eq.s32.totalorder %s26, 1
    %p180 = por %p178, %p179
    %p182 = scmp.ne.s32.totalorder %s167, %s181
    %p183 = scmp.eq.s32.totalorder %s26, 0
    %p184 = por %p182, %p183
    %s186 = sadd.s32 %s185, 1
    %p189 = scmp.eq.s32.totalorder %s20, 1
    %p190 = scmp.ne.s32.totalorder %s185, %s187
    %p191 = scmp.eq.s32.totalorder %s20, 0
    %p192 = por %p190, %p191
    %p193 = scmp.ne.s32.totalorder %s185, %s187
    %p194 = scmp.eq.s32.totalorder %s25, 1
    %p195 = por %p193, %p194
    %p196 = scmp.ne.s32.totalorder %s187, %s188
    %p197 = scmp.eq.s32.totalorder %s25, 0
    %p198 = por %p196, %p197
    %p199 = scmp.ne.s32.totalorder %s187, %s188
    %p200 = scmp.eq.s32.totalorder %s26, 1
    %p201 = por %p199, %p200
    %p203 = scmp.ne.s32.totalorder %s188, %s202
    %p204 = scmp.eq.s32.totalorder %s26, 0
    %p205 = por %p203, %p204
    %s207 = sadd.s32 %s206, 1
    %p210 = scmp.eq.s32.totalorder %s20, 1
    %p211 = scmp.ne.s32.totalorder %s206, %s208
    %p212 = scmp.eq.s32.totalorder %s20, 0
    %p213 = por %p211, %p212
    %p214 = scmp.ne.s32.totalorder %s206, %s208
    %p215 = scmp.eq.s32.totalorder %s25, 1
    %p216 = por %p214, %p215
    %p217 = scmp.ne.s32.totalorder %s208, %s209
    %p218 = scmp.eq.s32.totalorder %s25, 0
    %p219 = por %p217, %p218
    %p220 = scmp.ne.s32.totalorder %s208, %s209
    %p221 = scmp.eq.s32.totalorder %s26, 1
    %p222 = por %p220, %p221
    %p224 = scmp.ne.s32.totalorder %s209, %s223
    %p225 = scmp.eq.s32.totalorder %s26, 0
    %p226 = por %p224, %p225
    %s228 = sadd.s32 %s227, 1
    %p231 = scmp.eq.s32.totalorder %s20, 1
    %p232 = scmp.ne.s32.totalorder %s227, %s229
    %p233 = scmp.eq.s32.totalorder %s20, 0
    %p234 = por %p232, %p233
    %p235 = scmp.ne.s32.totalorder %s227, %s229
    %p236 = scmp.eq.s32.totalorder %s25, 1
    %p237 = por %p235, %p236
    %p238 = scmp.ne.s32.totalorder %s229, %s230
    %p239 = scmp.eq.s32.totalorder %s25, 0
    %p240 = por %p238, %p239
    %p241 = scmp.ne.s32.totalorder %s229, %s230
    %p242 = scmp.eq.s32.totalorder %s26, 1
    %p243 = por %p241, %p242
    %p245 = scmp.ne.s32.totalorder %s230, %s244
    %p246 = scmp.eq.s32.totalorder %s26, 0
    %p247 = por %p245, %p246
    %s249 = sadd.s32 %s248, 1
    %p252 = scmp.eq.s32.totalorder %s20, 1
    %p253 = scmp.ne.s32.totalorder %s248, %s250
    %p254 = scmp.eq.s32.totalorder %s20, 0
    %p255 = por %p253, %p254
    %p256 = scmp.ne.s32.totalorder %s248, %s250
    %p257 = scmp.eq.s32.totalorder %s25, 1
    %p258 = por %p256, %p257
    %p259 = scmp.ne.s32.totalorder %s250, %s251
    %p260 = scmp.eq.s32.totalorder %s25, 0
    %p261 = por %p259, %p260
    %p262 = scmp.ne.s32.totalorder %s250, %s251
    %p263 = scmp.eq.s32.totalorder %s26, 1
    %p264 = por %p262, %p263
    %p266 = scmp.ne.s32.totalorder %s251, %s265
    %p267 = scmp.eq.s32.totalorder %s26, 0
    %p268 = por %p266, %p267
    %s270 = sadd.s32 %s269, 1
    %p273 = scmp.eq.s32.totalorder %s20, 1
    %p274 = scmp.ne.s32.totalorder %s269, %s271
    %p275 = scmp.eq.s32.totalorder %s20, 0
    %p276 = por %p274, %p275
    %p277 = scmp.ne.s32.totalorder %s269, %s271
    %p278 = scmp.eq.s32.totalorder %s25, 1
    %p279 = por %p277, %p278
    %p280 = scmp.ne.s32.totalorder %s271, %s272
    %p281 = scmp.eq.s32.totalorder %s25, 0
    %p282 = por %p280, %p281
    %p283 = scmp.ne.s32.totalorder %s271, %s272
    %p284 = scmp.eq.s32.totalorder %s26, 1
    %p285 = por %p283, %p284
    %p287 = scmp.ne.s32.totalorder %s272, %s286
    %p288 = scmp.eq.s32.totalorder %s26, 0
    %p289 = por %p287, %p288
    %s291 = sadd.s32 %s290, 1
    %p294 = scmp.eq.s32.totalorder %s20, 1
    %p295 = scmp.ne.s32.totalorder %s290, %s292
    %p296 = scmp.eq.s32.totalorder %s20, 0
    %p297 = por %p295, %p296
    %p298 = scmp.ne.s32.totalorder %s290, %s292
    %p299 = scmp.eq.s32.totalorder %s25, 1
    %p300 = por %p298, %p299
    %p301 = scmp.ne.s32.totalorder %s292, %s293
    %p302 = scmp.eq.s32.totalorder %s25, 0
    %p303 = por %p301, %p302
    %p304 = scmp.ne.s32.totalorder %s292, %s293
    %p305 = scmp.eq.s32.totalorder %s26, 1
    %p306 = por %p304, %p305
    %p308 = scmp.ne.s32.totalorder %s293, %s307
    %p309 = scmp.eq.s32.totalorder %s26, 0
    %p310 = por %p308, %p309
    %s312 = sadd.s32 %s311, 1
    %p315 = scmp.eq.s32.totalorder %s20, 1
    %p316 = scmp.ne.s32.totalorder %s311, %s313
    %p317 = scmp.eq.s32.totalorder %s20, 0
    %p318 = por %p316, %p317
    %p319 = scmp.ne.s32.totalorder %s311, %s313
    %p320 = scmp.eq.s32.totalorder %s25, 1
    %p321 = por %p319, %p320
    %p322 = scmp.ne.s32.totalorder %s313, %s314
    %p323 = scmp.eq.s32.totalorder %s25, 0
    %p324 = por %p322, %p323
    %p325 = scmp.ne.s32.totalorder %s313, %s314
    %p326 = scmp.eq.s32.totalorder %s26, 1
    %p327 = por %p325, %p326
    %p329 = scmp.ne.s32.totalorder %s314, %s328
    %p330 = scmp.eq.s32.totalorder %s26, 0
    %p331 = por %p329, %p330
    %s332 = ssub.s32 %s20, %s27
    %p333 = scmp.eq.s32.totalorder %s332, 0
    %s335 = sadd.s32 %s334, 1
    %s336 = scalar_select %p333, %s334, %s335
    %p339 = pneg %p333
    %p340 = scmp.eq.s32.totalorder %s20, 1
    %p341 = por %p339, %p340
    %p342 = scmp.ne.s32.totalorder %s334, %s337
    %p343 = scmp.eq.s32.totalorder %s20, 0
    %p344 = por %p342, %p343
    %p345 = scmp.ne.s32.totalorder %s334, %s337
    %p346 = scmp.eq.s32.totalorder %s25, 1
    %p347 = por %p345, %p346
    %p348 = scmp.ne.s32.totalorder %s337, %s338
    %p349 = scmp.eq.s32.totalorder %s25, 0
    %p350 = por %p348, %p349
    %p351 = scmp.ne.s32.totalorder %s337, %s338
    %p352 = scmp.eq.s32.totalorder %s26, 1
    %p353 = por %p351, %p352
    %p355 = scmp.ne.s32.totalorder %s338, %s354
    %p356 = scmp.eq.s32.totalorder %s26, 0
    %p357 = por %p355, %p356
    %p358 = scmp.le.s32.totalorder 1, %s20
    %p359 = scmp.lt.s32.totalorder %s20, 3
    %p360 = pnand %p358, %p359
    %p361 = pneg %p360
    // Predicated region
    $region9: #{wavlm_encoder_forward.14} parent=5 // pred_check
      _
    $region10: #{wavlm_encoder_forward.14} parent=5 // pred_check_branch
      %363 = sbr.rel (%p360) target = $region12
    $region11: #{wavlm_encoder_forward.14} parent=5 // pred_region
      %s364 = ssub.s32 %s20, 1
      // Predicated region
      $region13: #{wavlm_encoder_forward.14} parent=11 // pred_check
        %p365 = pneg %p93
      $region14: #{wavlm_encoder_forward.14} parent=11 // pred_check_branch
        %367 = sbr.rel (%p365) target = $region16
      $region15: #{wavlm_encoder_forward.14} parent=11 // pred_region
        _
      $region16: #{wavlm_encoder_forward.14} parent=11 // pred_fallthru
        _
      // Predicated region
      $region17: #{wavlm_encoder_forward.14} parent=11 // pred_check
        %p368 = pneg %p114
      $region18: #{wavlm_encoder_forward.14} parent=11 // pred_check_branch
        %370 = sbr.rel (%p368) target = $region20
      $region19: #{wavlm_encoder_forward.14} parent=11 // pred_region
        _
      $region20: #{wavlm_encoder_forward.14} parent=11 // pred_fallthru
        _
      // Predicated region
      $region21: #{wavlm_encoder_forward.14} parent=11 // pred_check
        %p371 = pneg %p135
      $region22: #{wavlm_encoder_forward.14} parent=11 // pred_check_branch
        %373 = sbr.rel (%p371) target = $region24
      $region23: #{wavlm_encoder_forward.14} parent=11 // pred_region
        _
      $region24: #{wavlm_encoder_forward.14} parent=11 // pred_fallthru
        _
      // Predicated region
      $region25: #{wavlm_encoder_forward.14} parent=11 // pred_check
        %p374 = pneg %p156
      $region26: #{wavlm_encoder_forward.14} parent=11 // pred_check_branch
        %376 = sbr.rel (%p374) target = $region28
      $region27: #{wavlm_encoder_forward.14} parent=11 // pred_region
        _
      $region28: #{wavlm_encoder_forward.14} parent=11 // pred_fallthru
        _
      // Predicated region
      $region29: #{wavlm_encoder_forward.14} parent=11 // pred_check
        %p377 = pneg %p177
      $region30: #{wavlm_encoder_forward.14} parent=11 // pred_check_branch
        %379 = sbr.rel (%p377) target = $region32
      $region31: #{wavlm_encoder_forward.14} parent=11 // pred_region
        _
      $region32: #{wavlm_encoder_forward.14} parent=11 // pred_fallthru
        _
      // Predicated region
      $region33: #{wavlm_encoder_forward.14} parent=11 // pred_check
        %p380 = pneg %p198
      $region34: #{wavlm_encoder_forward.14} parent=11 // pred_check_branch
        %382 = sbr.rel (%p380) target = $region36
      $region35: #{wavlm_encoder_forward.14} parent=11 // pred_region
        _
      $region36: #{wavlm_encoder_forward.14} parent=11 // pred_fallthru
        _
      // Predicated region
      $region37: #{wavlm_encoder_forward.14} parent=11 // pred_check
        %p383 = pneg %p219
      $region38: #{wavlm_encoder_forward.14} parent=11 // pred_check_branch
        %385 = sbr.rel (%p383) target = $region40
      $region39: #{wavlm_encoder_forward.14} parent=11 // pred_region
        _
      $region40: #{wavlm_encoder_forward.14} parent=11 // pred_fallthru
        _
      // Predicated region
      $region41: #{wavlm_encoder_forward.14} parent=11 // pred_check
        %p386 = pneg %p240
      $region42: #{wavlm_encoder_forward.14} parent=11 // pred_check_branch
        %388 = sbr.rel (%p386) target = $region44
      $region43: #{wavlm_encoder_forward.14} parent=11 // pred_region
        _
      $region44: #{wavlm_encoder_forward.14} parent=11 // pred_fallthru
        _
      // Predicated region
      $region45: #{wavlm_encoder_forward.14} parent=11 // pred_check
        %p389 = pneg %p261
      $region46: #{wavlm_encoder_forward.14} parent=11 // pred_check_branch
        %391 = sbr.rel (%p389) target = $region48
      $region47: #{wavlm_encoder_forward.14} parent=11 // pred_region
        _
      $region48: #{wavlm_encoder_forward.14} parent=11 // pred_fallthru
        _
      // Predicated region
      $region49: #{wavlm_encoder_forward.14} parent=11 // pred_check
        %p392 = pneg %p282
      $region50: #{wavlm_encoder_forward.14} parent=11 // pred_check_branch
        %394 = sbr.rel (%p392) target = $region52
      $region51: #{wavlm_encoder_forward.14} parent=11 // pred_region
        _
      $region52: #{wavlm_encoder_forward.14} parent=11 // pred_fallthru
        _
      // Predicated region
      $region53: #{wavlm_encoder_forward.14} parent=11 // pred_check
        %p395 = pneg %p303
      $region54: #{wavlm_encoder_forward.14} parent=11 // pred_check_branch
        %397 = sbr.rel (%p395) target = $region56
      $region55: #{wavlm_encoder_forward.14} parent=11 // pred_region
        _
      $region56: #{wavlm_encoder_forward.14} parent=11 // pred_fallthru
        _
      // Predicated region
      $region57: #{wavlm_encoder_forward.14} parent=11 // pred_check
        %p398 = pneg %p324
      $region58: #{wavlm_encoder_forward.14} parent=11 // pred_check_branch
        %400 = sbr.rel (%p398) target = $region60
      $region59: #{wavlm_encoder_forward.14} parent=11 // pred_region
        _
      $region60: #{wavlm_encoder_forward.14} parent=11 // pred_fallthru
        _
    $region12: #{wavlm_encoder_forward.14} parent=5 // pred_fallthru
      _
    %p401 = scmp.lt.s32.totalorder %s20, 2
    // Predicated region
    $region61: #{wavlm_encoder_forward.14} parent=5 // pred_check
      %p402 = pneg %p401
    $region62: #{wavlm_encoder_forward.14} parent=5 // pred_check_branch
      %404 = sbr.rel (%p402) target = $region64
    $region63: #{wavlm_encoder_forward.14} parent=5 // pred_region
      // Predicated region
      $region65: #{wavlm_encoder_forward.14} parent=63 // pred_check
        %p405 = pneg %p40
      $region66: #{wavlm_encoder_forward.14} parent=63 // pred_check_branch
        %407 = sbr.rel (%p405) target = $region68
      $region67: #{wavlm_encoder_forward.14} parent=63 // pred_region
        %p408 = scmp.lt.s32.totalorder %s20, 1
        %s409 = scalar_select %p408, %s20, 1
        %s410 = smul.addr %s409, 5
        %s411 = smul.addr %s410, 8
        %s412 = scalar_lea.vmem %s0, %s411
      $region68: #{wavlm_encoder_forward.14} parent=63 // pred_fallthru
        _
      // Predicated region
      $region69: #{wavlm_encoder_forward.14} parent=63 // pred_check
        %p413 = pneg %p66
      $region70: #{wavlm_encoder_forward.14} parent=63 // pred_check_branch
        %415 = sbr.rel (%p413) target = $region72
      $region71: #{wavlm_encoder_forward.14} parent=63 // pred_region
        %p416 = scmp.lt.s32.totalorder %s20, 1
        %s417 = scalar_select %p416, %s20, 1
        %s418 = scalar_lea.vmem %s1, %s417
      $region72: #{wavlm_encoder_forward.14} parent=63 // pred_fallthru
        _
    $region64: #{wavlm_encoder_forward.14} parent=5 // pred_fallthru
      _
    %p419 = scmp.le.s32.totalorder 1, %s20
    %p420 = scmp.lt.s32.totalorder %s20, 3
    %p421 = pnand %p419, %p420
    %p422 = pneg %p421
    // Predicated region
    $region73: #{wavlm_encoder_forward.14} parent=5 // pred_check
      _
    $region74: #{wavlm_encoder_forward.14} parent=5 // pred_check_branch
      %424 = sbr.rel (%p421) target = $region76
    $region75: #{wavlm_encoder_forward.14} parent=5 // pred_region
      %s425 = ssub.s32 %s20, 1
      %p426 = scmp.lt.s32.totalorder %s25, 1
      %s427 = scalar_select %p426, %s25, 1
      %s428 = smul.addr %s427, 5
      %s429 = smul.addr %s428, 8
      %s430 = scalar_lea.vmem %s0, %s429
      %p431 = pneg %p46
      %p432 = pneg %p43
      %p433 = scmp.lt.s32.totalorder %s25, 1
      %s434 = scalar_select %p433, %s25, 1
      %s435 = scalar_lea.vmem %s1, %s434
      %p436 = pneg %p72
      %p437 = pneg %p69
      %p438 = pneg %p93
      %p439 = pneg %p90
      %p440 = pneg %p114
      %p441 = pneg %p111
      %p442 = pneg %p135
      %p443 = pneg %p132
      %p444 = pneg %p156
      %p445 = pneg %p153
      %p446 = pneg %p177
      %p447 = pneg %p174
      %p448 = pneg %p198
      %p449 = pneg %p195
      %p450 = pneg %p219
      %p451 = pneg %p216
      %p452 = pneg %p240
      %p453 = pneg %p237
      %p454 = pneg %p261
      %p455 = pneg %p258
      %p456 = pneg %p282
      %p457 = pneg %p279
      %p458 = pneg %p303
      %p459 = pneg %p300
      %p460 = pneg %p324
      %p461 = pneg %p321
      %p462 = pneg %p350
      %p463 = pneg %p347
      %p464 = scmp.lt.s32.totalorder %s25, 1
      %s465 = scalar_select %p464, %s25, 1
      %s466 = smul.addr %s465, 5
      %s467 = smul.addr %s466, 8
      %s468 = scalar_lea.vmem %s14, %s467
      %p469 = scmp.lt.s32.totalorder %s25, 1
      %s470 = scalar_select %p469, %s25, 1
      %s471 = smul.addr %s470, 5
      %s472 = smul.addr %s471, 8
      %s473 = scalar_lea.vmem %s0, %s472
      %p474 = scmp.lt.s32.totalorder %s25, 1
      %s475 = scalar_select %p474, %s25, 1
      %s476 = scalar_lea.vmem %s1, %s475
      %p477 = scmp.lt.s32.totalorder %s25, 1
      %s478 = scalar_select %p477, %s25, 1
      %s479 = smul.addr %s478, 5
      %s480 = smul.addr %s479, 8
      %s481 = scalar_lea.vmem %s14, %s480
      %v482 = vld [vmem:[%s473] sm:$0xff]
      %v483 = vld [vmem:[%s473 + $0x8] sm:$0xff]
      %v484 = vld [vmem:[%s473 + $0x10] sm:$0xff]
      %v485 = vld [vmem:[%s473 + $0x18] sm:$0xff]
      %v486 = vld [vmem:[%s473 + $0x20] sm:$0x7f]
      %v487 = vld [vmem:[%s476] sm:$0x1]
      %v488 = vld [vmem:[%s2] sm:$0xff]
      %v489 = vld [vmem:[%s2 + $0x8] sm:$0xff]
      %v490 = vld [vmem:[%s2 + $0x10] sm:$0xff]
      %v491 = vld [vmem:[%s2 + $0x18] sm:$0xff]
      %v492 = vld [vmem:[%s2 + $0x20] sm:$0xff]
      %v493 = vld [vmem:[%s2 + $0x28] sm:$0xff]
      %v494 = vld [vmem:[%s2 + $0x30] sm:$0xff]
      %v495 = vld [vmem:[%s2 + $0x38] sm:$0xff]
      %v496 = vld [vmem:[%s2 + $0x40] sm:$0xff]
      %v497 = vld [vmem:[%s2 + $0x48] sm:$0xff]
      %v498 = vld [vmem:[%s2 + $0x50] sm:$0xff]
      %v499 = vld [vmem:[%s2 + $0x58] sm:$0xff]
      %v500 = vld [vmem:[%s2 + $0x60] sm:$0xff]
      %v501 = vld [vmem:[%s2 + $0x68] sm:$0xff]
      %v502 = vld [vmem:[%s2 + $0x70] sm:$0xff]
      %v503 = vld [vmem:[%s2 + $0x78] sm:$0xff]
      %v504 = vld [vmem:[%s3] sm:$0x3]
      %v506 = vlaneseq
      %v507 = vshrl.u32 %v506, 7
      %v508 = vsub.s32 0, %v507
      %v509 = vrot.slane %v504, %v508
      %v510 = vlaneseq
      %v511 = vshrl.u32 %v510, 7
      %v512 = vsub.s32 1, %v511
      %v513 = vrot.slane %v504, %v512
      %vm516 = vcmask 523264
      %v518 = vsel %vm516, %v482, 0
      %v521 = vsel %vm516, %v483, 0
      %v524 = vsel %vm516, %v484, 0
      %v527 = vsel %vm516, %v485, 0
      %v530 = vsel %vm516, %v486, 0
      %532 = vmatprep.subr.mxu0 %v489
      %533 = vmatpush1.msra.mxu0 %v488
      %534 = vmatprep.subr.mxu0 %v491
      %535 = vmatpush1.msra.mxu0 %v490
      %536 = vmatprep.subr.mxu0 %v493
      %537 = vmatpush1.msra.mxu0 %v492
      %538 = vmatprep.subr.mxu0 %v495
      %539 = vmatpush1.msra.mxu0 %v494
      %540 = vmatprep.subr.mxu0 %v497
      %541 = vmatpush1.msra.mxu0 %v496
      %542 = vmatprep.subr.mxu0 %v499
      %543 = vmatpush1.msra.mxu0 %v498
      %544 = vmatprep.subr.mxu0 %v501
      %545 = vmatpush1.msra.mxu0 %v500
      %546 = vmatprep.subr.mxu0 %v503
      %547 = vmatpush1.msra.mxu0 %v502
      %548 = vmatprep.subr.mxu0 0.0
      %549 = vmatpush1.msra.mxu0 0.0
      %550 = vmatprep.subr.mxu0 0.0
      %551 = vmatpush1.msra.mxu0 0.0
      %552 = vmatprep.subr.mxu0 0.0
      %553 = vmatpush1.msra.mxu0 0.0
      %554 = vmatprep.subr.mxu0 0.0
      %555 = vmatpush1.msra.mxu0 0.0
      %556 = vmatprep.subr.mxu0 0.0
      %557 = vmatpush1.msra.mxu0 0.0
      %558 = vmatprep.subr.mxu0 0.0
      %559 = vmatpush1.msra.mxu0 0.0
      %560 = vmatprep.subr.mxu0 0.0
      %561 = vmatpush1.msra.mxu0 0.0
      %562 = vmatprep.subr.mxu0 0.0
      %563 = vmatpush1.msra.mxu0 0.0
      %564 = vmatprep.subr.mxu0 0.0
      %565 = vmatpush1.msra.mxu0 0.0
      %566 = vmatprep.subr.mxu0 0.0
      %567 = vmatpush1.msra.mxu0 0.0
      %568 = vmatprep.subr.mxu0 0.0
      %569 = vmatpush1.msra.mxu0 0.0
      %570 = vmatprep.subr.mxu0 0.0
      %571 = vmatpush1.msra.mxu0 0.0
      %572 = vmatprep.subr.mxu0 0.0
      %573 = vmatpush1.msra.mxu0 0.0
      %574 = vmatprep.subr.mxu0 0.0
      %575 = vmatpush1.msra.mxu0 0.0
      %576 = vmatprep.subr.mxu0 0.0
      %577 = vmatpush1.msra.mxu0 0.0
      %578 = vmatprep.subr.mxu0 0.0
      %579 = vmatpush1.msra.mxu0 0.0
      %580 = vmatprep.subr.mxu0 0.0
      %581 = vmatpush1.msra.mxu0 0.0
      %582 = vmatprep.subr.mxu0 0.0
      %583 = vmatpush1.msra.mxu0 0.0
      %584 = vmatprep.subr.mxu0 0.0
      %585 = vmatpush1.msra.mxu0 0.0
      %586 = vmatprep.subr.mxu0 0.0
      %587 = vmatpush1.msra.mxu0 0.0
      %588 = vmatprep.subr.mxu0 0.0
      %589 = vmatpush1.msra.mxu0 0.0
      %590 = vmatprep.subr.mxu0 0.0
      %591 = vmatpush1.msra.mxu0 0.0
      %592 = vmatprep.subr.mxu0 0.0
      %593 = vmatpush1.msra.mxu0 0.0
      %594 = vmatprep.subr.mxu0 0.0
      %595 = vmatpush1.msra.mxu0 0.0
      %596 = vmatprep.mubr.f32.mxu0 0.0
      %597 = vmatmul.mubr.f32.gmra.mrb[0].mxu0 %v518
      %v598 = vpop.f32.mrb[0].mxu0
      %v599 = vadd.f32 %v509, %v598
      %v600 = vpop.f32.mrb[0].mxu0
      %v601 = vadd.f32 %v513, %v600
      %602 = vmatprep.mubr.f32.mxu0 0.0
      %603 = vmatmul.mubr.f32.gmra.mrb[0].mxu0 %v521
      %v604 = vpop.f32.mrb[0].mxu0
      %v605 = vadd.f32 %v509, %v604
      %v606 = vpop.f32.mrb[0].mxu0
      %v607 = vadd.f32 %v513, %v606
      %608 = vmatprep.mubr.f32.mxu0 0.0
      %609 = vmatmul.mubr.f32.gmra.mrb[0].mxu0 %v524
      %v610 = vpop.f32.mrb[0].mxu0
      %v611 = vadd.f32 %v509, %v610
      %v612 = vpop.f32.mrb[0].mxu0
      %v613 = vadd.f32 %v513, %v612
      %614 = vmatprep.mubr.f32.mxu0 0.0
      %615 = vmatmul.mubr.f32.gmra.mrb[0].mxu0 %v527
      %v616 = vpop.f32.mrb[0].mxu0
      %v617 = vadd.f32 %v509, %v616
      %v618 = vpop.f32.mrb[0].mxu0
      %v619 = vadd.f32 %v513, %v618
      %620 = vmatprep.mubr.f32.mxu0 0.0
      %621 = vmatmul.mubr.f32.gmra.mrb[0].mxu0 %v530
      %v622 = vpop.f32.mrb[0].mxu0
      %v623 = vadd.f32 %v509, %v622
      %v624 = vpop.f32.mrb[0].mxu0
      %v625 = vadd.f32 %v513, %v624
      %626 = vdwg.mxu0
      %v627 = vld [vmem:[%s4] sm:$0xff]
      %v628 = vld [vmem:[%s4 + $0x8] sm:$0xff]
      %v629 = vld [vmem:[%s4 + $0x10] sm:$0xff]
      %v630 = vld [vmem:[%s4 + $0x18] sm:$0xff]
      %v631 = vld [vmem:[%s4 + $0x20] sm:$0xff]
      %v632 = vld [vmem:[%s4 + $0x28] sm:$0xff]
      %v633 = vld [vmem:[%s4 + $0x30] sm:$0xff]
      %v634 = vld [vmem:[%s4 + $0x38] sm:$0xff]
      %v635 = vmul.f32 %v599, 0.25
      %v636 = vmul.f32 %v605, 0.25
      %v637 = vmul.f32 %v611, 0.25
      %v638 = vmul.f32 %v617, 0.25
      %v639 = vmul.f32 %v623, 0.25
      %v641 = vlaneseq
      %v642 = vshrl.u32 %v641, 7
      %v643 = vsub.s32 0, %v642
      %v644 = vrot.slane %v487, %v643
      %651 = vrot.lane.b32.xlu0 %v599, 64
      %v652 = vpop.permute.xlu0 %651
      %653 = vrot.lane.b32.xlu0 %v605, 64
      %v654 = vpop.permute.xlu0 %653
      %655 = vrot.lane.b32.xlu0 %v611, 64
      %v656 = vpop.permute.xlu0 %655
      %657 = vrot.lane.b32.xlu0 %v617, 64
      %v658 = vpop.permute.xlu0 %657
      %659 = vrot.lane.b32.xlu0 %v623, 64
      %v660 = vpop.permute.xlu0 %659
      %vm661 = vcmask 130048
      %v663 = vsel %vm661, %v635, 0
      %v666 = vsel %vm661, %v636, 0
      %v669 = vsel %vm661, %v637, 0
      %v672 = vsel %vm661, %v638, 0
      %v675 = vsel %vm661, %v639, 0
      %v677 = vsel %vm661, %v652, 0
      %v679 = vsel %vm661, %v654, 0
      %v681 = vsel %vm661, %v656, 0
      %v683 = vsel %vm661, %v658, 0
      %v685 = vsel %vm661, %v660, 0
      %687 = vmatprep.subr.mxu0 0.0
      %688 = vmatpush1.xpose.msra.mxu0 %v677
      %689 = vmatprep.subr.mxu0 0.0
      %690 = vmatpush1.xpose.msra.mxu0 %v679
      %691 = vmatprep.subr.mxu0 0.0
      %692 = vmatpush1.xpose.msra.mxu0 %v681
      %693 = vmatprep.subr.mxu0 0.0
      %694 = vmatpush1.xpose.msra.mxu0 %v683
      %695 = vmatprep.subr.mxu0 0.0
      %696 = vmatpush1.xpose.msra.mxu0 %v685
      %697 = vmatprep.subr.mxu0 0.0
      %698 = vmatpush1.xpose.msra.mxu0 0.0
      %699 = vmatprep.subr.mxu0 0.0
      %700 = vmatpush1.xpose.msra.mxu0 0.0
      %701 = vmatprep.subr.mxu0 0.0
      %702 = vmatpush1.xpose.msra.mxu0 0.0
      %703 = vmatprep.subr.mxu0 0.0
      %704 = vmatpush1.xpose.msra.mxu0 0.0
      %705 = vmatprep.subr.mxu0 0.0
      %706 = vmatpush1.xpose.msra.mxu0 0.0
      %707 = vmatprep.subr.mxu0 0.0
      %708 = vmatpush1.xpose.msra.mxu0 0.0
      %709 = vmatprep.subr.mxu0 0.0
      %710 = vmatpush1.xpose.msra.mxu0 0.0
      %711 = vmatprep.subr.mxu0 0.0
      %712 = vmatpush1.xpose.msra.mxu0 0.0
      %713 = vmatprep.subr.mxu0 0.0
      %714 = vmatpush1.xpose.msra.mxu0 0.0
      %715 = vmatprep.subr.mxu0 0.0
      %716 = vmatpush1.xpose.msra.mxu0 0.0
      %717 = vmatprep.subr.mxu0 0.0
      %718 = vmatpush1.xpose.msra.mxu0 0.0
      %719 = vmatprep.subr.mxu0 0.0
      %720 = vmatpush1.xpose.msra.mxu0 0.0
      %721 = vmatprep.subr.mxu0 0.0
      %722 = vmatpush1.xpose.msra.mxu0 0.0
      %723 = vmatprep.subr.mxu0 0.0
      %724 = vmatpush1.xpose.msra.mxu0 0.0
      %725 = vmatprep.subr.mxu0 0.0
      %726 = vmatpush1.xpose.msra.mxu0 0.0
      %727 = vmatprep.subr.mxu0 0.0
      %728 = vmatpush1.xpose.msra.mxu0 0.0
      %729 = vmatprep.subr.mxu0 0.0
      %730 = vmatpush1.xpose.msra.mxu0 0.0
      %731 = vmatprep.subr.mxu0 0.0
      %732 = vmatpush1.xpose.msra.mxu0 0.0
      %733 = vmatprep.subr.mxu0 0.0
      %734 = vmatpush1.xpose.msra.mxu0 0.0
      %735 = vmatprep.subr.mxu0 0.0
      %736 = vmatpush1.xpose.msra.mxu0 0.0
      %737 = vmatprep.subr.mxu0 0.0
      %738 = vmatpush1.xpose.msra.mxu0 0.0
      %739 = vmatprep.subr.mxu0 0.0
      %740 = vmatpush1.xpose.msra.mxu0 0.0
      %741 = vmatprep.subr.mxu0 0.0
      %742 = vmatpush1.xpose.msra.mxu0 0.0
      %743 = vmatprep.subr.mxu0 0.0
      %744 = vmatpush1.xpose.msra.mxu0 0.0
      %745 = vmatprep.subr.mxu0 0.0
      %746 = vmatpush1.xpose.msra.mxu0 0.0
      %747 = vmatprep.subr.mxu0 0.0
      %748 = vmatpush1.xpose.msra.mxu0 0.0
      %749 = vmatprep.subr.mxu0 0.0
      %750 = vmatpush1.xpose.msra.mxu0 0.0
      %751 = vmatprep.mubr.f32.mxu0 0.0
      %752 = vmatmul.mubr.f32.gmra.mrb[0].mxu0 %v663
      %v753 = vpop.f32.mrb[0].mxu0
      %v754 = vadd.f32 %v644, %v753
      %v755 = vpop.f32.mrb[0].mxu0
      %756 = vmatprep.mubr.f32.mxu0 0.0
      %757 = vmatmul.mubr.f32.gmra.mrb[0].mxu0 %v666
      %v758 = vpop.f32.mrb[0].mxu0
      %v759 = vadd.f32 %v644, %v758
      %v760 = vpop.f32.mrb[0].mxu0
      %761 = vmatprep.mubr.f32.mxu0 0.0
      %762 = vmatmul.mubr.f32.gmra.mrb[0].mxu0 %v669
      %v763 = vpop.f32.mrb[0].mxu0
      %v764 = vadd.f32 %v644, %v763
      %v765 = vpop.f32.mrb[0].mxu0
      %766 = vmatprep.mubr.f32.mxu0 0.0
      %767 = vmatmul.mubr.f32.gmra.mrb[0].mxu0 %v672
      %v768 = vpop.f32.mrb[0].mxu0
      %v769 = vadd.f32 %v644, %v768
      %v770 = vpop.f32.mrb[0].mxu0
      %771 = vmatprep.mubr.f32.mxu0 0.0
      %772 = vmatmul.mubr.f32.gmra.mrb[0].mxu0 %v675
      %v773 = vpop.f32.mrb[0].mxu0
      %v774 = vadd.f32 %v644, %v773
      %v775 = vpop.f32.mrb[0].mxu0
      %776 = vdwg.mxu0
      %vm777 = vcmask 318464
      %v778 = vsel %vm777, %v754, -inf
      %779 = vmax.xlane.f32.xlu0 %v778
      %v780 = vpop.xlane.xlu0 %779
      %v781 = vsel %vm777, %v759, -inf
      %782 = vmax.xlane.f32.xlu0 %v781
      %v783 = vpop.xlane.xlu0 %782
      %v784 = vsel %vm777, %v764, -inf
      %785 = vmax.xlane.f32.xlu0 %v784
      %v786 = vpop.xlane.xlu0 %785
      %v787 = vsel %vm777, %v769, -inf
      %788 = vmax.xlane.f32.xlu0 %v787
      %v789 = vpop.xlane.xlu0 %788
      %vm790 = vcmask 317440
      %v791 = vsel %vm790, %v774, -inf
      %792 = vmax.xlane.f32.xlu0 %v791
      %v793 = vpop.xlane.xlu0 %792
      %v794 = vsub.f32 %v754, %v780
      %v795 = vsub.f32 %v759, %v783
      %v796 = vsub.f32 %v764, %v786
      %v797 = vsub.f32 %v769, %v789
      %v798 = vsub.f32 %v774, %v793
      %v799 = vmul.f32 %v794, 1.442695
      %v800 = vpow.pop %v799
      %v801 = vmul.f32 %v795, 1.442695
      %v802 = vpow.pop %v801
      %v803 = vmul.f32 %v796, 1.442695
      %v804 = vpow.pop %v803
      %v805 = vmul.f32 %v797, 1.442695
      %v806 = vpow.pop %v805
      %v807 = vmul.f32 %v798, 1.442695
      %v808 = vpow.pop %v807
      %v809 = vsel %vm777, %v800, 0.0
      %810 = vadd.xlane.f32.xlu0 %v809
      %v811 = vpop.xlane.xlu0 %810
      %v812 = vsel %vm777, %v802, 0.0
      %813 = vadd.xlane.f32.xlu0 %v812
      %v814 = vpop.xlane.xlu0 %813
      %v815 = vsel %vm777, %v804, 0.0
      %816 = vadd.xlane.f32.xlu0 %v815
      %v817 = vpop.xlane.xlu0 %816
      %v818 = vsel %vm777, %v806, 0.0
      %819 = vadd.xlane.f32.xlu0 %v818
      %v820 = vpop.xlane.xlu0 %819
      %v821 = vsel %vm790, %v808, 0.0
      %822 = vadd.xlane.f32.xlu0 %v821
      %v823 = vpop.xlane.xlu0 %822
      %v824 = vrcp.pop %v811
      %v825 = vmul.f32 %v800, %v824
      %v826 = vrcp.pop %v814
      %v827 = vmul.f32 %v802, %v826
      %v828 = vrcp.pop %v817
      %v829 = vmul.f32 %v804, %v828
      %v830 = vrcp.pop %v820
      %v831 = vmul.f32 %v806, %v830
      %v832 = vrcp.pop %v823
      %v833 = vmul.f32 %v808, %v832
      %v835 = vsel %vm777, %v825, 0
      %v838 = vsel %vm777, %v827, 0
      %v841 = vsel %vm777, %v829, 0
      %v844 = vsel %vm777, %v831, 0
      %v847 = vsel %vm777, %v833, 0
      %vm849 = vcmask 1046528
      %v851 = vsel %vm849, %v625, 0
      %853 = vmatprep.subr.mxu0 0.0
      %854 = vmatpush1.msra.mxu0 %v601
      %855 = vmatprep.subr.mxu0 0.0
      %856 = vmatpush1.msra.mxu0 %v607
      %857 = vmatprep.subr.mxu0 0.0
      %858 = vmatpush1.msra.mxu0 %v613
      %859 = vmatprep.subr.mxu0 0.0
      %860 = vmatpush1.msra.mxu0 %v619
      %861 = vmatprep.subr.mxu0 0.0
      %862 = vmatpush1.msra.mxu0 %v851
      %863 = vmatprep.subr.mxu0 0.0
      %864 = vmatpush1.msra.mxu0 0.0
      %865 = vmatprep.subr.mxu0 0.0
      %866 = vmatpush1.msra.mxu0 0.0
      %867 = vmatprep.subr.mxu0 0.0
      %868 = vmatpush1.msra.mxu0 0.0
      %869 = vmatprep.subr.mxu0 0.0
      %870 = vmatpush1.msra.mxu0 0.0
      %871 = vmatprep.subr.mxu0 0.0
      %872 = vmatpush1.msra.mxu0 0.0
      %873 = vmatprep.subr.mxu0 0.0
      %874 = vmatpush1.msra.mxu0 0.0
      %875 = vmatprep.subr.mxu0 0.0
      %876 = vmatpush1.msra.mxu0 0.0
      %877 = vmatprep.subr.mxu0 0.0
      %878 = vmatpush1.msra.mxu0 0.0
      %879 = vmatprep.subr.mxu0 0.0
      %880 = vmatpush1.msra.mxu0 0.0
      %881 = vmatprep.subr.mxu0 0.0
      %882 = vmatpush1.msra.mxu0 0.0
      %883 = vmatprep.subr.mxu0 0.0
      %884 = vmatpush1.msra.mxu0 0.0
      %885 = vmatprep.subr.mxu0 0.0
      %886 = vmatpush1.msra.mxu0 0.0
      %887 = vmatprep.subr.mxu0 0.0
      %888 = vmatpush1.msra.mxu0 0.0
      %889 = vmatprep.subr.mxu0 0.0
      %890 = vmatpush1.msra.mxu0 0.0
      %891 = vmatprep.subr.mxu0 0.0
      %892 = vmatpush1.msra.mxu0 0.0
      %893 = vmatprep.subr.mxu0 0.0
      %894 = vmatpush1.msra.mxu0 0.0
      %895 = vmatprep.subr.mxu0 0.0
      %896 = vmatpush1.msra.mxu0 0.0
      %897 = vmatprep.subr.mxu0 0.0
      %898 = vmatpush1.msra.mxu0 0.0
      %899 = vmatprep.subr.mxu0 0.0
      %900 = vmatpush1.msra.mxu0 0.0
      %901 = vmatprep.subr.mxu0 0.0
      %902 = vmatpush1.msra.mxu0 0.0
      %903 = vmatprep.subr.mxu0 0.0
      %904 = vmatpush1.msra.mxu0 0.0
      %905 = vmatprep.subr.mxu0 0.0
      %906 = vmatpush1.msra.mxu0 0.0
      %907 = vmatprep.subr.mxu0 0.0
      %908 = vmatpush1.msra.mxu0 0.0
      %909 = vmatprep.subr.mxu0 0.0
      %910 = vmatpush1.msra.mxu0 0.0
      %911 = vmatprep.subr.mxu0 0.0
      %912 = vmatpush1.msra.mxu0 0.0
      %913 = vmatprep.subr.mxu0 0.0
      %914 = vmatpush1.msra.mxu0 0.0
      %915 = vmatprep.subr.mxu0 0.0
      %916 = vmatpush1.msra.mxu0 0.0
      %917 = vmatprep.mubr.f32.mxu0 0.0
      %918 = vmatmul.mubr.f32.gmra.mrb[0].mxu0 %v835
      %v919 = vpop.f32.mrb[0].mxu0
      %v920 = vadd.f32 0.0, %v919
      %v921 = vpop.f32.mrb[0].mxu0
      %922 = vmatprep.mubr.f32.mxu0 0.0
      %923 = vmatmul.mubr.f32.gmra.mrb[0].mxu0 %v838
      %v924 = vpop.f32.mrb[0].mxu0
      %v925 = vadd.f32 0.0, %v924
      %v926 = vpop.f32.mrb[0].mxu0
      %927 = vmatprep.mubr.f32.mxu0 0.0
      %928 = vmatmul.mubr.f32.gmra.mrb[0].mxu0 %v841
      %v929 = vpop.f32.mrb[0].mxu0
      %v930 = vadd.f32 0.0, %v929
      %v931 = vpop.f32.mrb[0].mxu0
      %932 = vmatprep.mubr.f32.mxu0 0.0
      %933 = vmatmul.mubr.f32.gmra.mrb[0].mxu0 %v844
      %v934 = vpop.f32.mrb[0].mxu0
      %v935 = vadd.f32 0.0, %v934
      %v936 = vpop.f32.mrb[0].mxu0
      %937 = vmatprep.mubr.f32.mxu0 0.0
      %938 = vmatmul.mubr.f32.gmra.mrb[0].mxu0 %v847
      %v939 = vpop.f32.mrb[0].mxu0
      %v940 = vadd.f32 0.0, %v939
      %v941 = vpop.f32.mrb[0].mxu0
      %942 = vdwg.mxu0
      %943 = vrot.lane.b32.xlu0 %v635, 112
      %v944 = vpop.permute.xlu0 %943
      %945 = vrot.lane.b32.xlu0 %v636, 112
      %v946 = vpop.permute.xlu0 %945
      %947 = vrot.lane.b32.xlu0 %v637, 112
      %v948 = vpop.permute.xlu0 %947
      %949 = vrot.lane.b32.xlu0 %v638, 112
      %v950 = vpop.permute.xlu0 %949
      %951 = vrot.lane.b32.xlu0 %v639, 112
      %v952 = vpop.permute.xlu0 %951
      %953 = vrot.lane.b32.xlu0 %v599, 48
      %v954 = vpop.permute.xlu0 %953
      %955 = vrot.lane.b32.xlu0 %v605, 48
      %v956 = vpop.permute.xlu0 %955
      %957 = vrot.lane.b32.xlu0 %v611, 48
      %v958 = vpop.permute.xlu0 %957
      %959 = vrot.lane.b32.xlu0 %v617, 48
      %v960 = vpop.permute.xlu0 %959
      %961 = vrot.lane.b32.xlu0 %v623, 48
      %v962 = vpop.permute.xlu0 %961
      %v963 = vsel %vm661, %v944, 0
      %v965 = vsel %vm661, %v946, 0
      %v967 = vsel %vm661, %v948, 0
      %v969 = vsel %vm661, %v950, 0
      %v971 = vsel %vm661, %v952, 0
      %v973 = vsel %vm661, %v954, 0
      %v975 = vsel %vm661, %v956, 0
      %v977 = vsel %vm661, %v958, 0
      %v979 = vsel %vm661, %v960, 0
      %v981 = vsel %vm661, %v962, 0
      %983 = vmatprep.subr.mxu0 0.0
      %984 = vmatpush1.xpose.msra.mxu0 %v973
      %985 = vmatprep.subr.mxu0 0.0
      %986 = vmatpush1.xpose.msra.mxu0 %v975
      %987 = vmatprep.subr.mxu0 0.0
      %988 = vmatpush1.xpose.msra.mxu0 %v977
      %989 = vmatprep.subr.mxu0 0.0
      %990 = vmatpush1.xpose.msra.mxu0 %v979
      %991 = vmatprep.subr.mxu0 0.0
      %992 = vmatpush1.xpose.msra.mxu0 %v981
      %993 = vmatprep.subr.mxu0 0.0
      %994 = vmatpush1.xpose.msra.mxu0 0.0
      %995 = vmatprep.subr.mxu0 0.0
      %996 = vmatpush1.xpose.msra.mxu0 0.0
      %997 = vmatprep.subr.mxu0 0.0
      %998 = vmatpush1.xpose.msra.mxu0 0.0
      %999 = vmatprep.subr.mxu0 0.0
      %1000 = vmatpush1.xpose.msra.mxu0 0.0
      %1001 = vmatprep.subr.mxu0 0.0
      %1002 = vmatpush1.xpose.msra.mxu0 0.0
      %1003 = vmatprep.subr.mxu0 0.0
      %1004 = vmatpush1.xpose.msra.mxu0 0.0
      %1005 = vmatprep.subr.mxu0 0.0
      %1006 = vmatpush1.xpose.msra.mxu0 0.0
      %1007 = vmatprep.subr.mxu0 0.0
      %1008 = vmatpush1.xpose.msra.mxu0 0.0
      %1009 = vmatprep.subr.mxu0 0.0
      %1010 = vmatpush1.xpose.msra.mxu0 0.0
      %1011 = vmatprep.subr.mxu0 0.0
      %1012 = vmatpush1.xpose.msra.mxu0 0.0
      %1013 = vmatprep.subr.mxu0 0.0
      %1014 = vmatpush1.xpose.msra.mxu0 0.0
      %1015 = vmatprep.subr.mxu0 0.0
      %1016 = vmatpush1.xpose.msra.mxu0 0.0
      %1017 = vmatprep.subr.mxu0 0.0
      %1018 = vmatpush1.xpose.msra.mxu0 0.0
      %1019 = vmatprep.subr.mxu0 0.0
      %1020 = vmatpush1.xpose.msra.mxu0 0.0
      %1021 = vmatprep.subr.mxu0 0.0
      %1022 = vmatpush1.xpose.msra.mxu0 0.0
      %1023 = vmatprep.subr.mxu0 0.0
      %1024 = vmatpush1.xpose.msra.mxu0 0.0
      %1025 = vmatprep.subr.mxu0 0.0
      %1026 = vmatpush1.xpose.msra.mxu0 0.0
      %1027 = vmatprep.subr.mxu0 0.0
      %1028 = vmatpush1.xpose.msra.mxu0 0.0
      %1029 = vmatprep.subr.mxu0 0.0
      %1030 = vmatpush1.xpose.msra.mxu0 0.0
      %1031 = vmatprep.subr.mxu0 0.0
      %1032 = vmatpush1.xpose.msra.mxu0 0.0
      %1033 = vmatprep.subr.mxu0 0.0
      %1034 = vmatpush1.xpose.msra.mxu0 0.0
      %1035 = vmatprep.subr.mxu0 0.0
      %1036 = vmatpush1.xpose.msra.mxu0 0.0
      %1037 = vmatprep.subr.mxu0 0.0
      %1038 = vmatpush1.xpose.msra.mxu0 0.0
      %1039 = vmatprep.subr.mxu0 0.0
      %1040 = vmatpush1.xpose.msra.mxu0 0.0
      %1041 = vmatprep.subr.mxu0 0.0
      %1042 = vmatpush1.xpose.msra.mxu0 0.0
      %1043 = vmatprep.subr.mxu0 0.0
      %1044 = vmatpush1.xpose.msra.mxu0 0.0
      %1045 = vmatprep.subr.mxu0 0.0
      %1046 = vmatpush1.xpose.msra.mxu0 0.0
      %1047 = vmatprep.mubr.f32.mxu0 0.0
      %1048 = vmatmul.mubr.f32.gmra.mrb[0].mxu0 %v963
      %v1049 = vpop.f32.mrb[0].mxu0
      %v1050 = vadd.f32 %v644, %v1049
      %v1051 = vpop.f32.mrb[0].mxu0
      %1052 = vmatprep.mubr.f32.mxu0 0.0
      %1053 = vmatmul.mubr.f32.gmra.mrb[0].mxu0 %v965
      %v1054 = vpop.f32.mrb[0].mxu0
      %v1055 = vadd.f32 %v644, %v1054
      %v1056 = vpop.f32.mrb[0].mxu0
      %1057 = vmatprep.mubr.f32.mxu0 0.0
      %1058 = vmatmul.mubr.f32.gmra.mrb[0].mxu0 %v967
      %v1059 = vpop.f32.mrb[0].mxu0
      %v1060 = vadd.f32 %v644, %v1059
      %v1061 = vpop.f32.mrb[0].mxu0
      %1062 = vmatprep.mubr.f32.mxu0 0.0
      %1063 = vmatmul.mubr.f32.gmra.mrb[0].mxu0 %v969
      %v1064 = vpop.f32.mrb[0].mxu0
      %v1065 = vadd.f32 %v644, %v1064
      %v1066 = vpop.f32.mrb[0].mxu0
      %1067 = vmatprep.mubr.f32.mxu0 0.0
      %1068 = vmatmul.mubr.f32.gmra.mrb[0].mxu0 %v971
      %v1069 = vpop.f32.mrb[0].mxu0
      %v1070 = vadd.f32 %v644, %v1069
      %v1071 = vpop.f32.mrb[0].mxu0
      %1072 = vdwg.mxu0
      %v1073 = vsel %vm777, %v1050, -inf
      %1074 = vmax.xlane.f32.xlu0 %v1073
      %v1075 = vpop.xlane.xlu0 %1074
      %v1076 = vsel %vm777, %v1055, -inf
      %1077 = vmax.xlane.f32.xlu0 %v1076
      %v1078 = vpop.xlane.xlu0 %1077
      %v1079 = vsel %vm777, %v1060, -inf
      %1080 = vmax.xlane.f32.xlu0 %v1079
      %v1081 = vpop.xlane.xlu0 %1080
      %v1082 = vsel %vm777, %v1065, -inf
      %1083 = vmax.xlane.f32.xlu0 %v1082
      %v1084 = vpop.xlane.xlu0 %1083
      %v1085 = vsel %vm790, %v1070, -inf
      %1086 = vmax.xlane.f32.xlu0 %v1085
      %v1087 = vpop.xlane.xlu0 %1086
      %v1088 = vsub.f32 %v1050, %v1075
      %v1089 = vsub.f32 %v1055, %v1078
      %v1090 = vsub.f32 %v1060, %v1081
      %v1091 = vsub.f32 %v1065, %v1084
      %v1092 = vsub.f32 %v1070, %v1087
      %v1093 = vmul.f32 %v1088, 1.442695
      %v1094 = vpow.pop %v1093
      %v1095 = vmul.f32 %v1089, 1.442695
      %v1096 = vpow.pop %v1095
      %v1097 = vmul.f32 %v1090, 1.442695
      %v1098 = vpow.pop %v1097
      %v1099 = vmul.f32 %v1091, 1.442695
      %v1100 = vpow.pop %v1099
      %v1101 = vmul.f32 %v1092, 1.442695
      %v1102 = vpow.pop %v1101
      %v1103 = vsel %vm777, %v1094, 0.0
      %1104 = vadd.xlane.f32.xlu0 %v1103
      %v1105 = vpop.xlane.xlu0 %1104
      %v1106 = vsel %vm777, %v1096, 0.0
      %1107 = vadd.xlane.f32.xlu0 %v1106
      %v1108 = vpop.xlane.xlu0 %1107
      %v1109 = vsel %vm777, %v1098, 0.0
      %1110 = vadd.xlane.f32.xlu0 %v1109
      %v1111 = vpop.xlane.xlu0 %1110
      %v1112 = vsel %vm777, %v1100, 0.0
      %1113 = vadd.xlane.f32.xlu0 %v1112
      %v1114 = vpop.xlane.xlu0 %1113
      %v1115 = vsel %vm790, %v1102, 0.0
      %1116 = vadd.xlane.f32.xlu0 %v1115
      %v1117 = vpop.xlane.xlu0 %1116
      %v1118 = vrcp.pop %v1105
      %v1119 = vmul.f32 %v1094, %v1118
      %v1120 = vrcp.pop %v1108
      %v1121 = vmul.f32 %v1096, %v1120
      %v1122 = vrcp.pop %v1111
      %v1123 = vmul.f32 %v1098, %v1122
      %v1124 = vrcp.pop %v1114
      %v1125 = vmul.f32 %v1100, %v1124
      %v1126 = vrcp.pop %v1117
      %v1127 = vmul.f32 %v1102, %v1126
      %1132 = vrot.lane.b32.xlu0 %v601, 112
      %v1133 = vpop.permute.xlu0 %1132
      %1134 = vrot.lane.b32.xlu0 %v607, 112
      %v1135 = vpop.permute.xlu0 %1134
      %1136 = vrot.lane.b32.xlu0 %v613, 112
      %v1137 = vpop.permute.xlu0 %1136
      %1138 = vrot.lane.b32.xlu0 %v619, 112
      %v1139 = vpop.permute.xlu0 %1138
      %1140 = vrot.lane.b32.xlu0 %v625, 112
      %v1141 = vpop.permute.xlu0 %1140
      %v1147 = vsel %vm777, %v1119, 0
      %v1150 = vsel %vm777, %v1121, 0
      %v1153 = vsel %vm777, %v1123, 0
      %v1156 = vsel %vm777, %v1125, 0
      %v1159 = vsel %vm777, %v1127, 0
      %v1161 = vsel %vm849, %v1141, 0
      %1163 = vmatprep.subr.mxu0 0.0
      %1164 = vmatpush1.msra.mxu0 %v1133
      %1165 = vmatprep.subr.mxu0 0.0
      %1166 = vmatpush1.msra.mxu0 %v1135
      %1167 = vmatprep.subr.mxu0 0.0
      %1168 = vmatpush1.msra.mxu0 %v1137
      %1169 = vmatprep.subr.mxu0 0.0
      %1170 = vmatpush1.msra.mxu0 %v1139
      %1171 = vmatprep.subr.mxu0 0.0
      %1172 = vmatpush1.msra.mxu0 %v1161
      %1173 = vmatprep.subr.mxu0 0.0
      %1174 = vmatpush1.msra.mxu0 0.0
      %1175 = vmatprep.subr.mxu0 0.0
      %1176 = vmatpush1.msra.mxu0 0.0
      %1177 = vmatprep.subr.mxu0 0.0
      %1178 = vmatpush1.msra.mxu0 0.0
      %1179 = vmatprep.subr.mxu0 0.0
      %1180 = vmatpush1.msra.mxu0 0.0
      %1181 = vmatprep.subr.mxu0 0.0
      %1182 = vmatpush1.msra.mxu0 0.0
      %1183 = vmatprep.subr.mxu0 0.0
      %1184 = vmatpush1.msra.mxu0 0.0
      %1185 = vmatprep.subr.mxu0 0.0
      %1186 = vmatpush1.msra.mxu0 0.0
      %1187 = vmatprep.subr.mxu0 0.0
      %1188 = vmatpush1.msra.mxu0 0.0
      %1189 = vmatprep.subr.mxu0 0.0
      %1190 = vmatpush1.msra.mxu0 0.0
      %1191 = vmatprep.subr.mxu0 0.0
      %1192 = vmatpush1.msra.mxu0 0.0
      %1193 = vmatprep.subr.mxu0 0.0
      %1194 = vmatpush1.msra.mxu0 0.0
      %1195 = vmatprep.subr.mxu0 0.0
      %1196 = vmatpush1.msra.mxu0 0.0
      %1197 = vmatprep.subr.mxu0 0.0
      %1198 = vmatpush1.msra.mxu0 0.0
      %1199 = vmatprep.subr.mxu0 0.0
      %1200 = vmatpush1.msra.mxu0 0.0
      %1201 = vmatprep.subr.mxu0 0.0
      %1202 = vmatpush1.msra.mxu0 0.0
      %1203 = vmatprep.subr.mxu0 0.0
      %1204 = vmatpush1.msra.mxu0 0.0
      %1205 = vmatprep.subr.mxu0 0.0
      %1206 = vmatpush1.msra.mxu0 0.0
      %1207 = vmatprep.subr.mxu0 0.0
      %1208 = vmatpush1.msra.mxu0 0.0
      %1209 = vmatprep.subr.mxu0 0.0
      %1210 = vmatpush1.msra.mxu0 0.0
      %1211 = vmatprep.subr.mxu0 0.0
      %1212 = vmatpush1.msra.mxu0 0.0
      %1213 = vmatprep.subr.mxu0 0.0
      %1214 = vmatpush1.msra.mxu0 0.0
      %1215 = vmatprep.subr.mxu0 0.0
      %1216 = vmatpush1.msra.mxu0 0.0
      %1217 = vmatprep.subr.mxu0 0.0
      %1218 = vmatpush1.msra.mxu0 0.0
      %1219 = vmatprep.subr.mxu0 0.0
      %1220 = vmatpush1.msra.mxu0 0.0
      %1221 = vmatprep.subr.mxu0 0.0
      %1222 = vmatpush1.msra.mxu0 0.0
      %1223 = vmatprep.subr.mxu0 0.0
      %1224 = vmatpush1.msra.mxu0 0.0
      %1225 = vmatprep.subr.mxu0 0.0
      %1226 = vmatpush1.msra.mxu0 0.0
      %1227 = vmatprep.mubr.f32.mxu0 0.0
      %1228 = vmatmul.mubr.f32.gmra.mrb[0].mxu0 %v1147
      %v1229 = vpop.f32.mrb[0].mxu0
      %v1230 = vadd.f32 0.0, %v1229
      %v1231 = vpop.f32.mrb[0].mxu0
      %1232 = vmatprep.mubr.f32.mxu0 0.0
      %1233 = vmatmul.mubr.f32.gmra.mrb[0].mxu0 %v1150
      %v1234 = vpop.f32.mrb[0].mxu0
      %v1235 = vadd.f32 0.0, %v1234
      %v1236 = vpop.f32.mrb[0].mxu0
      %1237 = vmatprep.mubr.f32.mxu0 0.0
      %1238 = vmatmul.mubr.f32.gmra.mrb[0].mxu0 %v1153
      %v1239 = vpop.f32.mrb[0].mxu0
      %v1240 = vadd.f32 0.0, %v1239
      %v1241 = vpop.f32.mrb[0].mxu0
      %1242 = vmatprep.mubr.f32.mxu0 0.0
      %1243 = vmatmul.mubr.f32.gmra.mrb[0].mxu0 %v1156
      %v1244 = vpop.f32.mrb[0].mxu0
      %v1245 = vadd.f32 0.0, %v1244
      %v1246 = vpop.f32.mrb[0].mxu0
      %1247 = vmatprep.mubr.f32.mxu0 0.0
      %1248 = vmatmul.mubr.f32.gmra.mrb[0].mxu0 %v1159
      %v1249 = vpop.f32.mrb[0].mxu0
      %v1250 = vadd.f32 0.0, %v1249
      %v1251 = vpop.f32.mrb[0].mxu0
      %1252 = vdwg.mxu0
      %v1254 = vsel %vm661, %v1230, 0
      %v1257 = vsel %vm661, %v1235, 0
      %v1260 = vsel %vm661, %v1240, 0
      %v1263 = vsel %vm661, %v1245, 0
      %v1266 = vsel %vm661, %v1250, 0
      %1268 = vmatprep.subr.mxu0 0.0
      %1269 = vmatpush1.msra.mxu0 %v629
      %1270 = vmatprep.subr.mxu0 0.0
      %1271 = vmatpush1.msra.mxu0 %v630
      %1272 = vmatprep.subr.mxu0 0.0
      %1273 = vmatpush1.msra.mxu0 0.0
      %1274 = vmatprep.subr.mxu0 0.0
      %1275 = vmatpush1.msra.mxu0 0.0
      %1276 = vmatprep.subr.mxu0 0.0
      %1277 = vmatpush1.msra.mxu0 0.0
      %1278 = vmatprep.subr.mxu0 0.0
      %1279 = vmatpush1.msra.mxu0 0.0
      %1280 = vmatprep.subr.mxu0 0.0
      %1281 = vmatpush1.msra.mxu0 0.0
      %1282 = vmatprep.subr.mxu0 0.0
      %1283 = vmatpush1.msra.mxu0 0.0
      %1284 = vmatprep.subr.mxu0 0.0
      %1285 = vmatpush1.msra.mxu0 0.0
      %1286 = vmatprep.subr.mxu0 0.0
      %1287 = vmatpush1.msra.mxu0 0.0
      %1288 = vmatprep.subr.mxu0 0.0
      %1289 = vmatpush1.msra.mxu0 0.0
      %1290 = vmatprep.subr.mxu0 0.0
      %1291 = vmatpush1.msra.mxu0 0.0
      %1292 = vmatprep.subr.mxu0 0.0
      %1293 = vmatpush1.msra.mxu0 0.0
      %1294 = vmatprep.subr.mxu0 0.0
      %1295 = vmatpush1.msra.mxu0 0.0
      %1296 = vmatprep.subr.mxu0 0.0
      %1297 = vmatpush1.msra.mxu0 0.0
      %1298 = vmatprep.subr.mxu0 0.0
      %1299 = vmatpush1.msra.mxu0 0.0
      %1300 = vmatprep.subr.mxu0 0.0
      %1301 = vmatpush1.msra.mxu0 0.0
      %1302 = vmatprep.subr.mxu0 0.0
      %1303 = vmatpush1.msra.mxu0 0.0
      %1304 = vmatprep.subr.mxu0 0.0
      %1305 = vmatpush1.msra.mxu0 0.0
      %1306 = vmatprep.subr.mxu0 0.0
      %1307 = vmatpush1.msra.mxu0 0.0
      %1308 = vmatprep.subr.mxu0 0.0
      %1309 = vmatpush1.msra.mxu0 0.0
      %1310 = vmatprep.subr.mxu0 0.0
      %1311 = vmatpush1.msra.mxu0 0.0
      %1312 = vmatprep.subr.mxu0 0.0
      %1313 = vmatpush1.msra.mxu0 0.0
      %1314 = vmatprep.subr.mxu0 0.0
      %1315 = vmatpush1.msra.mxu0 0.0
      %1316 = vmatprep.subr.mxu0 0.0
      %1317 = vmatpush1.msra.mxu0 0.0
      %1318 = vmatprep.subr.mxu0 0.0
      %1319 = vmatpush1.msra.mxu0 0.0
      %1320 = vmatprep.subr.mxu0 0.0
      %1321 = vmatpush1.msra.mxu0 0.0
      %1322 = vmatprep.subr.mxu0 0.0
      %1323 = vmatpush1.msra.mxu0 0.0
      %1324 = vmatprep.subr.mxu0 0.0
      %1325 = vmatpush1.msra.mxu0 0.0
      %1326 = vmatprep.subr.mxu0 0.0
      %1327 = vmatpush1.msra.mxu0 0.0
      %1328 = vmatprep.subr.mxu0 0.0
      %1329 = vmatpush1.msra.mxu0 0.0
      %1330 = vmatprep.subr.mxu0 0.0
      %1331 = vmatpush1.msra.mxu0 0.0
      %1332 = vmatprep.mubr.f32.mxu0 0.0
      %1333 = vmatmul.mubr.f32.gmra.mrb[0].mxu0 %v1254
      %v1334 = vpop.f32.mrb[0].mxu0
      %v1335 = vadd.f32 0.0, %v1334
      %v1336 = vpop.f32.mrb[0].mxu0
      %1337 = vmatprep.mubr.f32.mxu0 0.0
      %1338 = vmatmul.mubr.f32.gmra.mrb[0].mxu0 %v1257
      %v1339 = vpop.f32.mrb[0].mxu0
      %v1340 = vadd.f32 0.0, %v1339
      %v1341 = vpop.f32.mrb[0].mxu0
      %1342 = vmatprep.mubr.f32.mxu0 0.0
      %1343 = vmatmul.mubr.f32.gmra.mrb[0].mxu0 %v1260
      %v1344 = vpop.f32.mrb[0].mxu0
      %v1345 = vadd.f32 0.0, %v1344
      %v1346 = vpop.f32.mrb[0].mxu0
      %1347 = vmatprep.mubr.f32.mxu0 0.0
      %1348 = vmatmul.mubr.f32.gmra.mrb[0].mxu0 %v1263
      %v1349 = vpop.f32.mrb[0].mxu0
      %v1350 = vadd.f32 0.0, %v1349
      %v1351 = vpop.f32.mrb[0].mxu0
      %1352 = vmatprep.mubr.f32.mxu0 0.0
      %1353 = vmatmul.mubr.f32.gmra.mrb[0].mxu0 %v1266
      %v1354 = vpop.f32.mrb[0].mxu0
      %v1355 = vadd.f32 0.0, %v1354
      %v1356 = vpop.f32.mrb[0].mxu0
      %1357 = vdwg.mxu0
      %v1359 = vsel %vm661, %v920, 0
      %v1362 = vsel %vm661, %v925, 0
      %v1365 = vsel %vm661, %v930, 0
      %v1368 = vsel %vm661, %v935, 0
      %v1371 = vsel %vm661, %v940, 0
      %1373 = vmatprep.subr.mxu0 0.0
      %1374 = vmatpush1.msra.mxu0 %v627
      %1375 = vmatprep.subr.mxu0 0.0
      %1376 = vmatpush1.msra.mxu0 %v628
      %1377 = vmatprep.subr.mxu0 0.0
      %1378 = vmatpush1.msra.mxu0 0.0
      %1379 = vmatprep.subr.mxu0 0.0
      %1380 = vmatpush1.msra.mxu0 0.0
      %1381 = vmatprep.subr.mxu0 0.0
      %1382 = vmatpush1.msra.mxu0 0.0
      %1383 = vmatprep.subr.mxu0 0.0
      %1384 = vmatpush1.msra.mxu0 0.0
      %1385 = vmatprep.subr.mxu0 0.0
      %1386 = vmatpush1.msra.mxu0 0.0
      %1387 = vmatprep.subr.mxu0 0.0
      %1388 = vmatpush1.msra.mxu0 0.0
      %1389 = vmatprep.subr.mxu0 0.0
      %1390 = vmatpush1.msra.mxu0 0.0
      %1391 = vmatprep.subr.mxu0 0.0
      %1392 = vmatpush1.msra.mxu0 0.0
      %1393 = vmatprep.subr.mxu0 0.0
      %1394 = vmatpush1.msra.mxu0 0.0
      %1395 = vmatprep.subr.mxu0 0.0
      %1396 = vmatpush1.msra.mxu0 0.0
      %1397 = vmatprep.subr.mxu0 0.0
      %1398 = vmatpush1.msra.mxu0 0.0
      %1399 = vmatprep.subr.mxu0 0.0
      %1400 = vmatpush1.msra.mxu0 0.0
      %1401 = vmatprep.subr.mxu0 0.0
      %1402 = vmatpush1.msra.mxu0 0.0
      %1403 = vmatprep.subr.mxu0 0.0
      %1404 = vmatpush1.msra.mxu0 0.0
      %1405 = vmatprep.subr.mxu0 0.0
      %1406 = vmatpush1.msra.mxu0 0.0
      %1407 = vmatprep.subr.mxu0 0.0
      %1408 = vmatpush1.msra.mxu0 0.0
      %1409 = vmatprep.subr.mxu0 0.0
      %1410 = vmatpush1.msra.mxu0 0.0
      %1411 = vmatprep.subr.mxu0 0.0
      %1412 = vmatpush1.msra.mxu0 0.0
      %1413 = vmatprep.subr.mxu0 0.0
      %1414 = vmatpush1.msra.mxu0 0.0
      %1415 = vmatprep.subr.mxu0 0.0
      %1416 = vmatpush1.msra.mxu0 0.0
      %1417 = vmatprep.subr.mxu0 0.0
      %1418 = vmatpush1.msra.mxu0 0.0
      %1419 = vmatprep.subr.mxu0 0.0
      %1420 = vmatpush1.msra.mxu0 0.0
      %1421 = vmatprep.subr.mxu0 0.0
      %1422 = vmatpush1.msra.mxu0 0.0
      %1423 = vmatprep.subr.mxu0 0.0
      %1424 = vmatpush1.msra.mxu0 0.0
      %1425 = vmatprep.subr.mxu0 0.0
      %1426 = vmatpush1.msra.mxu0 0.0
      %1427 = vmatprep.subr.mxu0 0.0
      %1428 = vmatpush1.msra.mxu0 0.0
      %1429 = vmatprep.subr.mxu0 0.0
      %1430 = vmatpush1.msra.mxu0 0.0
      %1431 = vmatprep.subr.mxu0 0.0
      %1432 = vmatpush1.msra.mxu0 0.0
      %1433 = vmatprep.subr.mxu0 0.0
      %1434 = vmatpush1.msra.mxu0 0.0
      %1435 = vmatprep.subr.mxu0 0.0
      %1436 = vmatpush1.msra.mxu0 0.0
      %1437 = vmatprep.mubr.f32.mxu0 0.0
      %1438 = vmatmul.mubr.f32.gmra.mrb[0].mxu0 %v1359
      %v1439 = vpop.f32.mrb[0].mxu0
      %v1440 = vadd.f32 %v1335, %v1439
      %v1441 = vpop.f32.mrb[0].mxu0
      %1442 = vmatprep.mubr.f32.mxu0 0.0
      %1443 = vmatmul.mubr.f32.gmra.mrb[0].mxu0 %v1362
      %v1444 = vpop.f32.mrb[0].mxu0
      %v1445 = vadd.f32 %v1340, %v1444
      %v1446 = vpop.f32.mrb[0].mxu0
      %1447 = vmatprep.mubr.f32.mxu0 0.0
      %1448 = vmatmul.mubr.f32.gmra.mrb[0].mxu0 %v1365
      %v1449 = vpop.f32.mrb[0].mxu0
      %v1450 = vadd.f32 %v1345, %v1449
      %v1451 = vpop.f32.mrb[0].mxu0
      %1452 = vmatprep.mubr.f32.mxu0 0.0
      %1453 = vmatmul.mubr.f32.gmra.mrb[0].mxu0 %v1368
      %v1454 = vpop.f32.mrb[0].mxu0
      %v1455 = vadd.f32 %v1350, %v1454
      %v1456 = vpop.f32.mrb[0].mxu0
      %1457 = vmatprep.mubr.f32.mxu0 0.0
      %1458 = vmatmul.mubr.f32.gmra.mrb[0].mxu0 %v1371
      %v1459 = vpop.f32.mrb[0].mxu0
      %v1460 = vadd.f32 %v1355, %v1459
      %v1461 = vpop.f32.mrb[0].mxu0
      %1462 = vdwg.mxu0
      %1463 = vrot.lane.b32.xlu0 %v635, 96
      %v1464 = vpop.permute.xlu0 %1463
      %1465 = vrot.lane.b32.xlu0 %v636, 96
      %v1466 = vpop.permute.xlu0 %1465
      %1467 = vrot.lane.b32.xlu0 %v637, 96
      %v1468 = vpop.permute.xlu0 %1467
      %1469 = vrot.lane.b32.xlu0 %v638, 96
      %v1470 = vpop.permute.xlu0 %1469
      %1471 = vrot.lane.b32.xlu0 %v639, 96
      %v1472 = vpop.permute.xlu0 %1471
      %1473 = vrot.lane.b32.xlu0 %v599, 32
      %v1474 = vpop.permute.xlu0 %1473
      %1475 = vrot.lane.b32.xlu0 %v605, 32
      %v1476 = vpop.permute.xlu0 %1475
      %1477 = vrot.lane.b32.xlu0 %v611, 32
      %v1478 = vpop.permute.xlu0 %1477
      %1479 = vrot.lane.b32.xlu0 %v617, 32
      %v1480 = vpop.permute.xlu0 %1479
      %1481 = vrot.lane.b32.xlu0 %v623, 32
      %v1482 = vpop.permute.xlu0 %1481
      %v1483 = vsel %vm661, %v1464, 0
      %v1485 = vsel %vm661, %v1466, 0
      %v1487 = vsel %vm661, %v1468, 0
      %v1489 = vsel %vm661, %v1470, 0
      %v1491 = vsel %vm661, %v1472, 0
      %v1493 = vsel %vm661, %v1474, 0
      %v1495 = vsel %vm661, %v1476, 0
      %v1497 = vsel %vm661, %v1478, 0
      %v1499 = vsel %vm661, %v1480, 0
      %v1501 = vsel %vm661, %v1482, 0
      %1503 = vmatprep.subr.mxu0 0.0
      %1504 = vmatpush1.xpose.msra.mxu0 %v1493
      %1505 = vmatprep.subr.mxu0 0.0
      %1506 = vmatpush1.xpose.msra.mxu0 %v1495
      %1507 = vmatprep.subr.mxu0 0.0
      %1508 = vmatpush1.xpose.msra.mxu0 %v1497
      %1509 = vmatprep.subr.mxu0 0.0
      %1510 = vmatpush1.xpose.msra.mxu0 %v1499
      %1511 = vmatprep.subr.mxu0 0.0
      %1512 = vmatpush1.xpose.msra.mxu0 %v1501
      %1513 = vmatprep.subr.mxu0 0.0
      %1514 = vmatpush1.xpose.msra.mxu0 0.0
      %1515 = vmatprep.subr.mxu0 0.0
      %1516 = vmatpush1.xpose.msra.mxu0 0.0
      %1517 = vmatprep.subr.mxu0 0.0
      %1518 = vmatpush1.xpose.msra.mxu0 0.0
      %1519 = vmatprep.subr.mxu0 0.0
      %1520 = vmatpush1.xpose.msra.mxu0 0.0
      %1521 = vmatprep.subr.mxu0 0.0
      %1522 = vmatpush1.xpose.msra.mxu0 0.0
      %1523 = vmatprep.subr.mxu0 0.0
      %1524 = vmatpush1.xpose.msra.mxu0 0.0
      %1525 = vmatprep.subr.mxu0 0.0
      %1526 = vmatpush1.xpose.msra.mxu0 0.0
      %1527 = vmatprep.subr.mxu0 0.0
      %1528 = vmatpush1.xpose.msra.mxu0 0.0
      %1529 = vmatprep.subr.mxu0 0.0
      %1530 = vmatpush1.xpose.msra.mxu0 0.0
      %1531 = vmatprep.subr.mxu0 0.0
      %1532 = vmatpush1.xpose.msra.mxu0 0.0
      %1533 = vmatprep.subr.mxu0 0.0
      %1534 = vmatpush1.xpose.msra.mxu0 0.0
      %1535 = vmatprep.subr.mxu0 0.0
      %1536 = vmatpush1.xpose.msra.mxu0 0.0
      %1537 = vmatprep.subr.mxu0 0.0
      %1538 = vmatpush1.xpose.msra.mxu0 0.0
      %1539 = vmatprep.subr.mxu0 0.0
      %1540 = vmatpush1.xpose.msra.mxu0 0.0
      %1541 = vmatprep.subr.mxu0 0.0
      %1542 = vmatpush1.xpose.msra.mxu0 0.0
      %1543 = vmatprep.subr.mxu0 0.0
      %1544 = vmatpush1.xpose.msra.mxu0 0.0
      %1545 = vmatprep.subr.mxu0 0.0
      %1546 = vmatpush1.xpose.msra.mxu0 0.0
      %1547 = vmatprep.subr.mxu0 0.0
      %1548 = vmatpush1.xpose.msra.mxu0 0.0
      %1549 = vmatprep.subr.mxu0 0.0
      %1550 = vmatpush1.xpose.msra.mxu0 0.0
      %1551 = vmatprep.subr.mxu0 0.0
      %1552 = vmatpush1.xpose.msra.mxu0 0.0
      %1553 = vmatprep.subr.mxu0 0.0
      %1554 = vmatpush1.xpose.msra.mxu0 0.0
      %1555 = vmatprep.subr.mxu0 0.0
      %1556 = vmatpush1.xpose.msra.mxu0 0.0
      %1557 = vmatprep.subr.mxu0 0.0
      %1558 = vmatpush1.xpose.msra.mxu0 0.0
      %1559 = vmatprep.subr.mxu0 0.0
      %1560 = vmatpush1.xpose.msra.mxu0 0.0
      %1561 = vmatprep.subr.mxu0 0.0
      %1562 = vmatpush1.xpose.msra.mxu0 0.0
      %1563 = vmatprep.subr.mxu0 0.0
      %1564 = vmatpush1.xpose.msra.mxu0 0.0
      %1565 = vmatprep.subr.mxu0 0.0
      %1566 = vmatpush1.xpose.msra.mxu0 0.0
      %1567 = vmatprep.mubr.f32.mxu0 0.0
      %1568 = vmatmul.mubr.f32.gmra.mrb[0].mxu0 %v1483
      %v1569 = vpop.f32.mrb[0].mxu0
      %v1570 = vadd.f32 %v644, %v1569
      %v1571 = vpop.f32.mrb[0].mxu0
      %1572 = vmatprep.mubr.f32.mxu0 0.0
      %1573 = vmatmul.mubr.f32.gmra.mrb[0].mxu0 %v1485
      %v1574 = vpop.f32.mrb[0].mxu0
      %v1575 = vadd.f32 %v644, %v1574
      %v1576 = vpop.f32.mrb[0].mxu0
      %1577 = vmatprep.mubr.f32.mxu0 0.0
      %1578 = vmatmul.mubr.f32.gmra.mrb[0].mxu0 %v1487
      %v1579 = vpop.f32.mrb[0].mxu0
      %v1580 = vadd.f32 %v644, %v1579
      %v1581 = vpop.f32.mrb[0].mxu0
      %1582 = vmatprep.mubr.f32.mxu0 0.0
      %1583 = vmatmul.mubr.f32.gmra.mrb[0].mxu0 %v1489
      %v1584 = vpop.f32.mrb[0].mxu0
      %v1585 = vadd.f32 %v644, %v1584
      %v1586 = vpop.f32.mrb[0].mxu0
      %1587 = vmatprep.mubr.f32.mxu0 0.0
      %1588 = vmatmul.mubr.f32.gmra.mrb[0].mxu0 %v1491
      %v1589 = vpop.f32.mrb[0].mxu0
      %v1590 = vadd.f32 %v644, %v1589
      %v1591 = vpop.f32.mrb[0].mxu0
      %1592 = vdwg.mxu0
      %v1593 = vsel %vm777, %v1570, -inf
      %1594 = vmax.xlane.f32.xlu0 %v1593
      %v1595 = vpop.xlane.xlu0 %1594
      %v1596 = vsel %vm777, %v1575, -inf
      %1597 = vmax.xlane.f32.xlu0 %v1596
      %v1598 = vpop.xlane.xlu0 %1597
      %v1599 = vsel %vm777, %v1580, -inf
      %1600 = vmax.xlane.f32.xlu0 %v1599
      %v1601 = vpop.xlane.xlu0 %1600
      %v1602 = vsel %vm777, %v1585, -inf
      %1603 = vmax.xlane.f32.xlu0 %v1602
      %v1604 = vpop.xlane.xlu0 %1603
      %v1605 = vsel %vm790, %v1590, -inf
      %1606 = vmax.xlane.f32.xlu0 %v1605
      %v1607 = vpop.xlane.xlu0 %1606
      %v1608 = vsub.f32 %v1570, %v1595
      %v1609 = vsub.f32 %v1575, %v1598
      %v1610 = vsub.f32 %v1580, %v1601
      %v1611 = vsub.f32 %v1585, %v1604
      %v1612 = vsub.f32 %v1590, %v1607
      %v1613 = vmul.f32 %v1608, 1.442695
      %v1614 = vpow.pop %v1613
      %v1615 = vmul.f32 %v1609, 1.442695
      %v1616 = vpow.pop %v1615
      %v1617 = vmul.f32 %v1610, 1.442695
      %v1618 = vpow.pop %v1617
      %v1619 = vmul.f32 %v1611, 1.442695
      %v1620 = vpow.pop %v1619
      %v1621 = vmul.f32 %v1612, 1.442695
      %v1622 = vpow.pop %v1621
      %v1623 = vsel %vm777, %v1614, 0.0
      %1624 = vadd.xlane.f32.xlu0 %v1623
      %v1625 = vpop.xlane.xlu0 %1624
      %v1626 = vsel %vm777, %v1616, 0.0
      %1627 = vadd.xlane.f32.xlu0 %v1626
      %v1628 = vpop.xlane.xlu0 %1627
      %v1629 = vsel %vm777, %v1618, 0.0
      %1630 = vadd.xlane.f32.xlu0 %v1629
      %v1631 = vpop.xlane.xlu0 %1630
      %v1632 = vsel %vm777, %v1620, 0.0
      %1633 = vadd.xlane.f32.xlu0 %v1632
      %v1634 = vpop.xlane.xlu0 %1633
      %v1635 = vsel %vm790, %v1622, 0.0
      %1636 = vadd.xlane.f32.xlu0 %v1635
      %v1637 = vpop.xlane.xlu0 %1636
      %v1638 = vrcp.pop %v1625
      %v1639 = vmul.f32 %v1614, %v1638
      %v1640 = vrcp.pop %v1628
      %v1641 = vmul.f32 %v1616, %v1640
      %v1642 = vrcp.pop %v1631
      %v1643 = vmul.f32 %v1618, %v1642
      %v1644 = vrcp.pop %v1634
      %v1645 = vmul.f32 %v1620, %v1644
      %v1646 = vrcp.pop %v1637
      %v1647 = vmul.f32 %v1622, %v1646
      %1648 = vrot.lane.b32.xlu0 %v601, 96
      %v1649 = vpop.permute.xlu0 %1648
      %1650 = vrot.lane.b32.xlu0 %v607, 96
      %v1651 = vpop.permute.xlu0 %1650
      %1652 = vrot.lane.b32.xlu0 %v613, 96
      %v1653 = vpop.permute.xlu0 %1652
      %1654 = vrot.lane.b32.xlu0 %v619, 96
      %v1655 = vpop.permute.xlu0 %1654
      %1656 = vrot.lane.b32.xlu0 %v625, 96
      %v1657 = vpop.permute.xlu0 %1656
      %v1663 = vsel %vm777, %v1639, 0
      %v1666 = vsel %vm777, %v1641, 0
      %v1669 = vsel %vm777, %v1643, 0
      %v1672 = vsel %vm777, %v1645, 0
      %v1675 = vsel %vm777, %v1647, 0
      %v1677 = vsel %vm849, %v1657, 0
      %1679 = vmatprep.subr.mxu0 0.0
      %1680 = vmatpush1.msra.mxu0 %v1649
      %1681 = vmatprep.subr.mxu0 0.0
      %1682 = vmatpush1.msra.mxu0 %v1651
      %1683 = vmatprep.subr.mxu0 0.0
      %1684 = vmatpush1.msra.mxu0 %v1653
      %1685 = vmatprep.subr.mxu0 0.0
      %1686 = vmatpush1.msra.mxu0 %v1655
      %1687 = vmatprep.subr.mxu0 0.0
      %1688 = vmatpush1.msra.mxu0 %v1677
      %1689 = vmatprep.subr.mxu0 0.0
      %1690 = vmatpush1.msra.mxu0 0.0
      %1691 = vmatprep.subr.mxu0 0.0
      %1692 = vmatpush1.msra.mxu0 0.0
      %1693 = vmatprep.subr.mxu0 0.0
      %1694 = vmatpush1.msra.mxu0 0.0
      %1695 = vmatprep.subr.mxu0 0.0
      %1696 = vmatpush1.msra.mxu0 0.0
      %1697 = vmatprep.subr.mxu0 0.0
      %1698 = vmatpush1.msra.mxu0 0.0
      %1699 = vmatprep.subr.mxu0 0.0
      %1700 = vmatpush1.msra.mxu0 0.0
      %1701 = vmatprep.subr.mxu0 0.0
      %1702 = vmatpush1.msra.mxu0 0.0
      %1703 = vmatprep.subr.mxu0 0.0
      %1704 = vmatpush1.msra.mxu0 0.0
      %1705 = vmatprep.subr.mxu0 0.0
      %1706 = vmatpush1.msra.mxu0 0.0
      %1707 = vmatprep.subr.mxu0 0.0
      %1708 = vmatpush1.msra.mxu0 0.0
      %1709 = vmatprep.subr.mxu0 0.0
      %1710 = vmatpush1.msra.mxu0 0.0
      %1711 = vmatprep.subr.mxu0 0.0
      %1712 = vmatpush1.msra.mxu0 0.0
      %1713 = vmatprep.subr.mxu0 0.0
      %1714 = vmatpush1.msra.mxu0 0.0
      %1715 = vmatprep.subr.mxu0 0.0
      %1716 = vmatpush1.msra.mxu0 0.0
      %1717 = vmatprep.subr.mxu0 0.0
      %1718 = vmatpush1.msra.mxu0 0.0
      %1719 = vmatprep.subr.mxu0 0.0
      %1720 = vmatpush1.msra.mxu0 0.0
      %1721 = vmatprep.subr.mxu0 0.0
      %1722 = vmatpush1.msra.mxu0 0.0
      %1723 = vmatprep.subr.mxu0 0.0
      %1724 = vmatpush1.msra.mxu0 0.0
      %1725 = vmatprep.subr.mxu0 0.0
      %1726 = vmatpush1.msra.mxu0 0.0
      %1727 = vmatprep.subr.mxu0 0.0
      %1728 = vmatpush1.msra.mxu0 0.0
      %1729 = vmatprep.subr.mxu0 0.0
      %1730 = vmatpush1.msra.mxu0 0.0
      %1731 = vmatprep.subr.mxu0 0.0
      %1732 = vmatpush1.msra.mxu0 0.0
      %1733 = vmatprep.subr.mxu0 0.0
      %1734 = vmatpush1.msra.mxu0 0.0
      %1735 = vmatprep.subr.mxu0 0.0
      %1736 = vmatpush1.msra.mxu0 0.0
      %1737 = vmatprep.subr.mxu0 0.0
      %1738 = vmatpush1.msra.mxu0 0.0
      %1739 = vmatprep.subr.mxu0 0.0
      %1740 = vmatpush1.msra.mxu0 0.0
      %1741 = vmatprep.subr.mxu0 0.0
      %1742 = vmatpush1.msra.mxu0 0.0
      %1743 = vmatprep.mubr.f32.mxu0 0.0
      %1744 = vmatmul.mubr.f32.gmra.mrb[0].mxu0 %v1663
      %v1745 = vpop.f32.mrb[0].mxu0
      %v1746 = vadd.f32 0.0, %v1745
      %v1747 = vpop.f32.mrb[0].mxu0
      %1748 = vmatprep.mubr.f32.mxu0 0.0
      %1749 = vmatmul.mubr.f32.gmra.mrb[0].mxu0 %v1666
      %v1750 = vpop.f32.mrb[0].mxu0
      %v1751 = vadd.f32 0.0, %v1750
      %v1752 = vpop.f32.mrb[0].mxu0
      %1753 = vmatprep.mubr.f32.mxu0 0.0
      %1754 = vmatmul.mubr.f32.gmra.mrb[0].mxu0 %v1669
      %v1755 = vpop.f32.mrb[0].mxu0
      %v1756 = vadd.f32 0.0, %v1755
      %v1757 = vpop.f32.mrb[0].mxu0
      %1758 = vmatprep.mubr.f32.mxu0 0.0
      %1759 = vmatmul.mubr.f32.gmra.mrb[0].mxu0 %v1672
      %v1760 = vpop.f32.mrb[0].mxu0
      %v1761 = vadd.f32 0.0, %v1760
      %v1762 = vpop.f32.mrb[0].mxu0
      %1763 = vmatprep.mubr.f32.mxu0 0.0
      %1764 = vmatmul.mubr.f32.gmra.mrb[0].mxu0 %v1675
      %v1765 = vpop.f32.mrb[0].mxu0
      %v1766 = vadd.f32 0.0, %v1765
      %v1767 = vpop.f32.mrb[0].mxu0
      %1768 = vdwg.mxu0
      %v1770 = vsel %vm661, %v1746, 0
      %v1773 = vsel %vm661, %v1751, 0
      %v1776 = vsel %vm661, %v1756, 0
      %v1779 = vsel %vm661, %v1761, 0
      %v1782 = vsel %vm661, %v1766, 0
      %1784 = vmatprep.subr.mxu0 0.0
      %1785 = vmatpush1.msra.mxu0 %v631
      %1786 = vmatprep.subr.mxu0 0.0
      %1787 = vmatpush1.msra.mxu0 %v632
      %1788 = vmatprep.subr.mxu0 0.0
      %1789 = vmatpush1.msra.mxu0 0.0
      %1790 = vmatprep.subr.mxu0 0.0
      %1791 = vmatpush1.msra.mxu0 0.0
      %1792 = vmatprep.subr.mxu0 0.0
      %1793 = vmatpush1.msra.mxu0 0.0
      %1794 = vmatprep.subr.mxu0 0.0
      %1795 = vmatpush1.msra.mxu0 0.0
      %1796 = vmatprep.subr.mxu0 0.0
      %1797 = vmatpush1.msra.mxu0 0.0
      %1798 = vmatprep.subr.mxu0 0.0
      %1799 = vmatpush1.msra.mxu0 0.0
      %1800 = vmatprep.subr.mxu0 0.0
      %1801 = vmatpush1.msra.mxu0 0.0
      %1802 = vmatprep.subr.mxu0 0.0
      %1803 = vmatpush1.msra.mxu0 0.0
      %1804 = vmatprep.subr.mxu0 0.0
      %1805 = vmatpush1.msra.mxu0 0.0
      %1806 = vmatprep.subr.mxu0 0.0
      %1807 = vmatpush1.msra.mxu0 0.0
      %1808 = vmatprep.subr.mxu0 0.0
      %1809 = vmatpush1.msra.mxu0 0.0
      %1810 = vmatprep.subr.mxu0 0.0
      %1811 = vmatpush1.msra.mxu0 0.0
      %1812 = vmatprep.subr.mxu0 0.0
      %1813 = vmatpush1.msra.mxu0 0.0
      %1814 = vmatprep.subr.mxu0 0.0
      %1815 = vmatpush1.msra.mxu0 0.0
      %1816 = vmatprep.subr.mxu0 0.0
      %1817 = vmatpush1.msra.mxu0 0.0
      %1818 = vmatprep.subr.mxu0 0.0
      %1819 = vmatpush1.msra.mxu0 0.0
      %1820 = vmatprep.subr.mxu0 0.0
      %1821 = vmatpush1.msra.mxu0 0.0
      %1822 = vmatprep.subr.mxu0 0.0
      %1823 = vmatpush1.msra.mxu0 0.0
      %1824 = vmatprep.subr.mxu0 0.0
      %1825 = vmatpush1.msra.mxu0 0.0
      %1826 = vmatprep.subr.mxu0 0.0
      %1827 = vmatpush1.msra.mxu0 0.0
      %1828 = vmatprep.subr.mxu0 0.0
      %1829 = vmatpush1.msra.mxu0 0.0
      %1830 = vmatprep.subr.mxu0 0.0
      %1831 = vmatpush1.msra.mxu0 0.0
      %1832 = vmatprep.subr.mxu0 0.0
      %1833 = vmatpush1.msra.mxu0 0.0
      %1834 = vmatprep.subr.mxu0 0.0
      %1835 = vmatpush1.msra.mxu0 0.0
      %1836 = vmatprep.subr.mxu0 0.0
      %1837 = vmatpush1.msra.mxu0 0.0
      %1838 = vmatprep.subr.mxu0 0.0
      %1839 = vmatpush1.msra.mxu0 0.0
      %1840 = vmatprep.subr.mxu0 0.0
      %1841 = vmatpush1.msra.mxu0 0.0
      %1842 = vmatprep.subr.mxu0 0.0
      %1843 = vmatpush1.msra.mxu0 0.0
      %1844 = vmatprep.subr.mxu0 0.0
      %1845 = vmatpush1.msra.mxu0 0.0
      %1846 = vmatprep.subr.mxu0 0.0
      %1847 = vmatpush1.msra.mxu0 0.0
      %1848 = vmatprep.mubr.f32.mxu0 0.0
      %1849 = vmatmul.mubr.f32.gmra.mrb[0].mxu0 %v1770
      %v1850 = vpop.f32.mrb[0].mxu0
      %v1851 = vadd.f32 0.0, %v1850
      %v1852 = vpop.f32.mrb[0].mxu0
      %1853 = vmatprep.mubr.f32.mxu0 0.0
      %1854 = vmatmul.mubr.f32.gmra.mrb[0].mxu0 %v1773
      %v1855 = vpop.f32.mrb[0].mxu0
      %v1856 = vadd.f32 0.0, %v1855
      %v1857 = vpop.f32.mrb[0].mxu0
      %1858 = vmatprep.mubr.f32.mxu0 0.0
      %1859 = vmatmul.mubr.f32.gmra.mrb[0].mxu0 %v1776
      %v1860 = vpop.f32.mrb[0].mxu0
      %v1861 = vadd.f32 0.0, %v1860
      %v1862 = vpop.f32.mrb[0].mxu0
      %1863 = vmatprep.mubr.f32.mxu0 0.0
      %1864 = vmatmul.mubr.f32.gmra.mrb[0].mxu0 %v1779
      %v1865 = vpop.f32.mrb[0].mxu0
      %v1866 = vadd.f32 0.0, %v1865
      %v1867 = vpop.f32.mrb[0].mxu0
      %1868 = vmatprep.mubr.f32.mxu0 0.0
      %1869 = vmatmul.mubr.f32.gmra.mrb[0].mxu0 %v1782
      %v1870 = vpop.f32.mrb[0].mxu0
      %v1871 = vadd.f32 0.0, %v1870
      %v1872 = vpop.f32.mrb[0].mxu0
      %1873 = vdwg.mxu0
      %v1874 = vadd.f32 %v1440, %v1851
      %v1875 = vadd.f32 %v1445, %v1856
      %v1876 = vadd.f32 %v1450, %v1861
      %v1877 = vadd.f32 %v1455, %v1866
      %v1878 = vadd.f32 %v1460, %v1871
      %1879 = vrot.lane.b32.xlu0 %v635, 80
      %v1880 = vpop.permute.xlu0 %1879
      %1881 = vrot.lane.b32.xlu0 %v636, 80
      %v1882 = vpop.permute.xlu0 %1881
      %1883 = vrot.lane.b32.xlu0 %v637, 80
      %v1884 = vpop.permute.xlu0 %1883
      %1885 = vrot.lane.b32.xlu0 %v638, 80
      %v1886 = vpop.permute.xlu0 %1885
      %1887 = vrot.lane.b32.xlu0 %v639, 80
      %v1888 = vpop.permute.xlu0 %1887
      %1889 = vrot.lane.b32.xlu0 %v599, 16
      %v1890 = vpop.permute.xlu0 %1889
      %1891 = vrot.lane.b32.xlu0 %v605, 16
      %v1892 = vpop.permute.xlu0 %1891
      %1893 = vrot.lane.b32.xlu0 %v611, 16
      %v1894 = vpop.permute.xlu0 %1893
      %1895 = vrot.lane.b32.xlu0 %v617, 16
      %v1896 = vpop.permute.xlu0 %1895
      %1897 = vrot.lane.b32.xlu0 %v623, 16
      %v1898 = vpop.permute.xlu0 %1897
      %v1899 = vsel %vm661, %v1880, 0
      %v1901 = vsel %vm661, %v1882, 0
      %v1903 = vsel %vm661, %v1884, 0
      %v1905 = vsel %vm661, %v1886, 0
      %v1907 = vsel %vm661, %v1888, 0
      %v1909 = vsel %vm661, %v1890, 0
      %v1911 = vsel %vm661, %v1892, 0
      %v1913 = vsel %vm661, %v1894, 0
      %v1915 = vsel %vm661, %v1896, 0
      %v1917 = vsel %vm661, %v1898, 0
      %1919 = vmatprep.subr.mxu0 0.0
      %1920 = vmatpush1.xpose.msra.mxu0 %v1909
      %1921 = vmatprep.subr.mxu0 0.0
      %1922 = vmatpush1.xpose.msra.mxu0 %v1911
      %1923 = vmatprep.subr.mxu0 0.0
      %1924 = vmatpush1.xpose.msra.mxu0 %v1913
      %1925 = vmatprep.subr.mxu0 0.0
      %1926 = vmatpush1.xpose.msra.mxu0 %v1915
      %1927 = vmatprep.subr.mxu0 0.0
      %1928 = vmatpush1.xpose.msra.mxu0 %v1917
      %1929 = vmatprep.subr.mxu0 0.0
      %1930 = vmatpush1.xpose.msra.mxu0 0.0
      %1931 = vmatprep.subr.mxu0 0.0
      %1932 = vmatpush1.xpose.msra.mxu0 0.0
      %1933 = vmatprep.subr.mxu0 0.0
      %1934 = vmatpush1.xpose.msra.mxu0 0.0
      %1935 = vmatprep.subr.mxu0 0.0
      %1936 = vmatpush1.xpose.msra.mxu0 0.0
      %1937 = vmatprep.subr.mxu0 0.0
      %1938 = vmatpush1.xpose.msra.mxu0 0.0
      %1939 = vmatprep.subr.mxu0 0.0
      %1940 = vmatpush1.xpose.msra.mxu0 0.0
      %1941 = vmatprep.subr.mxu0 0.0
      %1942 = vmatpush1.xpose.msra.mxu0 0.0
      %1943 = vmatprep.subr.mxu0 0.0
      %1944 = vmatpush1.xpose.msra.mxu0 0.0
      %1945 = vmatprep.subr.mxu0 0.0
      %1946 = vmatpush1.xpose.msra.mxu0 0.0
      %1947 = vmatprep.subr.mxu0 0.0
      %1948 = vmatpush1.xpose.msra.mxu0 0.0
      %1949 = vmatprep.subr.mxu0 0.0
      %1950 = vmatpush1.xpose.msra.mxu0 0.0
      %1951 = vmatprep.subr.mxu0 0.0
      %1952 = vmatpush1.xpose.msra.mxu0 0.0
      %1953 = vmatprep.subr.mxu0 0.0
      %1954 = vmatpush1.xpose.msra.mxu0 0.0
      %1955 = vmatprep.subr.mxu0 0.0
      %1956 = vmatpush1.xpose.msra.mxu0 0.0
      %1957 = vmatprep.subr.mxu0 0.0
      %1958 = vmatpush1.xpose.msra.mxu0 0.0
      %1959 = vmatprep.subr.mxu0 0.0
      %1960 = vmatpush1.xpose.msra.mxu0 0.0
      %1961 = vmatprep.subr.mxu0 0.0
      %1962 = vmatpush1.xpose.msra.mxu0 0.0
      %1963 = vmatprep.subr.mxu0 0.0
      %1964 = vmatpush1.xpose.msra.mxu0 0.0
      %1965 = vmatprep.subr.mxu0 0.0
      %1966 = vmatpush1.xpose.msra.mxu0 0.0
      %1967 = vmatprep.subr.mxu0 0.0
      %1968 = vmatpush1.xpose.msra.mxu0 0.0
      %1969 = vmatprep.subr.mxu0 0.0
      %1970 = vmatpush1.xpose.msra.mxu0 0.0
      %1971 = vmatprep.subr.mxu0 0.0
      %1972 = vmatpush1.xpose.msra.mxu0 0.0
      %1973 = vmatprep.subr.mxu0 0.0
      %1974 = vmatpush1.xpose.msra.mxu0 0.0
      %1975 = vmatprep.subr.mxu0 0.0
      %1976 = vmatpush1.xpose.msra.mxu0 0.0
      %1977 = vmatprep.subr.mxu0 0.0
      %1978 = vmatpush1.xpose.msra.mxu0 0.0
      %1979 = vmatprep.subr.mxu0 0.0
      %1980 = vmatpush1.xpose.msra.mxu0 0.0
      %1981 = vmatprep.subr.mxu0 0.0
      %1982 = vmatpush1.xpose.msra.mxu0 0.0
      %1983 = vmatprep.mubr.f32.mxu0 0.0
      %1984 = vmatmul.mubr.f32.gmra.mrb[0].mxu0 %v1899
      %v1985 = vpop.f32.mrb[0].mxu0
      %v1986 = vadd.f32 %v644, %v1985
      %v1987 = vpop.f32.mrb[0].mxu0
      %1988 = vmatprep.mubr.f32.mxu0 0.0
      %1989 = vmatmul.mubr.f32.gmra.mrb[0].mxu0 %v1901
      %v1990 = vpop.f32.mrb[0].mxu0
      %v1991 = vadd.f32 %v644, %v1990
      %v1992 = vpop.f32.mrb[0].mxu0
      %1993 = vmatprep.mubr.f32.mxu0 0.0
      %1994 = vmatmul.mubr.f32.gmra.mrb[0].mxu0 %v1903
      %v1995 = vpop.f32.mrb[0].mxu0
      %v1996 = vadd.f32 %v644, %v1995
      %v1997 = vpop.f32.mrb[0].mxu0
      %1998 = vmatprep.mubr.f32.mxu0 0.0
      %1999 = vmatmul.mubr.f32.gmra.mrb[0].mxu0 %v1905
      %v2000 = vpop.f32.mrb[0].mxu0
      %v2001 = vadd.f32 %v644, %v2000
      %v2002 = vpop.f32.mrb[0].mxu0
      %2003 = vmatprep.mubr.f32.mxu0 0.0
      %2004 = vmatmul.mubr.f32.gmra.mrb[0].mxu0 %v1907
      %v2005 = vpop.f32.mrb[0].mxu0
      %v2006 = vadd.f32 %v644, %v2005
      %v2007 = vpop.f32.mrb[0].mxu0
      %2008 = vdwg.mxu0
      %v2009 = vsel %vm777, %v1986, -inf
      %2010 = vmax.xlane.f32.xlu0 %v2009
      %v2011 = vpop.xlane.xlu0 %2010
      %v2012 = vsel %vm777, %v1991, -inf
      %2013 = vmax.xlane.f32.xlu0 %v2012
      %v2014 = vpop.xlane.xlu0 %2013
      %v2015 = vsel %vm777, %v1996, -inf
      %2016 = vmax.xlane.f32.xlu0 %v2015
      %v2017 = vpop.xlane.xlu0 %2016
      %v2018 = vsel %vm777, %v2001, -inf
      %2019 = vmax.xlane.f32.xlu0 %v2018
      %v2020 = vpop.xlane.xlu0 %2019
      %v2021 = vsel %vm790, %v2006, -inf
      %2022 = vmax.xlane.f32.xlu0 %v2021
      %v2023 = vpop.xlane.xlu0 %2022
      %v2024 = vsub.f32 %v1986, %v2011
      %v2025 = vsub.f32 %v1991, %v2014
      %v2026 = vsub.f32 %v1996, %v2017
      %v2027 = vsub.f32 %v2001, %v2020
      %v2028 = vsub.f32 %v2006, %v2023
      %v2029 = vmul.f32 %v2024, 1.442695
      %v2030 = vpow.pop %v2029
      %v2031 = vmul.f32 %v2025, 1.442695
      %v2032 = vpow.pop %v2031
      %v2033 = vmul.f32 %v2026, 1.442695
      %v2034 = vpow.pop %v2033
      %v2035 = vmul.f32 %v2027, 1.442695
      %v2036 = vpow.pop %v2035
      %v2037 = vmul.f32 %v2028, 1.442695
      %v2038 = vpow.pop %v2037
      %v2039 = vsel %vm777, %v2030, 0.0
      %2040 = vadd.xlane.f32.xlu0 %v2039
      %v2041 = vpop.xlane.xlu0 %2040
      %v2042 = vsel %vm777, %v2032, 0.0
      %2043 = vadd.xlane.f32.xlu0 %v2042
      %v2044 = vpop.xlane.xlu0 %2043
      %v2045 = vsel %vm777, %v2034, 0.0
      %2046 = vadd.xlane.f32.xlu0 %v2045
      %v2047 = vpop.xlane.xlu0 %2046
      %v2048 = vsel %vm777, %v2036, 0.0
      %2049 = vadd.xlane.f32.xlu0 %v2048
      %v2050 = vpop.xlane.xlu0 %2049
      %v2051 = vsel %vm790, %v2038, 0.0
      %2052 = vadd.xlane.f32.xlu0 %v2051
      %v2053 = vpop.xlane.xlu0 %2052
      %v2054 = vrcp.pop %v2041
      %v2055 = vmul.f32 %v2030, %v2054
      %v2056 = vrcp.pop %v2044
      %v2057 = vmul.f32 %v2032, %v2056
      %v2058 = vrcp.pop %v2047
      %v2059 = vmul.f32 %v2034, %v2058
      %v2060 = vrcp.pop %v2050
      %v2061 = vmul.f32 %v2036, %v2060
      %v2062 = vrcp.pop %v2053
      %v2063 = vmul.f32 %v2038, %v2062
      %2064 = vrot.lane.b32.xlu0 %v601, 80
      %v2065 = vpop.permute.xlu0 %2064
      %2066 = vrot.lane.b32.xlu0 %v607, 80
      %v2067 = vpop.permute.xlu0 %2066
      %2068 = vrot.lane.b32.xlu0 %v613, 80
      %v2069 = vpop.permute.xlu0 %2068
      %2070 = vrot.lane.b32.xlu0 %v619, 80
      %v2071 = vpop.permute.xlu0 %2070
      %2072 = vrot.lane.b32.xlu0 %v625, 80
      %v2073 = vpop.permute.xlu0 %2072
      %v2079 = vsel %vm777, %v2055, 0
      %v2082 = vsel %vm777, %v2057, 0
      %v2085 = vsel %vm777, %v2059, 0
      %v2088 = vsel %vm777, %v2061, 0
      %v2091 = vsel %vm777, %v2063, 0
      %v2093 = vsel %vm849, %v2073, 0
      %2095 = vmatprep.subr.mxu0 0.0
      %2096 = vmatpush1.msra.mxu0 %v2065
      %2097 = vmatprep.subr.mxu0 0.0
      %2098 = vmatpush1.msra.mxu0 %v2067
      %2099 = vmatprep.subr.mxu0 0.0
      %2100 = vmatpush1.msra.mxu0 %v2069
      %2101 = vmatprep.subr.mxu0 0.0
      %2102 = vmatpush1.msra.mxu0 %v2071
      %2103 = vmatprep.subr.mxu0 0.0
      %2104 = vmatpush1.msra.mxu0 %v2093
      %2105 = vmatprep.subr.mxu0 0.0
      %2106 = vmatpush1.msra.mxu0 0.0
      %2107 = vmatprep.subr.mxu0 0.0
      %2108 = vmatpush1.msra.mxu0 0.0
      %2109 = vmatprep.subr.mxu0 0.0
      %2110 = vmatpush1.msra.mxu0 0.0
      %2111 = vmatprep.subr.mxu0 0.0
      %2112 = vmatpush1.msra.mxu0 0.0
      %2113 = vmatprep.subr.mxu0 0.0
      %2114 = vmatpush1.msra.mxu0 0.0
      %2115 = vmatprep.subr.mxu0 0.0
      %2116 = vmatpush1.msra.mxu0 0.0
      %2117 = vmatprep.subr.mxu0 0.0
      %2118 = vmatpush1.msra.mxu0 0.0
      %2119 = vmatprep.subr.mxu0 0.0
      %2120 = vmatpush1.msra.mxu0 0.0
      %2121 = vmatprep.subr.mxu0 0.0
      %2122 = vmatpush1.msra.mxu0 0.0
      %2123 = vmatprep.subr.mxu0 0.0
      %2124 = vmatpush1.msra.mxu0 0.0
      %2125 = vmatprep.subr.mxu0 0.0
      %2126 = vmatpush1.msra.mxu0 0.0
      %2127 = vmatprep.subr.mxu0 0.0
      %2128 = vmatpush1.msra.mxu0 0.0
      %2129 = vmatprep.subr.mxu0 0.0
      %2130 = vmatpush1.msra.mxu0 0.0
      %2131 = vmatprep.subr.mxu0 0.0
      %2132 = vmatpush1.msra.mxu0 0.0
      %2133 = vmatprep.subr.mxu0 0.0
      %2134 = vmatpush1.msra.mxu0 0.0
      %2135 = vmatprep.subr.mxu0 0.0
      %2136 = vmatpush1.msra.mxu0 0.0
      %2137 = vmatprep.subr.mxu0 0.0
      %2138 = vmatpush1.msra.mxu0 0.0
      %2139 = vmatprep.subr.mxu0 0.0
      %2140 = vmatpush1.msra.mxu0 0.0
      %2141 = vmatprep.subr.mxu0 0.0
      %2142 = vmatpush1.msra.mxu0 0.0
      %2143 = vmatprep.subr.mxu0 0.0
      %2144 = vmatpush1.msra.mxu0 0.0
      %2145 = vmatprep.subr.mxu0 0.0
      %2146 = vmatpush1.msra.mxu0 0.0
      %2147 = vmatprep.subr.mxu0 0.0
      %2148 = vmatpush1.msra.mxu0 0.0
      %2149 = vmatprep.subr.mxu0 0.0
      %2150 = vmatpush1.msra.mxu0 0.0
      %2151 = vmatprep.subr.mxu0 0.0
      %2152 = vmatpush1.msra.mxu0 0.0
      %2153 = vmatprep.subr.mxu0 0.0
      %2154 = vmatpush1.msra.mxu0 0.0
      %2155 = vmatprep.subr.mxu0 0.0
      %2156 = vmatpush1.msra.mxu0 0.0
      %2157 = vmatprep.subr.mxu0 0.0
      %2158 = vmatpush1.msra.mxu0 0.0
      %2159 = vmatprep.mubr.f32.mxu0 0.0
      %2160 = vmatmul.mubr.f32.gmra.mrb[0].mxu0 %v2079
      %v2161 = vpop.f32.mrb[0].mxu0
      %v2162 = vadd.f32 0.0, %v2161
      %v2163 = vpop.f32.mrb[0].mxu0
      %2164 = vmatprep.mubr.f32.mxu0 0.0
      %2165 = vmatmul.mubr.f32.gmra.mrb[0].mxu0 %v2082
      %v2166 = vpop.f32.mrb[0].mxu0
      %v2167 = vadd.f32 0.0, %v2166
      %v2168 = vpop.f32.mrb[0].mxu0
      %2169 = vmatprep.mubr.f32.mxu0 0.0
      %2170 = vmatmul.mubr.f32.gmra.mrb[0].mxu0 %v2085
      %v2171 = vpop.f32.mrb[0].mxu0
      %v2172 = vadd.f32 0.0, %v2171
      %v2173 = vpop.f32.mrb[0].mxu0
      %2174 = vmatprep.mubr.f32.mxu0 0.0
      %2175 = vmatmul.mubr.f32.gmra.mrb[0].mxu0 %v2088
      %v2176 = vpop.f32.mrb[0].mxu0
      %v2177 = vadd.f32 0.0, %v2176
      %v2178 = vpop.f32.mrb[0].mxu0
      %2179 = vmatprep.mubr.f32.mxu0 0.0
      %2180 = vmatmul.mubr.f32.gmra.mrb[0].mxu0 %v2091
      %v2181 = vpop.f32.mrb[0].mxu0
      %v2182 = vadd.f32 0.0, %v2181
      %v2183 = vpop.f32.mrb[0].mxu0
      %2184 = vdwg.mxu0
      %v2186 = vsel %vm661, %v2162, 0
      %v2189 = vsel %vm661, %v2167, 0
      %v2192 = vsel %vm661, %v2172, 0
      %v2195 = vsel %vm661, %v2177, 0
      %v2198 = vsel %vm661, %v2182, 0
      %2200 = vmatprep.subr.mxu0 0.0
      %2201 = vmatpush1.msra.mxu0 %v633
      %2202 = vmatprep.subr.mxu0 0.0
      %2203 = vmatpush1.msra.mxu0 %v634
      %2204 = vmatprep.subr.mxu0 0.0
      %2205 = vmatpush1.msra.mxu0 0.0
      %2206 = vmatprep.subr.mxu0 0.0
      %2207 = vmatpush1.msra.mxu0 0.0
      %2208 = vmatprep.subr.mxu0 0.0
      %2209 = vmatpush1.msra.mxu0 0.0
      %2210 = vmatprep.subr.mxu0 0.0
      %2211 = vmatpush1.msra.mxu0 0.0
      %2212 = vmatprep.subr.mxu0 0.0
      %2213 = vmatpush1.msra.mxu0 0.0
      %2214 = vmatprep.subr.mxu0 0.0
      %2215 = vmatpush1.msra.mxu0 0.0
      %2216 = vmatprep.subr.mxu0 0.0
      %2217 = vmatpush1.msra.mxu0 0.0
      %2218 = vmatprep.subr.mxu0 0.0
      %2219 = vmatpush1.msra.mxu0 0.0
      %2220 = vmatprep.subr.mxu0 0.0
      %2221 = vmatpush1.msra.mxu0 0.0
      %2222 = vmatprep.subr.mxu0 0.0
      %2223 = vmatpush1.msra.mxu0 0.0
      %2224 = vmatprep.subr.mxu0 0.0
      %2225 = vmatpush1.msra.mxu0 0.0
      %2226 = vmatprep.subr.mxu0 0.0
      %2227 = vmatpush1.msra.mxu0 0.0
      %2228 = vmatprep.subr.mxu0 0.0
      %2229 = vmatpush1.msra.mxu0 0.0
      %2230 = vmatprep.subr.mxu0 0.0
      %2231 = vmatpush1.msra.mxu0 0.0
      %2232 = vmatprep.subr.mxu0 0.0
      %2233 = vmatpush1.msra.mxu0 0.0
      %2234 = vmatprep.subr.mxu0 0.0
      %2235 = vmatpush1.msra.mxu0 0.0
      %2236 = vmatprep.subr.mxu0 0.0
      %2237 = vmatpush1.msra.mxu0 0.0
      %2238 = vmatprep.subr.mxu0 0.0
      %2239 = vmatpush1.msra.mxu0 0.0
      %2240 = vmatprep.subr.mxu0 0.0
      %2241 = vmatpush1.msra.mxu0 0.0
      %2242 = vmatprep.subr.mxu0 0.0
      %2243 = vmatpush1.msra.mxu0 0.0
      %2244 = vmatprep.subr.mxu0 0.0
      %2245 = vmatpush1.msra.mxu0 0.0
      %2246 = vmatprep.subr.mxu0 0.0
      %2247 = vmatpush1.msra.mxu0 0.0
      %2248 = vmatprep.subr.mxu0 0.0
      %2249 = vmatpush1.msra.mxu0 0.0
      %2250 = vmatprep.subr.mxu0 0.0
      %2251 = vmatpush1.msra.mxu0 0.0
      %2252 = vmatprep.subr.mxu0 0.0
      %2253 = vmatpush1.msra.mxu0 0.0
      %2254 = vmatprep.subr.mxu0 0.0
      %2255 = vmatpush1.msra.mxu0 0.0
      %2256 = vmatprep.subr.mxu0 0.0
      %2257 = vmatpush1.msra.mxu0 0.0
      %2258 = vmatprep.subr.mxu0 0.0
      %2259 = vmatpush1.msra.mxu0 0.0
      %2260 = vmatprep.subr.mxu0 0.0
      %2261 = vmatpush1.msra.mxu0 0.0
      %2262 = vmatprep.subr.mxu0 0.0
      %2263 = vmatpush1.msra.mxu0 0.0
      %2264 = vmatprep.mubr.f32.mxu0 0.0
      %2265 = vmatmul.mubr.f32.gmra.mrb[0].mxu0 %v2186
      %v2266 = vpop.f32.mrb[0].mxu0
      %v2267 = vadd.f32 0.0, %v2266
      %v2268 = vpop.f32.mrb[0].mxu0
      %2269 = vmatprep.mubr.f32.mxu0 0.0
      %2270 = vmatmul.mubr.f32.gmra.mrb[0].mxu0 %v2189
      %v2271 = vpop.f32.mrb[0].mxu0
      %v2272 = vadd.f32 0.0, %v2271
      %v2273 = vpop.f32.mrb[0].mxu0
      %2274 = vmatprep.mubr.f32.mxu0 0.0
      %2275 = vmatmul.mubr.f32.gmra.mrb[0].mxu0 %v2192
      %v2276 = vpop.f32.mrb[0].mxu0
      %v2277 = vadd.f32 0.0, %v2276
      %v2278 = vpop.f32.mrb[0].mxu0
      %2279 = vmatprep.mubr.f32.mxu0 0.0
      %2280 = vmatmul.mubr.f32.gmra.mrb[0].mxu0 %v2195
      %v2281 = vpop.f32.mrb[0].mxu0
      %v2282 = vadd.f32 0.0, %v2281
      %v2283 = vpop.f32.mrb[0].mxu0
      %2284 = vmatprep.mubr.f32.mxu0 0.0
      %2285 = vmatmul.mubr.f32.gmra.mrb[0].mxu0 %v2198
      %v2286 = vpop.f32.mrb[0].mxu0
      %v2287 = vadd.f32 0.0, %v2286
      %v2288 = vpop.f32.mrb[0].mxu0
      %2289 = vdwg.mxu0
      %v2290 = vadd.f32 %v1874, %v2267
      %v2291 = vadd.f32 %v1875, %v2272
      %v2292 = vadd.f32 %v1876, %v2277
      %v2293 = vadd.f32 %v1877, %v2282
      %v2294 = vadd.f32 %v1878, %v2287
      %v2295 = vadd.f32 %v482, %v2290
      %v2296 = vadd.f32 %v483, %v2291
      %v2297 = vadd.f32 %v484, %v2292
      %v2298 = vadd.f32 %v485, %v2293
      %v2299 = vadd.f32 %v486, %v2294
      %v2300 = vld [vmem:[%s5] sm:$0x1]
      %v2302 = vlaneseq
      %v2303 = vshrl.u32 %v2302, 7
      %v2304 = vsub.s32 0, %v2303
      %v2305 = vrot.slane %v2300, %v2304
      %v2307 = vadd.f32 %v2295, %v2305
      %v2308 = vadd.f32 %v2296, %v2305
      %v2309 = vadd.f32 %v2297, %v2305
      %v2310 = vadd.f32 %v2298, %v2305
      %v2311 = vadd.f32 %v2299, %v2305
      %v2312 = vld [vmem:[%s6] sm:$0x1]
      %v2313 = vld [vmem:[%s7] sm:$0x1]
      %v2314 = vsel %vm516, %v2307, 0.0
      %2315 = vadd.xlane.f32.xlu0 %v2314
      %v2316 = vpop.xlane.xlu0 %2315
      %v2317 = vsel %vm516, %v2308, 0.0
      %2318 = vadd.xlane.f32.xlu0 %v2317
      %v2319 = vpop.xlane.xlu0 %2318
      %v2320 = vsel %vm516, %v2309, 0.0
      %2321 = vadd.xlane.f32.xlu0 %v2320
      %v2322 = vpop.xlane.xlu0 %2321
      %v2323 = vsel %vm516, %v2310, 0.0
      %2324 = vadd.xlane.f32.xlu0 %v2323
      %v2325 = vpop.xlane.xlu0 %2324
      %vm2326 = vcmask 522240
      %v2327 = vsel %vm2326, %v2311, 0.0
      %2328 = vadd.xlane.f32.xlu0 %v2327
      %v2329 = vpop.xlane.xlu0 %2328
      %v2330 = vrcp.pop 64.0
      %v2331 = vmul.f32 %v2316, %v2330
      %v2332 = vmul.f32 %v2319, %v2330
      %v2333 = vmul.f32 %v2322, %v2330
      %v2334 = vmul.f32 %v2325, %v2330
      %v2335 = vmul.f32 %v2329, %v2330
      %v2336 = vsub.f32 %v2307, %v2331
      %v2337 = vsub.f32 %v2308, %v2332
      %v2338 = vsub.f32 %v2309, %v2333
      %v2339 = vsub.f32 %v2310, %v2334
      %v2340 = vsub.f32 %v2311, %v2335
      %v2341 = vmul.f32 %v2336, %v2336
      %v2342 = vmul.f32 %v2337, %v2337
      %v2343 = vmul.f32 %v2338, %v2338
      %v2344 = vmul.f32 %v2339, %v2339
      %v2345 = vmul.f32 %v2340, %v2340
      %v2346 = vsel %vm516, %v2341, 0.0
      %2347 = vadd.xlane.f32.xlu0 %v2346
      %v2348 = vpop.xlane.xlu0 %2347
      %v2349 = vsel %vm516, %v2342, 0.0
      %2350 = vadd.xlane.f32.xlu0 %v2349
      %v2351 = vpop.xlane.xlu0 %2350
      %v2352 = vsel %vm516, %v2343, 0.0
      %2353 = vadd.xlane.f32.xlu0 %v2352
      %v2354 = vpop.xlane.xlu0 %2353
      %v2355 = vsel %vm516, %v2344, 0.0
      %2356 = vadd.xlane.f32.xlu0 %v2355
      %v2357 = vpop.xlane.xlu0 %2356
      %v2358 = vsel %vm2326, %v2345, 0.0
      %2359 = vadd.xlane.f32.xlu0 %v2358
      %v2360 = vpop.xlane.xlu0 %2359
      %v2361 = vmul.f32 %v2348, %v2330
      %v2362 = vmul.f32 %v2351, %v2330
      %v2363 = vmul.f32 %v2354, %v2330
      %v2364 = vmul.f32 %v2357, %v2330
      %v2365 = vmul.f32 %v2360, %v2330
      %v2366 = vadd.f32 %v2361, 1e-05
      %v2367 = vadd.f32 %v2362, 1e-05
      %v2368 = vadd.f32 %v2363, 1e-05
      %v2369 = vadd.f32 %v2364, 1e-05
      %v2370 = vadd.f32 %v2365, 1e-05
      %v2371 = vrsqrt.pop %v2366
      %v2372 = vrsqrt.pop %v2367
      %v2373 = vrsqrt.pop %v2368
      %v2374 = vrsqrt.pop %v2369
      %v2375 = vrsqrt.pop %v2370
      %v2376 = vmul.f32 %v2336, %v2371
      %v2377 = vmul.f32 %v2337, %v2372
      %v2378 = vmul.f32 %v2338, %v2373
      %v2379 = vmul.f32 %v2339, %v2374
      %v2380 = vmul.f32 %v2340, %v2375
      %v2382 = vlaneseq
      %v2383 = vshrl.u32 %v2382, 7
      %v2384 = vsub.s32 0, %v2383
      %v2385 = vrot.slane %v2312, %v2384
      %v2387 = vmul.f32 %v2376, %v2385
      %v2388 = vmul.f32 %v2377, %v2385
      %v2389 = vmul.f32 %v2378, %v2385
      %v2390 = vmul.f32 %v2379, %v2385
      %v2391 = vmul.f32 %v2380, %v2385
      %v2393 = vlaneseq
      %v2394 = vshrl.u32 %v2393, 7
      %v2395 = vsub.s32 0, %v2394
      %v2396 = vrot.slane %v2313, %v2395
      %v2398 = vadd.f32 %v2387, %v2396
      %v2399 = vadd.f32 %v2388, %v2396
      %v2400 = vadd.f32 %v2389, %v2396
      %v2401 = vadd.f32 %v2390, %v2396
      %v2402 = vadd.f32 %v2391, %v2396
      %v2403 = vld [vmem:[%s8] sm:$0xff]
      %v2404 = vld [vmem:[%s8 + $0x8] sm:$0xff]
      %v2405 = vld [vmem:[%s8 + $0x10] sm:$0xff]
      %v2406 = vld [vmem:[%s8 + $0x18] sm:$0xff]
      %v2407 = vld [vmem:[%s8 + $0x20] sm:$0xff]
      %v2408 = vld [vmem:[%s8 + $0x28] sm:$0xff]
      %v2409 = vld [vmem:[%s8 + $0x30] sm:$0xff]
      %v2410 = vld [vmem:[%s8 + $0x38] sm:$0xff]
      %v2411 = vld [vmem:[%s9] sm:$0x1]
      %v2413 = vlaneseq
      %v2414 = vshrl.u32 %v2413, 7
      %v2415 = vsub.s32 0, %v2414
      %v2416 = vrot.slane %v2411, %v2415
      %v2419 = vsel %vm516, %v2398, 0
      %v2422 = vsel %vm516, %v2399, 0
      %v2425 = vsel %vm516, %v2400, 0
      %v2428 = vsel %vm516, %v2401, 0
      %v2431 = vsel %vm516, %v2402, 0
      %2433 = vmatprep.subr.mxu0 0.0
      %2434 = vmatpush1.msra.mxu0 %v2403
      %2435 = vmatprep.subr.mxu0 0.0
      %2436 = vmatpush1.msra.mxu0 %v2404
      %2437 = vmatprep.subr.mxu0 0.0
      %2438 = vmatpush1.msra.mxu0 %v2405
      %2439 = vmatprep.subr.mxu0 0.0
      %2440 = vmatpush1.msra.mxu0 %v2406
      %2441 = vmatprep.subr.mxu0 0.0
      %2442 = vmatpush1.msra.mxu0 %v2407
      %2443 = vmatprep.subr.mxu0 0.0
      %2444 = vmatpush1.msra.mxu0 %v2408
      %2445 = vmatprep.subr.mxu0 0.0
      %2446 = vmatpush1.msra.mxu0 %v2409
      %2447 = vmatprep.subr.mxu0 0.0
      %2448 = vmatpush1.msra.mxu0 %v2410
      %2449 = vmatprep.subr.mxu0 0.0
      %2450 = vmatpush1.msra.mxu0 0.0
      %2451 = vmatprep.subr.mxu0 0.0
      %2452 = vmatpush1.msra.mxu0 0.0
      %2453 = vmatprep.subr.mxu0 0.0
      %2454 = vmatpush1.msra.mxu0 0.0
      %2455 = vmatprep.subr.mxu0 0.0
      %2456 = vmatpush1.msra.mxu0 0.0
      %2457 = vmatprep.subr.mxu0 0.0
      %2458 = vmatpush1.msra.mxu0 0.0
      %2459 = vmatprep.subr.mxu0 0.0
      %2460 = vmatpush1.msra.mxu0 0.0
      %2461 = vmatprep.subr.mxu0 0.0
      %2462 = vmatpush1.msra.mxu0 0.0
      %2463 = vmatprep.subr.mxu0 0.0
      %2464 = vmatpush1.msra.mxu0 0.0
      %2465 = vmatprep.subr.mxu0 0.0
      %2466 = vmatpush1.msra.mxu0 0.0
      %2467 = vmatprep.subr.mxu0 0.0
      %2468 = vmatpush1.msra.mxu0 0.0
      %2469 = vmatprep.subr.mxu0 0.0
      %2470 = vmatpush1.msra.mxu0 0.0
      %2471 = vmatprep.subr.mxu0 0.0
      %2472 = vmatpush1.msra.mxu0 0.0
      %2473 = vmatprep.subr.mxu0 0.0
      %2474 = vmatpush1.msra.mxu0 0.0
      %2475 = vmatprep.subr.mxu0 0.0
      %2476 = vmatpush1.msra.mxu0 0.0
      %2477 = vmatprep.subr.mxu0 0.0
      %2478 = vmatpush1.msra.mxu0 0.0
      %2479 = vmatprep.subr.mxu0 0.0
      %2480 = vmatpush1.msra.mxu0 0.0
      %2481 = vmatprep.subr.mxu0 0.0
      %2482 = vmatpush1.msra.mxu0 0.0
      %2483 = vmatprep.subr.mxu0 0.0
      %2484 = vmatpush1.msra.mxu0 0.0
      %2485 = vmatprep.subr.mxu0 0.0
      %2486 = vmatpush1.msra.mxu0 0.0
      %2487 = vmatprep.subr.mxu0 0.0
      %2488 = vmatpush1.msra.mxu0 0.0
      %2489 = vmatprep.subr.mxu0 0.0
      %2490 = vmatpush1.msra.mxu0 0.0
      %2491 = vmatprep.subr.mxu0 0.0
      %2492 = vmatpush1.msra.mxu0 0.0
      %2493 = vmatprep.subr.mxu0 0.0
      %2494 = vmatpush1.msra.mxu0 0.0
      %2495 = vmatprep.subr.mxu0 0.0
      %2496 = vmatpush1.msra.mxu0 0.0
      %2497 = vmatprep.mubr.f32.mxu0 0.0
      %2498 = vmatmul.mubr.f32.gmra.mrb[0].mxu0 %v2419
      %v2499 = vpop.f32.mrb[0].mxu0
      %v2500 = vadd.f32 %v2416, %v2499
      %v2501 = vpop.f32.mrb[0].mxu0
      %2502 = vmatprep.mubr.f32.mxu0 0.0
      %2503 = vmatmul.mubr.f32.gmra.mrb[0].mxu0 %v2422
      %v2504 = vpop.f32.mrb[0].mxu0
      %v2505 = vadd.f32 %v2416, %v2504
      %v2506 = vpop.f32.mrb[0].mxu0
      %2507 = vmatprep.mubr.f32.mxu0 0.0
      %2508 = vmatmul.mubr.f32.gmra.mrb[0].mxu0 %v2425
      %v2509 = vpop.f32.mrb[0].mxu0
      %v2510 = vadd.f32 %v2416, %v2509
      %v2511 = vpop.f32.mrb[0].mxu0
      %2512 = vmatprep.mubr.f32.mxu0 0.0
      %2513 = vmatmul.mubr.f32.gmra.mrb[0].mxu0 %v2428
      %v2514 = vpop.f32.mrb[0].mxu0
      %v2515 = vadd.f32 %v2416, %v2514
      %v2516 = vpop.f32.mrb[0].mxu0
      %2517 = vmatprep.mubr.f32.mxu0 0.0
      %2518 = vmatmul.mubr.f32.gmra.mrb[0].mxu0 %v2431
      %v2519 = vpop.f32.mrb[0].mxu0
      %v2520 = vadd.f32 %v2416, %v2519
      %v2521 = vpop.f32.mrb[0].mxu0
      %2522 = vdwg.mxu0
      %v2523 = vmul.f32 %v2500, %v2500
      %v2524 = vmul.f32 %v2505, %v2505
      %v2525 = vmul.f32 %v2510, %v2510
      %v2526 = vmul.f32 %v2515, %v2515
      %v2527 = vmul.f32 %v2520, %v2520
      %v2528 = vmul.f32 %v2500, %v2523
      %v2529 = vmul.f32 %v2505, %v2524
      %v2530 = vmul.f32 %v2510, %v2525
      %v2531 = vmul.f32 %v2515, %v2526
      %v2532 = vmul.f32 %v2520, %v2527
      %v2533 = vmul.f32 %v2528, 0.044715
      %v2534 = vmul.f32 %v2529, 0.044715
      %v2535 = vmul.f32 %v2530, 0.044715
      %v2536 = vmul.f32 %v2531, 0.044715
      %v2537 = vmul.f32 %v2532, 0.044715
      %v2538 = vadd.f32 %v2500, %v2533
      %v2539 = vadd.f32 %v2505, %v2534
      %v2540 = vadd.f32 %v2510, %v2535
      %v2541 = vadd.f32 %v2515, %v2536
      %v2542 = vadd.f32 %v2520, %v2537
      %v2543 = vmul.f32 %v2538, 0.7978846
      %v2544 = vmul.f32 %v2539, 0.7978846
      %v2545 = vmul.f32 %v2540, 0.7978846
      %v2546 = vmul.f32 %v2541, 0.7978846
      %v2547 = vmul.f32 %v2542, 0.7978846
      %v2548 = vtanh.pop %v2543
      %v2549 = vtanh.pop %v2544
      %v2550 = vtanh.pop %v2545
      %v2551 = vtanh.pop %v2546
      %v2552 = vtanh.pop %v2547
      %v2553 = vadd.f32 %v2548, 1.0
      %v2554 = vadd.f32 %v2549, 1.0
      %v2555 = vadd.f32 %v2550, 1.0
      %v2556 = vadd.f32 %v2551, 1.0
      %v2557 = vadd.f32 %v2552, 1.0
      %v2558 = vmul.f32 %v2553, 0.5
      %v2559 = vmul.f32 %v2554, 0.5
      %v2560 = vmul.f32 %v2555, 0.5
      %v2561 = vmul.f32 %v2556, 0.5
      %v2562 = vmul.f32 %v2557, 0.5
      %v2563 = vmul.f32 %v2500, %v2558
      %v2564 = vmul.f32 %v2505, %v2559
      %v2565 = vmul.f32 %v2510, %v2560
      %v2566 = vmul.f32 %v2515, %v2561
      %v2567 = vmul.f32 %v2520, %v2562
      %v2568 = vld [vmem:[%s10] sm:$0xff]
      %v2569 = vld [vmem:[%s10 + $0x8] sm:$0xff]
      %v2570 = vld [vmem:[%s10 + $0x10] sm:$0xff]
      %v2571 = vld [vmem:[%s10 + $0x18] sm:$0xff]
      %v2572 = vld [vmem:[%s10 + $0x20] sm:$0xff]
      %v2573 = vld [vmem:[%s10 + $0x28] sm:$0xff]
      %v2574 = vld [vmem:[%s10 + $0x30] sm:$0xff]
      %v2575 = vld [vmem:[%s10 + $0x38] sm:$0xff]
      %v2576 = vld [vmem:[%s10 + $0x40] sm:$0xff]
      %v2577 = vld [vmem:[%s10 + $0x48] sm:$0xff]
      %v2578 = vld [vmem:[%s10 + $0x50] sm:$0xff]
      %v2579 = vld [vmem:[%s10 + $0x58] sm:$0xff]
      %v2580 = vld [vmem:[%s10 + $0x60] sm:$0xff]
      %v2581 = vld [vmem:[%s10 + $0x68] sm:$0xff]
      %v2582 = vld [vmem:[%s10 + $0x70] sm:$0xff]
      %v2583 = vld [vmem:[%s10 + $0x78] sm:$0xff]
      %v2584 = vld [vmem:[%s11] sm:$0x1]
      %v2586 = vlaneseq
      %v2587 = vshrl.u32 %v2586, 7
      %v2588 = vsub.s32 0, %v2587
      %v2589 = vrot.slane %v2584, %v2588
      %2591 = vmatprep.subr.mxu0 0.0
      %2592 = vmatpush1.msra.mxu0 %v2568
      %2593 = vmatprep.subr.mxu0 0.0
      %2594 = vmatpush1.msra.mxu0 %v2569
      %2595 = vmatprep.subr.mxu0 0.0
      %2596 = vmatpush1.msra.mxu0 %v2570
      %2597 = vmatprep.subr.mxu0 0.0
      %2598 = vmatpush1.msra.mxu0 %v2571
      %2599 = vmatprep.subr.mxu0 0.0
      %2600 = vmatpush1.msra.mxu0 %v2572
      %2601 = vmatprep.subr.mxu0 0.0
      %2602 = vmatpush1.msra.mxu0 %v2573
      %2603 = vmatprep.subr.mxu0 0.0
      %2604 = vmatpush1.msra.mxu0 %v2574
      %2605 = vmatprep.subr.mxu0 0.0
      %2606 = vmatpush1.msra.mxu0 %v2575
      %2607 = vmatprep.subr.mxu0 0.0
      %2608 = vmatpush1.msra.mxu0 %v2576
      %2609 = vmatprep.subr.mxu0 0.0
      %2610 = vmatpush1.msra.mxu0 %v2577
      %2611 = vmatprep.subr.mxu0 0.0
      %2612 = vmatpush1.msra.mxu0 %v2578
      %2613 = vmatprep.subr.mxu0 0.0
      %2614 = vmatpush1.msra.mxu0 %v2579
      %2615 = vmatprep.subr.mxu0 0.0
      %2616 = vmatpush1.msra.mxu0 %v2580
      %2617 = vmatprep.subr.mxu0 0.0
      %2618 = vmatpush1.msra.mxu0 %v2581
      %2619 = vmatprep.subr.mxu0 0.0
      %2620 = vmatpush1.msra.mxu0 %v2582
      %2621 = vmatprep.subr.mxu0 0.0
      %2622 = vmatpush1.msra.mxu0 %v2583
      %2623 = vmatprep.subr.mxu0 0.0
      %2624 = vmatpush1.msra.mxu0 0.0
      %2625 = vmatprep.subr.mxu0 0.0
      %2626 = vmatpush1.msra.mxu0 0.0
      %2627 = vmatprep.subr.mxu0 0.0
      %2628 = vmatpush1.msra.mxu0 0.0
      %2629 = vmatprep.subr.mxu0 0.0
      %2630 = vmatpush1.msra.mxu0 0.0
      %2631 = vmatprep.subr.mxu0 0.0
      %2632 = vmatpush1.msra.mxu0 0.0
      %2633 = vmatprep.subr.mxu0 0.0
      %2634 = vmatpush1.msra.mxu0 0.0
      %2635 = vmatprep.subr.mxu0 0.0
      %2636 = vmatpush1.msra.mxu0 0.0
      %2637 = vmatprep.subr.mxu0 0.0
      %2638 = vmatpush1.msra.mxu0 0.0
      %2639 = vmatprep.subr.mxu0 0.0
      %2640 = vmatpush1.msra.mxu0 0.0
      %2641 = vmatprep.subr.mxu0 0.0
      %2642 = vmatpush1.msra.mxu0 0.0
      %2643 = vmatprep.subr.mxu0 0.0
      %2644 = vmatpush1.msra.mxu0 0.0
      %2645 = vmatprep.subr.mxu0 0.0
      %2646 = vmatpush1.msra.mxu0 0.0
      %2647 = vmatprep.subr.mxu0 0.0
      %2648 = vmatpush1.msra.mxu0 0.0
      %2649 = vmatprep.subr.mxu0 0.0
      %2650 = vmatpush1.msra.mxu0 0.0
      %2651 = vmatprep.subr.mxu0 0.0
      %2652 = vmatpush1.msra.mxu0 0.0
      %2653 = vmatprep.subr.mxu0 0.0
      %2654 = vmatpush1.msra.mxu0 0.0
      %2655 = vmatprep.mubr.f32.mxu0 0.0
      %2656 = vmatmul.mubr.f32.gmra.mrb[0].mxu0 %v2563
      %v2657 = vpop.f32.mrb[0].mxu0
      %v2658 = vadd.f32 %v2589, %v2657
      %v2659 = vpop.f32.mrb[0].mxu0
      %2660 = vmatprep.mubr.f32.mxu0 0.0
      %2661 = vmatmul.mubr.f32.gmra.mrb[0].mxu0 %v2564
      %v2662 = vpop.f32.mrb[0].mxu0
      %v2663 = vadd.f32 %v2589, %v2662
      %v2664 = vpop.f32.mrb[0].mxu0
      %2665 = vmatprep.mubr.f32.mxu0 0.0
      %2666 = vmatmul.mubr.f32.gmra.mrb[0].mxu0 %v2565
      %v2667 = vpop.f32.mrb[0].mxu0
      %v2668 = vadd.f32 %v2589, %v2667
      %v2669 = vpop.f32.mrb[0].mxu0
      %2670 = vmatprep.mubr.f32.mxu0 0.0
      %2671 = vmatmul.mubr.f32.gmra.mrb[0].mxu0 %v2566
      %v2672 = vpop.f32.mrb[0].mxu0
      %v2673 = vadd.f32 %v2589, %v2672
      %v2674 = vpop.f32.mrb[0].mxu0
      %2675 = vmatprep.mubr.f32.mxu0 0.0
      %2676 = vmatmul.mubr.f32.gmra.mrb[0].mxu0 %v2567
      %v2677 = vpop.f32.mrb[0].mxu0
      %v2678 = vadd.f32 %v2589, %v2677
      %v2679 = vpop.f32.mrb[0].mxu0
      %2680 = vdwg.mxu0
      %v2681 = vadd.f32 %v2398, %v2658
      %v2682 = vadd.f32 %v2399, %v2663
      %v2683 = vadd.f32 %v2400, %v2668
      %v2684 = vadd.f32 %v2401, %v2673
      %v2685 = vadd.f32 %v2402, %v2678
      %v2686 = vld [vmem:[%s12] sm:$0x1]
      %v2687 = vld [vmem:[%s13] sm:$0x1]
      %v2688 = vsel %vm516, %v2681, 0.0
      %2689 = vadd.xlane.f32.xlu0 %v2688
      %v2690 = vpop.xlane.xlu0 %2689
      %v2691 = vsel %vm516, %v2682, 0.0
      %2692 = vadd.xlane.f32.xlu0 %v2691
      %v2693 = vpop.xlane.xlu0 %2692
      %v2694 = vsel %vm516, %v2683, 0.0
      %2695 = vadd.xlane.f32.xlu0 %v2694
      %v2696 = vpop.xlane.xlu0 %2695
      %v2697 = vsel %vm516, %v2684, 0.0
      %2698 = vadd.xlane.f32.xlu0 %v2697
      %v2699 = vpop.xlane.xlu0 %2698
      %v2700 = vsel %vm2326, %v2685, 0.0
      %2701 = vadd.xlane.f32.xlu0 %v2700
      %v2702 = vpop.xlane.xlu0 %2701
      %v2703 = vmul.f32 %v2690, %v2330
      %v2704 = vmul.f32 %v2693, %v2330
      %v2705 = vmul.f32 %v2696, %v2330
      %v2706 = vmul.f32 %v2699, %v2330
      %v2707 = vmul.f32 %v2702, %v2330
      %v2708 = vsub.f32 %v2681, %v2703
      %v2709 = vsub.f32 %v2682, %v2704
      %v2710 = vsub.f32 %v2683, %v2705
      %v2711 = vsub.f32 %v2684, %v2706
      %v2712 = vsub.f32 %v2685, %v2707
      %v2713 = vmul.f32 %v2708, %v2708
      %v2714 = vmul.f32 %v2709, %v2709
      %v2715 = vmul.f32 %v2710, %v2710
      %v2716 = vmul.f32 %v2711, %v2711
      %v2717 = vmul.f32 %v2712, %v2712
      %v2718 = vsel %vm516, %v2713, 0.0
      %2719 = vadd.xlane.f32.xlu0 %v2718
      %v2720 = vpop.xlane.xlu0 %2719
      %v2721 = vsel %vm516, %v2714, 0.0
      %2722 = vadd.xlane.f32.xlu0 %v2721
      %v2723 = vpop.xlane.xlu0 %2722
      %v2724 = vsel %vm516, %v2715, 0.0
      %2725 = vadd.xlane.f32.xlu0 %v2724
      %v2726 = vpop.xlane.xlu0 %2725
      %v2727 = vsel %vm516, %v2716, 0.0
      %2728 = vadd.xlane.f32.xlu0 %v2727
      %v2729 = vpop.xlane.xlu0 %2728
      %v2730 = vsel %vm2326, %v2717, 0.0
      %2731 = vadd.xlane.f32.xlu0 %v2730
      %v2732 = vpop.xlane.xlu0 %2731
      %v2733 = vmul.f32 %v2720, %v2330
      %v2734 = vmul.f32 %v2723, %v2330
      %v2735 = vmul.f32 %v2726, %v2330
      %v2736 = vmul.f32 %v2729, %v2330
      %v2737 = vmul.f32 %v2732, %v2330
      %v2738 = vadd.f32 %v2733, 1e-05
      %v2739 = vadd.f32 %v2734, 1e-05
      %v2740 = vadd.f32 %v2735, 1e-05
      %v2741 = vadd.f32 %v2736, 1e-05
      %v2742 = vadd.f32 %v2737, 1e-05
      %v2743 = vrsqrt.pop %v2738
      %v2744 = vrsqrt.pop %v2739
      %v2745 = vrsqrt.pop %v2740
      %v2746 = vrsqrt.pop %v2741
      %v2747 = vrsqrt.pop %v2742
      %v2748 = vmul.f32 %v2708, %v2743
      %v2749 = vmul.f32 %v2709, %v2744
      %v2750 = vmul.f32 %v2710, %v2745
      %v2751 = vmul.f32 %v2711, %v2746
      %v2752 = vmul.f32 %v2712, %v2747
      %v2754 = vlaneseq
      %v2755 = vshrl.u32 %v2754, 7
      %v2756 = vsub.s32 0, %v2755
      %v2757 = vrot.slane %v2686, %v2756
      %v2759 = vmul.f32 %v2748, %v2757
      %v2760 = vmul.f32 %v2749, %v2757
      %v2761 = vmul.f32 %v2750, %v2757
      %v2762 = vmul.f32 %v2751, %v2757
      %v2763 = vmul.f32 %v2752, %v2757
      %v2765 = vlaneseq
      %v2766 = vshrl.u32 %v2765, 7
      %v2767 = vsub.s32 0, %v2766
      %v2768 = vrot.slane %v2687, %v2767
      %v2770 = vadd.f32 %v2759, %v2768
      %v2771 = vadd.f32 %v2760, %v2768
      %v2772 = vadd.f32 %v2761, %v2768
      %v2773 = vadd.f32 %v2762, %v2768
      %v2774 = vadd.f32 %v2763, %v2768
      %2775 = vst.msk [vmem:[%s481] sm:$0xff] %vm516, %v2770
      %2776 = vst.msk [vmem:[%s481 + $0x8] sm:$0xff] %vm516, %v2771
      %2777 = vst.msk [vmem:[%s481 + $0x10] sm:$0xff] %vm516, %v2772
      %2778 = vst.msk [vmem:[%s481 + $0x18] sm:$0xff] %vm516, %v2773
      %2779 = vst.msk [vmem:[%s481 + $0x20] sm:$0x7f] %vm2326, %v2774
      %p2780 = scmp.lt.s32.totalorder %s25, 1
      %s2781 = scalar_select %p2780, %s25, 1
      %s2782 = smul.addr %s2781, 5
      %s2783 = smul.addr %s2782, 8
      %s2784 = scalar_lea.vmem %s14, %s2783
      // Predicated region
      $region77: #{wavlm_encoder_forward.14} parent=75 // pred_check
        %p2785 = pneg %p347
      $region78: #{wavlm_encoder_forward.14} parent=75 // pred_check_branch
        %2787 = sbr.rel (%p2785) target = $region80
      $region79: #{wavlm_encoder_forward.14} parent=75 // pred_region
        _
      $region80: #{wavlm_encoder_forward.14} parent=75 // pred_fallthru
        _
    $region76: #{wavlm_encoder_forward.14} parent=5 // pred_fallthru
      _
    %p2788 = scmp.le.s32.totalorder 2, %s20
    // Predicated region
    $region81: #{wavlm_encoder_forward.14} parent=5 // pred_check
      %p2789 = pneg %p2788
    $region82: #{wavlm_encoder_forward.14} parent=5 // pred_check_branch
      %2791 = sbr.rel (%p2789) target = $region84
    $region83: #{wavlm_encoder_forward.14} parent=5 // pred_region
      %s2792 = ssub.s32 %s20, 2
      // Predicated region
      $region85: #{wavlm_encoder_forward.14} parent=83 // pred_check
        %p2793 = pneg %p353
      $region86: #{wavlm_encoder_forward.14} parent=83 // pred_check_branch
        %2795 = sbr.rel (%p2793) target = $region88
      $region87: #{wavlm_encoder_forward.14} parent=83 // pred_region
        %p2796 = scmp.lt.s32.totalorder %s26, 1
        %s2797 = scalar_select %p2796, %s26, 1
        %s2798 = smul.addr %s2797, 5
        %s2799 = smul.addr %s2798, 8
        %s2800 = scalar_lea.vmem %s14, %s2799
      $region88: #{wavlm_encoder_forward.14} parent=83 // pred_fallthru
        _
    $region84: #{wavlm_encoder_forward.14} parent=5 // pred_fallthru
      _
  $region6: #{wavlm_encoder_forward.14} parent=0 // loop_footer
    %s24 = sadd.s32 1, %s20
  $region7: #{wavlm_encoder_forward.14} parent=0 // loop_footer_branch
    %19 = sbr.rel target = $region3
  $region8: #{wavlm_encoder_forward.14} parent=0 // loop_exit
    _

</llo_original>
